<compile_context>
chip_gen: v6e
topology: v6e:2x2x1
jax: 0.10.0
libtpu: 0.0.40
codegen_flags: <defaults>
</compile_context>

<pallas_src>
import functools
import math

import jax
import jax.numpy as jnp
from jax import lax
from jax.experimental import pallas as pl
from jax.experimental.pallas import tpu as pltpu

# ---------------- small config (mirrors InferenceConfig fields) --------------
BATCH = 2
SEQ = 8
N_HEADS = 2
HEAD_DIM = 128                      # lane-sized head_dim -> lane-aligned blocks
HIDDEN = N_HEADS * HEAD_DIM         # 256
INTER = 512
RMS_EPS = 1e-6
ROPE_THETA = 10000.0
NEG_INF = -1e30
COMPUTE_DTYPE = jnp.bfloat16        # native MXU input dtype on v5e/v6e/v7x
VMEM_LIMIT = 32 * 1024 * 1024       # explicit scoped-VMEM budget per kernel


# ================================ K1 =========================================
def _pre_attn_kernel(x_ref, ln_ref, w_ref, cos_ref, sin_ref, qkv_ref, *,
                     eps, hidden, head_dim, n_tile):
    """RMSNorm + one N-tile of the fused QKV projection + RoPE (q/k tiles)."""
    # RMSNorm in f32.  Recomputed per N-tile: a VPU reduce, negligible next to
    # the [tm,H]x[H,tn] matmul, and it keeps both grid axes "parallel".
    xf = x_ref[...].astype(jnp.float32)
    var = jnp.mean(xf * xf, axis=-1, keepdims=True)
    nrm = (xf * lax.rsqrt(var + eps)
           * ln_ref[...].astype(jnp.float32)).astype(w_ref.dtype)

    # bf16 operands, f32 accumulation (native MXU path).
    out = jnp.dot(nrm, w_ref[...], preferred_element_type=jnp.float32)  # [tm,tn]

    col0 = pl.program_id(1) * n_tile          # first output column of this tile

    @pl.when(col0 < 2 * hidden)               # tile lies in the Q or K region
    def _():
        rows = out.shape[0]
        heads_in_tile = n_tile // head_dim
        half = head_dim // 2
        x3 = out.reshape(rows, heads_in_tile, head_dim)   # head_dim on lane axis
        cos = cos_ref[...].astype(jnp.float32)[:, None, :]  # [tm,1,D] bcast heads
        sin = sin_ref[...].astype(jnp.float32)[:, None, :]
        lane = lax.broadcasted_iota(jnp.int32, (1, 1, head_dim), 2)
        sign = jnp.where(lane < half, -1.0, 1.0)
        # rotate_half(x) == sign * roll(x, head_dim//2) along the lane axis:
        rot = pltpu.roll(x3, half, 2) * sign              # XLU roll + VPU select
        roped = x3 * cos + rot * sin
        qkv_ref[...] = roped.reshape(rows, n_tile).astype(qkv_ref.dtype)

    @pl.when(col0 >= 2 * hidden)              # V region: no RoPE
    def _():
        qkv_ref[...] = out.astype(qkv_ref.dtype)


def fused_pre_attention(x2, ln_w, w_qkv, cos_m, sin_m,
                        *, row_tile=None, n_tile=None):
    M, H = x2.shape
    three_h = w_qkv.shape[1]
    D = cos_m.shape[1]
    tm = row_tile or min(256, M)
    tn = n_tile or min(H, 512)                # N-tile of the streamed weight
    assert M % tm == 0 and three_h % tn == 0
    assert H % tn == 0 and tn % D == 0        # tiles align with q/k/v + heads
    grid = (M // tm, three_h // tn)
    return pl.pallas_call(
        functools.partial(_pre_attn_kernel, eps=RMS_EPS, hidden=H,
                          head_dim=D, n_tile=tn),
        out_shape=jax.ShapeDtypeStruct((M, three_h), x2.dtype),
        grid=grid,
        in_specs=[
            pl.BlockSpec((tm, H), lambda m, n: (m, 0)),   # x rows (resident over n)
            pl.BlockSpec((1, H), lambda m, n: (0, 0)),    # input_layernorm weight
            pl.BlockSpec((H, tn), lambda m, n: (0, n)),   # streamed weight N-tile
            pl.BlockSpec((tm, D), lambda m, n: (m, 0)),   # cos (per head_dim only)
            pl.BlockSpec((tm, D), lambda m, n: (m, 0)),   # sin
        ],
        out_specs=pl.BlockSpec((tm, tn), lambda m, n: (m, n)),
        compiler_params=pltpu.CompilerParams(
            dimension_semantics=("parallel", "parallel"),
            vmem_limit_bytes=VMEM_LIMIT),
    )(x2, ln_w, w_qkv, cos_m, sin_m)


# ================================ K2 =========================================
def _attention_kernel(q_ref, k_ref, v_ref, o_ref, kc_ref, vc_ref,
                      m_sc, l_sc, acc_sc, *, scale, tq, tk):
    """Flash-style causal SDPA for one (batch, head, q-tile, kv-tile) block."""
    ki = pl.program_id(3)

    @pl.when(ki == 0)
    def _():
        m_sc[...] = jnp.full(m_sc.shape, -jnp.inf, dtype=m_sc.dtype)
        l_sc[...] = jnp.zeros(l_sc.shape, l_sc.dtype)
        acc_sc[...] = jnp.zeros(acc_sc.shape, acc_sc.dtype)

    q = q_ref[0]                              # [tq, D]  (compute dtype)
    k = k_ref[0]                              # [tk, D]
    v = v_ref[0]                              # [tk, D]

    # KV cache written straight from the kernel in [B, nH, S, D] layout
    # (post-RoPE K), avoiding the wrapper reshape+transpose HBM round trip.
    kc_ref[0, 0] = k
    vc_ref[0, 0] = v

    # q @ k^T without an explicit transpose, f32 scores.
    s = lax.dot_general(q, k, (((1,), (1,)), ((), ())),
                        preferred_element_type=jnp.float32) * scale
    row = pl.program_id(2) * tq + lax.broadcasted_iota(jnp.int32, (tq, tk), 0)
    col = ki * tk + lax.broadcasted_iota(jnp.int32, (tq, tk), 1)
    s = jnp.where(row >= col, s, NEG_INF)     # causal mask built in-kernel

    # Online softmax (flash) update.
    m_prev = m_sc[...]
    m_new = jnp.maximum(m_prev, jnp.max(s, axis=-1, keepdims=True))
    alpha = jnp.exp(m_prev - m_new)
    p = jnp.exp(s - m_new)
    l_sc[...] = alpha * l_sc[...] + jnp.sum(p, axis=-1, keepdims=True)
    acc_sc[...] = alpha * acc_sc[...] + jnp.dot(
        p.astype(v.dtype), v, preferred_element_type=jnp.float32)
    m_sc[...] = m_new

    @pl.when(ki == pl.num_programs(3) - 1)
    def _():
        inv = pl.reciprocal(l_sc[...], approx=True)       # EUP vrcp: free slot
        o_ref[0] = (acc_sc[...] * inv).astype(o_ref.dtype)


def attention_core(qkv_bs, *, n_heads, head_dim):
    B, S, three_h = qkv_bs.shape
    H = n_heads * head_dim
    assert three_h == 3 * H
    tq = min(128, S)
    tk = min(128, S)
    assert S % tq == 0 and S % tk == 0
    scale = 1.0 / math.sqrt(head_dim)
    grid = (B, n_heads, S // tq, S // tk)
    return pl.pallas_call(
        functools.partial(_attention_kernel, scale=scale, tq=tq, tk=tk),
        out_shape=(
            jax.ShapeDtypeStruct((B, S, H), qkv_bs.dtype),                 # ctx
            jax.ShapeDtypeStruct((B, n_heads, S, head_dim), qkv_bs.dtype), # K cache
            jax.ShapeDtypeStruct((B, n_heads, S, head_dim), qkv_bs.dtype), # V cache
        ),
        grid=grid,
        in_specs=[
            pl.BlockSpec((1, tq, head_dim),
                         lambda b, h, qi, ki: (b, qi, h)),                 # Q slice
            pl.BlockSpec((1, tk, head_dim),
                         lambda b, h, qi, ki: (b, ki, n_heads + h)),       # K slice
            pl.BlockSpec((1, tk, head_dim),
                         lambda b, h, qi, ki: (b, ki, 2 * n_heads + h)),   # V slice
        ],
        out_specs=(
            pl.BlockSpec((1, tq, head_dim), lambda b, h, qi, ki: (b, qi, h)),
            pl.BlockSpec((1, 1, tk, head_dim), lambda b, h, qi, ki: (b, h, ki, 0)),
            pl.BlockSpec((1, 1, tk, head_dim), lambda b, h, qi, ki: (b, h, ki, 0)),
        ),
        scratch_shapes=[
            pltpu.VMEM((tq, 1), jnp.float32),          # running max m
            pltpu.VMEM((tq, 1), jnp.float32),          # running denom l
            pltpu.VMEM((tq, head_dim), jnp.float32),   # output accumulator
        ],
        compiler_params=pltpu.CompilerParams(
            dimension_semantics=("parallel", "parallel", "parallel", "arbitrary"),
            vmem_limit_bytes=VMEM_LIMIT),
    )(qkv_bs, qkv_bs, qkv_bs)


# ================================ K3 =========================================
def _post_attn_kernel(ctx_ref, res_ref, wo_ref, ln_ref, wg_ref, wu_ref, wd_ref,
                      o_ref, h1_sc, nrm_sc, acc_sc, *, eps):
    """O-proj + residual + post RMSNorm (once per row tile), then one
    intermediate-dim chunk of gate/up/SiLU/mul/down accumulated into f32."""
    i = pl.program_id(1)

    @pl.when(i == 0)
    def _():
        attn = jnp.dot(ctx_ref[...], wo_ref[...],
                       preferred_element_type=jnp.float32)
        h1 = res_ref[...].astype(jnp.float32) + attn          # residual add #1
        h1_sc[...] = h1
        var = jnp.mean(h1 * h1, axis=-1, keepdims=True)
        nrm_sc[...] = (h1 * lax.rsqrt(var + eps)
                       * ln_ref[...].astype(jnp.float32)).astype(nrm_sc.dtype)
        acc_sc[...] = jnp.zeros(acc_sc.shape, acc_sc.dtype)

    nrm = nrm_sc[...]
    g = jnp.dot(nrm, wg_ref[...], preferred_element_type=jnp.float32)
    u = jnp.dot(nrm, wu_ref[...], preferred_element_type=jnp.float32)
    act = (g * lax.logistic(g)) * u                           # SiLU(gate) * up
    acc_sc[...] = acc_sc[...] + jnp.dot(
        act.astype(wd_ref.dtype), wd_ref[...], preferred_element_type=jnp.float32)

    @pl.when(i == pl.num_programs(1) - 1)
    def _():
        o_ref[...] = (h1_sc[...] + acc_sc[...]).astype(o_ref.dtype)  # residual #2


def fused_post_attention(ctx2, res2, w_o, post_ln_w, w_gate, w_up, w_down,
                         *, row_tile=None, i_tile=None):
    M, H = ctx2.shape
    inter = w_gate.shape[1]
    tm = row_tile or min(256, M)
    ti = i_tile or min(256, inter)            # intermediate-dim chunk
    assert M % tm == 0 and inter % ti == 0
    grid = (M // tm, inter // ti)
    return pl.pallas_call(
        functools.partial(_post_attn_kernel, eps=RMS_EPS),
        out_shape=jax.ShapeDtypeStruct((M, H), ctx2.dtype),
        grid=grid,
        in_specs=[
            pl.BlockSpec((tm, H), lambda m, i: (m, 0)),    # attention context
            pl.BlockSpec((tm, H), lambda m, i: (m, 0)),    # residual (= layer input)
            pl.BlockSpec((H, H), lambda m, i: (0, 0)),     # w_o  TODO(synk): H-tile
            pl.BlockSpec((1, H), lambda m, i: (0, 0)),     # post_attention_layernorm
            pl.BlockSpec((H, ti), lambda m, i: (0, i)),    # gate chunk (streamed)
            pl.BlockSpec((H, ti), lambda m, i: (0, i)),    # up chunk   (streamed)
            pl.BlockSpec((ti, H), lambda m, i: (i, 0)),    # down chunk (streamed)
        ],
        out_specs=pl.BlockSpec((tm, H), lambda m, i: (m, 0)),
        scratch_shapes=[
            pltpu.VMEM((tm, H), jnp.float32),    # h1 = residual + o_proj(ctx)
            pltpu.VMEM((tm, H), w_gate.dtype),   # normalized h1 (MXU operand dtype)
            pltpu.VMEM((tm, H), jnp.float32),    # down-proj f32 accumulator
        ],
        compiler_params=pltpu.CompilerParams(
            dimension_semantics=("parallel", "arbitrary"),
            vmem_limit_bytes=VMEM_LIMIT),
    )(ctx2, res2, w_o, post_ln_w, w_gate, w_up, w_down)


# ------------------------------- RoPE (glue) ---------------------------------
def rope_cache(seq_len, dim, theta=ROPE_THETA, dtype=jnp.float32):
    inv_freq = 1.0 / (theta ** (jnp.arange(0, dim, 2, dtype=jnp.float32) / dim))
    t = jnp.arange(seq_len, dtype=jnp.float32)
    freqs = jnp.outer(t, inv_freq)
    emb = jnp.concatenate([freqs, freqs], axis=-1)
    return jnp.cos(emb).astype(dtype), jnp.sin(emb).astype(dtype)


# -------------------- one-time weight preprocessing (outside jit) ------------
def prepare_layer_params(p):
    """Fuse/transpose torch-layout ([out,in]) weights once; already cast to the
    compute dtype (bf16) by the caller.
    TODO(synk): fp8 (v7x) / int8-int4 (v6e) weight quantization with per-channel
    scales applied in the f32 epilogue."""
    return {
        "input_ln_w": p["input_ln_w"].reshape(1, HIDDEN),
        "post_ln_w": p["post_ln_w"].reshape(1, HIDDEN),
        "w_qkv": jnp.concatenate([p["q_w"], p["k_w"], p["v_w"]], axis=0).T,  # [H,3H]
        "w_o": p["o_w"].T,                                                   # [H,H]
        "w_gate": p["gate_w"].T,                                             # [H,I]
        "w_up": p["up_w"].T,                                                 # [H,I]
        "w_down": p["down_w"].T,                                             # [I,H]
    }


# =========================== decoder layer forward ===========================
def decoder_layer_forward(prep, hidden_states, position_ids):
    B, S, H = hidden_states.shape
    M = B * S
    D = HEAD_DIM
    x2 = hidden_states.reshape(M, H)

    cos, sin = rope_cache(S, D)                 # [S, D] f32 tables
    pos = position_ids.reshape(M)
    cos_m = cos[pos]                            # [M, D] (NOT tiled across heads)
    sin_m = sin[pos]

    # K1: RMSNorm + fused QKV projection (streamed N-tiles) + roll-based RoPE
    qkv = fused_pre_attention(x2, prep["input_ln_w"], prep["w_qkv"],
                              cos_m, sin_m)                      # [M, 3H]

    # K2: flash causal SDPA; KV cache produced in [B, nH, S, D] by the kernel
    ctx, k_cache, v_cache = attention_core(qkv.reshape(B, S, 3 * H),
                                           n_heads=N_HEADS, head_dim=D)
    present_key_value = (k_cache, v_cache)

    # K3: O-proj + residual + post RMSNorm + chunked MLP + residual
    out = fused_post_attention(ctx.reshape(M, H), x2, prep["w_o"],
                               prep["post_ln_w"], prep["w_gate"],
                               prep["w_up"], prep["w_down"])     # [M, H]

    # TODO(synk): tensor-parallel collectives (reduce_from_tensor_model_parallel
    # _region), sequence-parallel gather/scatter, LoRA adapter_ids and the
    # quantized fp8 NKI MLP path are distributed / Neuron-specific; the
    # single-device semantics are kept.
    return out.reshape(B, S, H), present_key_value, cos, sin


# ============================ pure-JAX reference =============================
def _rotate_half(x):
    x1, x2 = jnp.split(x, 2, axis=-1)
    return jnp.concatenate([-x2, x1], axis=-1)


def _ref_forward(params, x, position_ids):
    def rn(t, w):
        tf = t.astype(jnp.float32)
        inv = lax.rsqrt(jnp.mean(tf * tf, axis=-1, keepdims=True) + RMS_EPS)
        return (tf * inv * w).astype(t.dtype)

    B, S, H = x.shape
    res = x
    h = rn(x, params["input_ln_w"])
    q = (h @ params["q_w"].T).reshape(B, S, N_HEADS, HEAD_DIM).transpose(0, 2, 1, 3)
    k = (h @ params["k_w"].T).reshape(B, S, N_HEADS, HEAD_DIM).transpose(0, 2, 1, 3)
    v = (h @ params["v_w"].T).reshape(B, S, N_HEADS, HEAD_DIM).transpose(0, 2, 1, 3)
    cos, sin = rope_cache(S, HEAD_DIM)
    cos_p = cos[position_ids][:, None, :, :]
    sin_p = sin[position_ids][:, None, :, :]
    q = q * cos_p + _rotate_half(q) * sin_p
    k = k * cos_p + _rotate_half(k) * sin_p
    s = jnp.einsum("bhqd,bhkd->bhqk", q, k) / math.sqrt(HEAD_DIM)
    s = jnp.where(jnp.tril(jnp.ones((S, S), dtype=bool)), s, NEG_INF)
    p = jax.nn.softmax(s, axis=-1)
    a = jnp.einsum("bhqk,bhkd->bhqd", p, v).transpose(0, 2, 1, 3).reshape(B, S, H)
    a = a @ params["o_w"].T
    h = res + a
    res = h
    hn = rn(h, params["post_ln_w"])
    g = hn @ params["gate_w"].T
    u = hn @ params["up_w"].T
    m = (jax.nn.silu(g) * u) @ params["down_w"].T
    return res + m


# ================================= main ======================================
def init_params(key):
    ks = jax.random.split(key, 7)
    scale = 0.05
    return {
        "q_w": scale * jax.random.normal(ks[0], (HIDDEN, HIDDEN), jnp.float32),
        "k_w": scale * jax.random.normal(ks[1], (HIDDEN, HIDDEN), jnp.float32),
        "v_w": scale * jax.random.normal(ks[2], (HIDDEN, HIDDEN), jnp.float32),
        "o_w": scale * jax.random.normal(ks[3], (HIDDEN, HIDDEN), jnp.float32),
        "gate_w": scale * jax.random.normal(ks[4], (INTER, HIDDEN), jnp.float32),
        "up_w": scale * jax.random.normal(ks[5], (INTER, HIDDEN), jnp.float32),
        "down_w": scale * jax.random.normal(ks[6], (HIDDEN, INTER), jnp.float32),
        # RMSNorm weights initialize to ones, as in the PyTorch module __init__
        "input_ln_w": jnp.ones((HIDDEN,), jnp.float32),
        "post_ln_w": jnp.ones((HIDDEN,), jnp.float32),
    }


if __name__ == "__main__":
    key = jax.random.PRNGKey(0)
    pkey, xkey = jax.random.split(key)
    params = init_params(pkey)                                   # f32 masters
    # Cast weights/activations to bf16 ONCE outside the hot path.
    params_c = jax.tree_util.tree_map(lambda a: a.astype(COMPUTE_DTYPE), params)
    prep = prepare_layer_params(params_c)                        # one-time fusions

    x_f32 = jax.random.normal(xkey, (BATCH, SEQ, HIDDEN), jnp.float32)
    hidden_states = x_f32.astype(COMPUTE_DTYPE)
    position_ids = jnp.broadcast_to(jnp.arange(SEQ, dtype=jnp.int32), (BATCH, SEQ))

    fwd = jax.jit(decoder_layer_forward)
    out, present_kv, cos_cache, sin_cache = fwd(prep, hidden_states, position_ids)
    jax.block_until_ready(out)

    # Reference computed in f32 from the same bf16-rounded weights/activations.
    params_ref = jax.tree_util.tree_map(lambda a: a.astype(jnp.float32), params_c)
    ref = _ref_forward(params_ref, hidden_states.astype(jnp.float32), position_ids)

    assert out.shape == hidden_states.shape and out.dtype == hidden_states.dtype
    assert present_kv[0].shape == (BATCH, N_HEADS, SEQ, HEAD_DIM)
    assert present_kv[1].shape == (BATCH, N_HEADS, SEQ, HEAD_DIM)
    max_err = float(jnp.max(jnp.abs(out.astype(jnp.float32) - ref)))
    assert jnp.allclose(out.astype(jnp.float32), ref, rtol=3e-2, atol=3e-2), (
        f"mismatch vs reference, max_abs_err={max_err}")

    print("KERNEL_OK")
</pallas_src>

<mosaic_0001>
module attributes {stable_mosaic.version = 11 : i64} {
  func.func @_pre_attn_kernel(%arg0: i32, %arg1: i32, %arg2: memref<16x256xbf16, #tpu.memory_space<vmem>>, %arg3: memref<1x256xbf16, #tpu.memory_space<vmem>>, %arg4: memref<256x256xbf16, #tpu.memory_space<vmem>>, %arg5: memref<16x128xf32, #tpu.memory_space<vmem>>, %arg6: memref<16x128xf32, #tpu.memory_space<vmem>>, %arg7: memref<16x256xbf16, #tpu.memory_space<vmem>>) attributes {dimension_semantics = [#tpu.dimension_semantics<parallel>, #tpu.dimension_semantics<parallel>], iteration_bounds = array<i64: 1, 3>, scalar_prefetch = 0 : i64, scratch_operands = 0 : i64, tpu.core_type = #tpu.core_type<tc>, window_params = [{transform_indices = @transform_0, window_bounds = array<i64: 16, 256>}, {pipeline_mode = #tpu.pipeline_mode<synchronous>, transform_indices = @transform_1, window_bounds = array<i64: 1, 256>}, {transform_indices = @transform_2, window_bounds = array<i64: 256, 256>}, {transform_indices = @transform_3, window_bounds = array<i64: 16, 128>}, {transform_indices = @transform_4, window_bounds = array<i64: 16, 128>}, {transform_indices = @transform_5, window_bounds = array<i64: 16, 256>}]} {
    %c0 = arith.constant 0 : index
    %c0_0 = arith.constant 0 : index
    %0 = vector.load %arg2[%c0, %c0_0] : memref<16x256xbf16, #tpu.memory_space<vmem>>, vector<16x256xbf16>
    %1 = arith.extf %0 : vector<16x256xbf16> to vector<16x256xf32>
    %2 = arith.mulf %1, %1 : vector<16x256xf32>
    %cst = arith.constant dense<0.000000e+00> : vector<16xf32>
    %3 = vector.multi_reduction <add>, %2, %cst [1] : vector<16x256xf32> to vector<16xf32>
    %4 = vector.shape_cast %3 : vector<16xf32> to vector<16x1xf32>
    %cst_1 = arith.constant 2.560000e+02 : f32
    %5 = vector.broadcast %cst_1 : f32 to vector<16x1xf32>
    %6 = arith.divf %4, %5 : vector<16x1xf32>
    %cst_2 = arith.constant 9.99999997E-7 : f32
    %7 = vector.broadcast %cst_2 : f32 to vector<16x1xf32>
    %8 = arith.addf %6, %7 : vector<16x1xf32>
    %9 = math.rsqrt %8 : vector<16x1xf32>
    %10 = vector.broadcast %9 : vector<16x1xf32> to vector<16x256xf32>
    %11 = arith.mulf %1, %10 : vector<16x256xf32>
    %c0_3 = arith.constant 0 : index
    %c0_4 = arith.constant 0 : index
    %12 = vector.load %arg3[%c0_3, %c0_4] : memref<1x256xbf16, #tpu.memory_space<vmem>>, vector<1x256xbf16>
    %13 = arith.extf %12 : vector<1x256xbf16> to vector<1x256xf32>
    %14 = vector.broadcast %13 : vector<1x256xf32> to vector<16x256xf32>
    %15 = arith.mulf %11, %14 : vector<16x256xf32>
    %16 = arith.truncf %15 : vector<16x256xf32> to vector<16x256xbf16>
    %c0_5 = arith.constant 0 : index
    %c0_6 = arith.constant 0 : index
    %17 = vector.load %arg4[%c0_5, %c0_6] : memref<256x256xbf16, #tpu.memory_space<vmem>>, vector<256x256xbf16>
    %cst_7 = arith.constant dense<0.000000e+00> : vector<16x256xf32>
    %18 = tpu.matmul %16, %17, %cst_7 {dimension_numbers = #tpu.dot_dimension_numbers<[1], [0], [0], [1], [0, 0, 1, 1], [], []>} : vector<16x256xbf16>, vector<256x256xbf16>, vector<16x256xf32> -> vector<16x256xf32>
    %c256_i32 = arith.constant 256 : i32
    %19 = arith.muli %arg1, %c256_i32 : i32
    %c512_i32 = arith.constant 512 : i32
    %20 = arith.cmpi slt, %19, %c512_i32 : i32
    %21 = arith.extui %20 : i1 to i32
    %c0_i32 = arith.constant 0 : i32
    %22 = arith.cmpi ne, %21, %c0_i32 : i32
    scf.if %22 {
      %26 = vector.shape_cast %18 : vector<16x256xf32> to vector<16x2x128xf32>
      %c0_10 = arith.constant 0 : index
      %c0_11 = arith.constant 0 : index
      %27 = vector.load %arg5[%c0_10, %c0_11] : memref<16x128xf32, #tpu.memory_space<vmem>>, vector<16x128xf32>
      %28 = vector.shape_cast %27 : vector<16x128xf32> to vector<16x1x128xf32>
      %c0_12 = arith.constant 0 : index
      %c0_13 = arith.constant 0 : index
      %29 = vector.load %arg6[%c0_12, %c0_13] : memref<16x128xf32, #tpu.memory_space<vmem>>, vector<16x128xf32>
      %30 = vector.shape_cast %29 : vector<16x128xf32> to vector<16x1x128xf32>
      %31 = tpu.iota {dimensions = array<i32: 2>} : vector<1x1x128xi32>
      %c64_i32 = arith.constant 64 : i32
      %32 = vector.broadcast %c64_i32 : i32 to vector<1x1x128xi32>
      %33 = arith.cmpi slt, %31, %32 : vector<1x1x128xi32>
      %cst_14 = arith.constant -1.000000e+00 : f32
      %cst_15 = arith.constant 1.000000e+00 : f32
      %34 = vector.broadcast %cst_14 : f32 to vector<1x1x128xf32>
      %35 = vector.broadcast %cst_15 : f32 to vector<1x1x128xf32>
      %36 = arith.select %33, %34, %35 : vector<1x1x128xi1>, vector<1x1x128xf32>
      %c64_i32_16 = arith.constant 64 : i32
      %37 = tpu.dynamic_rotate %26 by %c64_i32_16 dim 2 : vector<16x2x128xf32>, i32 -> vector<16x2x128xf32>
      %38 = vector.broadcast %36 : vector<1x1x128xf32> to vector<16x2x128xf32>
      %39 = arith.mulf %37, %38 : vector<16x2x128xf32>
      %40 = vector.broadcast %28 : vector<16x1x128xf32> to vector<16x2x128xf32>
      %41 = arith.mulf %26, %40 : vector<16x2x128xf32>
      %42 = vector.broadcast %30 : vector<16x1x128xf32> to vector<16x2x128xf32>
      %43 = arith.mulf %39, %42 : vector<16x2x128xf32>
      %44 = arith.addf %41, %43 : vector<16x2x128xf32>
      %45 = vector.shape_cast %44 : vector<16x2x128xf32> to vector<16x256xf32>
      %46 = arith.truncf %45 : vector<16x256xf32> to vector<16x256xbf16>
      %c0_17 = arith.constant 0 : index
      %c0_18 = arith.constant 0 : index
      %47 = vector.load %arg7[%c0_17, %c0_18] : memref<16x256xbf16, #tpu.memory_space<vmem>>, vector<16x256xbf16>
      tpu.vector_store %arg7[%c0_17, %c0_18], %46 {strides = array<i32>} : memref<16x256xbf16, #tpu.memory_space<vmem>>, vector<16x256xbf16>,
    } else {
    }
    %c512_i32_8 = arith.constant 512 : i32
    %23 = arith.cmpi sge, %19, %c512_i32_8 : i32
    %24 = arith.extui %23 : i1 to i32
    %c0_i32_9 = arith.constant 0 : i32
    %25 = arith.cmpi ne, %24, %c0_i32_9 : i32
    scf.if %25 {
      %26 = arith.truncf %18 : vector<16x256xf32> to vector<16x256xbf16>
      %c0_10 = arith.constant 0 : index
      %c0_11 = arith.constant 0 : index
      %27 = vector.load %arg7[%c0_10, %c0_11] : memref<16x256xbf16, #tpu.memory_space<vmem>>, vector<16x256xbf16>
      tpu.vector_store %arg7[%c0_10, %c0_11], %26 {strides = array<i32>} : memref<16x256xbf16, #tpu.memory_space<vmem>>, vector<16x256xbf16>,
    } else {
    }
    return
  }
  func.func @transform_0(%arg0: i32, %arg1: i32) -> (i32, i32) {
    %c0_i32 = arith.constant 0 : i32
    %c0_i32_0 = arith.constant 0 : i32
    return %arg0, %c0_i32 : i32, i32
  }
  func.func @transform_1(%arg0: i32, %arg1: i32) -> (i32, i32) {
    %c0_i32 = arith.constant 0 : i32
    %c0_i32_0 = arith.constant 0 : i32
    %c0_i32_1 = arith.constant 0 : i32
    return %c0_i32, %c0_i32_0 : i32, i32
  }
  func.func @transform_2(%arg0: i32, %arg1: i32) -> (i32, i32) {
    %c0_i32 = arith.constant 0 : i32
    %c0_i32_0 = arith.constant 0 : i32
    return %c0_i32, %arg1 : i32, i32
  }
  func.func @transform_3(%arg0: i32, %arg1: i32) -> (i32, i32) {
    %c0_i32 = arith.constant 0 : i32
    %c0_i32_0 = arith.constant 0 : i32
    return %arg0, %c0_i32 : i32, i32
  }
  func.func @transform_4(%arg0: i32, %arg1: i32) -> (i32, i32) {
    %c0_i32 = arith.constant 0 : i32
    %c0_i32_0 = arith.constant 0 : i32
    return %arg0, %c0_i32 : i32, i32
  }
  func.func @transform_5(%arg0: i32, %arg1: i32) -> (i32, i32) {
    %c0_i32 = arith.constant 0 : i32
    return %arg0, %arg1 : i32, i32
  }
}

module attributes {stable_mosaic.version = 11 : i64} {
  func.func @_attention_kernel(%arg0: i32, %arg1: i32, %arg2: i32, %arg3: i32, %arg4: memref<1x8x128xbf16, #tpu.memory_space<vmem>>, %arg5: memref<1x8x128xbf16, #tpu.memory_space<vmem>>, %arg6: memref<1x8x128xbf16, #tpu.memory_space<vmem>>, %arg7: memref<1x8x128xbf16, #tpu.memory_space<vmem>>, %arg8: memref<1x1x8x128xbf16, #tpu.memory_space<vmem>>, %arg9: memref<1x1x8x128xbf16, #tpu.memory_space<vmem>>, %arg10: memref<8x1xf32, #tpu.memory_space<vmem>>, %arg11: memref<8x1xf32, #tpu.memory_space<vmem>>, %arg12: memref<8x128xf32, #tpu.memory_space<vmem>>) attributes {dimension_semantics = [#tpu.dimension_semantics<parallel>, #tpu.dimension_semantics<parallel>, #tpu.dimension_semantics<parallel>, #tpu.dimension_semantics<arbitrary>], iteration_bounds = array<i64: 2, 2, 1, 1>, scalar_prefetch = 0 : i64, scratch_operands = 3 : i64, tpu.core_type = #tpu.core_type<tc>, window_params = [{transform_indices = @transform_0, window_bounds = array<i64: 1, 8, 128>}, {transform_indices = @transform_1, window_bounds = array<i64: 1, 8, 128>}, {transform_indices = @transform_2, window_bounds = array<i64: 1, 8, 128>}, {transform_indices = @transform_3, window_bounds = array<i64: 1, 8, 128>}, {transform_indices = @transform_4, window_bounds = array<i64: 1, 1, 8, 128>}, {transform_indices = @transform_5, window_bounds = array<i64: 1, 1, 8, 128>}]} {
    %c0_i32 = arith.constant 0 : i32
    %0 = arith.cmpi eq, %arg3, %c0_i32 : i32
    %1 = arith.extui %0 : i1 to i32
    %c0_i32_0 = arith.constant 0 : i32
    %2 = arith.cmpi ne, %1, %c0_i32_0 : i32
    scf.if %2 {
      %cst_37 = arith.constant 0xFF800000 : f32
      %55 = vector.broadcast %cst_37 : f32 to vector<8x1xf32>
      %c0_38 = arith.constant 0 : index
      %c0_39 = arith.constant 0 : index
      %56 = vector.load %arg10[%c0_38, %c0_39] : memref<8x1xf32, #tpu.memory_space<vmem>>, vector<8x1xf32>
      tpu.vector_store %arg10[%c0_38, %c0_39], %55 {strides = array<i32>} : memref<8x1xf32, #tpu.memory_space<vmem>>, vector<8x1xf32>,
      %cst_40 = arith.constant 0.000000e+00 : f32
      %57 = vector.broadcast %cst_40 : f32 to vector<8x1xf32>
      %c0_41 = arith.constant 0 : index
      %c0_42 = arith.constant 0 : index
      %58 = vector.load %arg11[%c0_41, %c0_42] : memref<8x1xf32, #tpu.memory_space<vmem>>, vector<8x1xf32>
      tpu.vector_store %arg11[%c0_41, %c0_42], %57 {strides = array<i32>} : memref<8x1xf32, #tpu.memory_space<vmem>>, vector<8x1xf32>,
      %cst_43 = arith.constant 0.000000e+00 : f32
      %59 = vector.broadcast %cst_43 : f32 to vector<8x128xf32>
      %c0_44 = arith.constant 0 : index
      %c0_45 = arith.constant 0 : index
      %60 = vector.load %arg12[%c0_44, %c0_45] : memref<8x128xf32, #tpu.memory_space<vmem>>, vector<8x128xf32>
      tpu.vector_store %arg12[%c0_44, %c0_45], %59 {strides = array<i32>} : memref<8x128xf32, #tpu.memory_space<vmem>>, vector<8x128xf32>,
    } else {
    }
    %c0 = arith.constant 0 : index
    %c0_1 = arith.constant 0 : index
    %c0_2 = arith.constant 0 : index
    %3 = vector.load %arg4[%c0, %c0_1, %c0_2] : memref<1x8x128xbf16, #tpu.memory_space<vmem>>, vector<1x8x128xbf16>
    %4 = vector.shape_cast %3 : vector<1x8x128xbf16> to vector<8x128xbf16>
    %c0_3 = arith.constant 0 : index
    %c0_4 = arith.constant 0 : index
    %c0_5 = arith.constant 0 : index
    %5 = vector.load %arg5[%c0_3, %c0_4, %c0_5] : memref<1x8x128xbf16, #tpu.memory_space<vmem>>, vector<1x8x128xbf16>
    %6 = vector.shape_cast %5 : vector<1x8x128xbf16> to vector<8x128xbf16>
    %c0_6 = arith.constant 0 : index
    %c0_7 = arith.constant 0 : index
    %c0_8 = arith.constant 0 : index
    %7 = vector.load %arg6[%c0_6, %c0_7, %c0_8] : memref<1x8x128xbf16, #tpu.memory_space<vmem>>, vector<1x8x128xbf16>
    %8 = vector.shape_cast %7 : vector<1x8x128xbf16> to vector<8x128xbf16>
    %c0_9 = arith.constant 0 : index
    %c0_10 = arith.constant 0 : index
    %c0_11 = arith.constant 0 : index
    %c0_12 = arith.constant 0 : index
    %9 = vector.load %arg8[%c0_9, %c0_10, %c0_11, %c0_12] : memref<1x1x8x128xbf16, #tpu.memory_space<vmem>>, vector<1x1x8x128xbf16>
    %10 = vector.shape_cast %9 : vector<1x1x8x128xbf16> to vector<8x128xbf16>
    %11 = vector.shape_cast %6 : vector<8x128xbf16> to vector<1x1x8x128xbf16>
    tpu.vector_store %arg8[%c0_9, %c0_10, %c0_11, %c0_12], %11 {strides = array<i32>} : memref<1x1x8x128xbf16, #tpu.memory_space<vmem>>, vector<1x1x8x128xbf16>,
    %c0_13 = arith.constant 0 : index
    %c0_14 = arith.constant 0 : index
    %c0_15 = arith.constant 0 : index
    %c0_16 = arith.constant 0 : index
    %12 = vector.load %arg9[%c0_13, %c0_14, %c0_15, %c0_16] : memref<1x1x8x128xbf16, #tpu.memory_space<vmem>>, vector<1x1x8x128xbf16>
    %13 = vector.shape_cast %12 : vector<1x1x8x128xbf16> to vector<8x128xbf16>
    %14 = vector.shape_cast %8 : vector<8x128xbf16> to vector<1x1x8x128xbf16>
    tpu.vector_store %arg9[%c0_13, %c0_14, %c0_15, %c0_16], %14 {strides = array<i32>} : memref<1x1x8x128xbf16, #tpu.memory_space<vmem>>, vector<1x1x8x128xbf16>,
    %cst = arith.constant dense<0.000000e+00> : vector<8x8xf32>
    %15 = tpu.matmul %4, %6, %cst {dimension_numbers = #tpu.dot_dimension_numbers<[1], [1], [0], [0], [0, 0, 1, 0], [], []>} : vector<8x128xbf16>, vector<8x128xbf16>, vector<8x8xf32> -> vector<8x8xf32>
    %cst_17 = arith.constant 0.0883883461 : f32
    %16 = vector.broadcast %cst_17 : f32 to vector<8x8xf32>
    %17 = arith.mulf %15, %16 : vector<8x8xf32>
    %c8_i32 = arith.constant 8 : i32
    %18 = arith.muli %arg2, %c8_i32 : i32
    %19 = tpu.iota {dimensions = array<i32: 0>} : vector<8x8xi32>
    %20 = vector.broadcast %18 : i32 to vector<8x8xi32>
    %21 = arith.addi %20, %19 : vector<8x8xi32>
    %c8_i32_18 = arith.constant 8 : i32
    %22 = arith.muli %arg3, %c8_i32_18 : i32
    %23 = tpu.iota {dimensions = array<i32: 1>} : vector<8x8xi32>
    %24 = vector.broadcast %22 : i32 to vector<8x8xi32>
    %25 = arith.addi %24, %23 : vector<8x8xi32>
    %26 = arith.cmpi sge, %21, %25 : vector<8x8xi32>
    %cst_19 = arith.constant -1.000000e+30 : f32
    %27 = vector.broadcast %cst_19 : f32 to vector<8x8xf32>
    %28 = arith.select %26, %17, %27 : vector<8x8xi1>, vector<8x8xf32>
    %c0_20 = arith.constant 0 : index
    %c0_21 = arith.constant 0 : index
    %29 = vector.load %arg10[%c0_20, %c0_21] : memref<8x1xf32, #tpu.memory_space<vmem>>, vector<8x1xf32>
    %cst_22 = arith.constant dense<0xFF800000> : vector<8xf32>
    %30 = vector.multi_reduction <maximumf>, %28, %cst_22 [1] : vector<8x8xf32> to vector<8xf32>
    %31 = vector.shape_cast %30 : vector<8xf32> to vector<8x1xf32>
    %32 = arith.maximumf %29, %31 : vector<8x1xf32>
    %33 = arith.subf %29, %32 : vector<8x1xf32>
    %34 = math.exp %33 : vector<8x1xf32>
    %35 = vector.broadcast %32 : vector<8x1xf32> to vector<8x8xf32>
    %36 = arith.subf %28, %35 : vector<8x8xf32>
    %37 = math.exp %36 : vector<8x8xf32>
    %c0_23 = arith.constant 0 : index
    %c0_24 = arith.constant 0 : index
    %38 = vector.load %arg11[%c0_23, %c0_24] : memref<8x1xf32, #tpu.memory_space<vmem>>, vector<8x1xf32>
    %39 = arith.mulf %34, %38 : vector<8x1xf32>
    %cst_25 = arith.constant dense<0.000000e+00> : vector<8xf32>
    %40 = vector.multi_reduction <add>, %37, %cst_25 [1] : vector<8x8xf32> to vector<8xf32>
    %41 = vector.shape_cast %40 : vector<8xf32> to vector<8x1xf32>
    %42 = arith.addf %39, %41 : vector<8x1xf32>
    %c0_26 = arith.constant 0 : index
    %c0_27 = arith.constant 0 : index
    %43 = vector.load %arg11[%c0_26, %c0_27] : memref<8x1xf32, #tpu.memory_space<vmem>>, vector<8x1xf32>
    tpu.vector_store %arg11[%c0_26, %c0_27], %42 {strides = array<i32>} : memref<8x1xf32, #tpu.memory_space<vmem>>, vector<8x1xf32>,
    %c0_28 = arith.constant 0 : index
    %c0_29 = arith.constant 0 : index
    %44 = vector.load %arg12[%c0_28, %c0_29] : memref<8x128xf32, #tpu.memory_space<vmem>>, vector<8x128xf32>
    %45 = vector.broadcast %34 : vector<8x1xf32> to vector<8x128xf32>
    %46 = arith.mulf %45, %44 : vector<8x128xf32>
    %47 = arith.truncf %37 : vector<8x8xf32> to vector<8x8xbf16>
    %cst_30 = arith.constant dense<0.000000e+00> : vector<8x128xf32>
    %48 = tpu.matmul %47, %8, %cst_30 {dimension_numbers = #tpu.dot_dimension_numbers<[1], [0], [0], [1], [0, 0, 1, 1], [], []>} : vector<8x8xbf16>, vector<8x128xbf16>, vector<8x128xf32> -> vector<8x128xf32>
    %49 = arith.addf %46, %48 : vector<8x128xf32>
    %c0_31 = arith.constant 0 : index
    %c0_32 = arith.constant 0 : index
    %50 = vector.load %arg12[%c0_31, %c0_32] : memref<8x128xf32, #tpu.memory_space<vmem>>, vector<8x128xf32>
    tpu.vector_store %arg12[%c0_31, %c0_32], %49 {strides = array<i32>} : memref<8x128xf32, #tpu.memory_space<vmem>>, vector<8x128xf32>,
    %c0_33 = arith.constant 0 : index
    %c0_34 = arith.constant 0 : index
    %51 = vector.load %arg10[%c0_33, %c0_34] : memref<8x1xf32, #tpu.memory_space<vmem>>, vector<8x1xf32>
    tpu.vector_store %arg10[%c0_33, %c0_34], %32 {strides = array<i32>} : memref<8x1xf32, #tpu.memory_space<vmem>>, vector<8x1xf32>,
    %c0_i32_35 = arith.constant 0 : i32
    %52 = arith.cmpi eq, %arg3, %c0_i32_35 : i32
    %53 = arith.extui %52 : i1 to i32
    %c0_i32_36 = arith.constant 0 : i32
    %54 = arith.cmpi ne, %53, %c0_i32_36 : i32
    scf.if %54 {
      %c0_37 = arith.constant 0 : index
      %c0_38 = arith.constant 0 : index
      %55 = vector.load %arg11[%c0_37, %c0_38] : memref<8x1xf32, #tpu.memory_space<vmem>>, vector<8x1xf32>
      %56 = tpu.reciprocal %55 {approx = true} : vector<8x1xf32> -> vector<8x1xf32>
      %c0_39 = arith.constant 0 : index
      %c0_40 = arith.constant 0 : index
      %57 = vector.load %arg12[%c0_39, %c0_40] : memref<8x128xf32, #tpu.memory_space<vmem>>, vector<8x128xf32>
      %58 = vector.broadcast %56 : vector<8x1xf32> to vector<8x128xf32>
      %59 = arith.mulf %57, %58 : vector<8x128xf32>
      %60 = arith.truncf %59 : vector<8x128xf32> to vector<8x128xbf16>
      %c0_41 = arith.constant 0 : index
      %c0_42 = arith.constant 0 : index
      %c0_43 = arith.constant 0 : index
      %61 = vector.load %arg7[%c0_41, %c0_42, %c0_43] : memref<1x8x128xbf16, #tpu.memory_space<vmem>>, vector<1x8x128xbf16>
      %62 = vector.shape_cast %61 : vector<1x8x128xbf16> to vector<8x128xbf16>
      %63 = vector.shape_cast %60 : vector<8x128xbf16> to vector<1x8x128xbf16>
      tpu.vector_store %arg7[%c0_41, %c0_42, %c0_43], %63 {strides = array<i32>} : memref<1x8x128xbf16, #tpu.memory_space<vmem>>, vector<1x8x128xbf16>,
    } else {
    }
    return
  }
  func.func @transform_0(%arg0: i32, %arg1: i32, %arg2: i32, %arg3: i32) -> (i32, i32, i32) {
    %c0_i32 = arith.constant 0 : i32
    return %arg0, %arg2, %arg1 : i32, i32, i32
  }
  func.func @transform_1(%arg0: i32, %arg1: i32, %arg2: i32, %arg3: i32) -> (i32, i32, i32) {
    %c2_i32 = arith.constant 2 : i32
    %0 = arith.addi %c2_i32, %arg1 : i32
    %c0_i32 = arith.constant 0 : i32
    return %arg0, %arg3, %0 : i32, i32, i32
  }
  func.func @transform_2(%arg0: i32, %arg1: i32, %arg2: i32, %arg3: i32) -> (i32, i32, i32) {
    %c4_i32 = arith.constant 4 : i32
    %0 = arith.addi %c4_i32, %arg1 : i32
    %c0_i32 = arith.constant 0 : i32
    return %arg0, %arg3, %0 : i32, i32, i32
  }
  func.func @transform_3(%arg0: i32, %arg1: i32, %arg2: i32, %arg3: i32) -> (i32, i32, i32) {
    %c0_i32 = arith.constant 0 : i32
    return %arg0, %arg2, %arg1 : i32, i32, i32
  }
  func.func @transform_4(%arg0: i32, %arg1: i32, %arg2: i32, %arg3: i32) -> (i32, i32, i32, i32) {
    %c0_i32 = arith.constant 0 : i32
    %c0_i32_0 = arith.constant 0 : i32
    return %arg0, %arg1, %arg3, %c0_i32 : i32, i32, i32, i32
  }
  func.func @transform_5(%arg0: i32, %arg1: i32, %arg2: i32, %arg3: i32) -> (i32, i32, i32, i32) {
    %c0_i32 = arith.constant 0 : i32
    %c0_i32_0 = arith.constant 0 : i32
    return %arg0, %arg1, %arg3, %c0_i32 : i32, i32, i32, i32
  }
}

module attributes {stable_mosaic.version = 11 : i64} {
  func.func @_post_attn_kernel(%arg0: i32, %arg1: i32, %arg2: memref<16x256xbf16, #tpu.memory_space<vmem>>, %arg3: memref<16x256xbf16, #tpu.memory_space<vmem>>, %arg4: memref<256x256xbf16, #tpu.memory_space<vmem>>, %arg5: memref<1x256xbf16, #tpu.memory_space<vmem>>, %arg6: memref<256x256xbf16, #tpu.memory_space<vmem>>, %arg7: memref<256x256xbf16, #tpu.memory_space<vmem>>, %arg8: memref<256x256xbf16, #tpu.memory_space<vmem>>, %arg9: memref<16x256xbf16, #tpu.memory_space<vmem>>, %arg10: memref<16x256xf32, #tpu.memory_space<vmem>>, %arg11: memref<16x256xbf16, #tpu.memory_space<vmem>>, %arg12: memref<16x256xf32, #tpu.memory_space<vmem>>) attributes {dimension_semantics = [#tpu.dimension_semantics<parallel>, #tpu.dimension_semantics<arbitrary>], iteration_bounds = array<i64: 1, 2>, scalar_prefetch = 0 : i64, scratch_operands = 3 : i64, tpu.core_type = #tpu.core_type<tc>, window_params = [{transform_indices = @transform_0, window_bounds = array<i64: 16, 256>}, {transform_indices = @transform_1, window_bounds = array<i64: 16, 256>}, {pipeline_mode = #tpu.pipeline_mode<synchronous>, transform_indices = @transform_2, window_bounds = array<i64: 256, 256>}, {pipeline_mode = #tpu.pipeline_mode<synchronous>, transform_indices = @transform_3, window_bounds = array<i64: 1, 256>}, {transform_indices = @transform_4, window_bounds = array<i64: 256, 256>}, {transform_indices = @transform_5, window_bounds = array<i64: 256, 256>}, {transform_indices = @transform_6, window_bounds = array<i64: 256, 256>}, {transform_indices = @transform_7, window_bounds = array<i64: 16, 256>}]} {
    %c0_i32 = arith.constant 0 : i32
    %0 = arith.cmpi eq, %arg1, %c0_i32 : i32
    %1 = arith.extui %0 : i1 to i32
    %c0_i32_0 = arith.constant 0 : i32
    %2 = arith.cmpi ne, %1, %c0_i32_0 : i32
    scf.if %2 {
      %c0_16 = arith.constant 0 : index
      %c0_17 = arith.constant 0 : index
      %24 = vector.load %arg2[%c0_16, %c0_17] : memref<16x256xbf16, #tpu.memory_space<vmem>>, vector<16x256xbf16>
      %c0_18 = arith.constant 0 : index
      %c0_19 = arith.constant 0 : index
      %25 = vector.load %arg4[%c0_18, %c0_19] : memref<256x256xbf16, #tpu.memory_space<vmem>>, vector<256x256xbf16>
      %cst_20 = arith.constant dense<0.000000e+00> : vector<16x256xf32>
      %26 = tpu.matmul %24, %25, %cst_20 {dimension_numbers = #tpu.dot_dimension_numbers<[1], [0], [0], [1], [0, 0, 1, 1], [], []>} : vector<16x256xbf16>, vector<256x256xbf16>, vector<16x256xf32> -> vector<16x256xf32>
      %c0_21 = arith.constant 0 : index
      %c0_22 = arith.constant 0 : index
      %27 = vector.load %arg3[%c0_21, %c0_22] : memref<16x256xbf16, #tpu.memory_space<vmem>>, vector<16x256xbf16>
      %28 = arith.extf %27 : vector<16x256xbf16> to vector<16x256xf32>
      %29 = arith.addf %28, %26 : vector<16x256xf32>
      %c0_23 = arith.constant 0 : index
      %c0_24 = arith.constant 0 : index
      %30 = vector.load %arg10[%c0_23, %c0_24] : memref<16x256xf32, #tpu.memory_space<vmem>>, vector<16x256xf32>
      tpu.vector_store %arg10[%c0_23, %c0_24], %29 {strides = array<i32>} : memref<16x256xf32, #tpu.memory_space<vmem>>, vector<16x256xf32>,
      %31 = arith.mulf %29, %29 : vector<16x256xf32>
      %cst_25 = arith.constant dense<0.000000e+00> : vector<16xf32>
      %32 = vector.multi_reduction <add>, %31, %cst_25 [1] : vector<16x256xf32> to vector<16xf32>
      %33 = vector.shape_cast %32 : vector<16xf32> to vector<16x1xf32>
      %cst_26 = arith.constant 2.560000e+02 : f32
      %34 = vector.broadcast %cst_26 : f32 to vector<16x1xf32>
      %35 = arith.divf %33, %34 : vector<16x1xf32>
      %cst_27 = arith.constant 9.99999997E-7 : f32
      %36 = vector.broadcast %cst_27 : f32 to vector<16x1xf32>
      %37 = arith.addf %35, %36 : vector<16x1xf32>
      %38 = math.rsqrt %37 : vector<16x1xf32>
      %39 = vector.broadcast %38 : vector<16x1xf32> to vector<16x256xf32>
      %40 = arith.mulf %29, %39 : vector<16x256xf32>
      %c0_28 = arith.constant 0 : index
      %c0_29 = arith.constant 0 : index
      %41 = vector.load %arg5[%c0_28, %c0_29] : memref<1x256xbf16, #tpu.memory_space<vmem>>, vector<1x256xbf16>
      %42 = arith.extf %41 : vector<1x256xbf16> to vector<1x256xf32>
      %43 = vector.broadcast %42 : vector<1x256xf32> to vector<16x256xf32>
      %44 = arith.mulf %40, %43 : vector<16x256xf32>
      %45 = arith.truncf %44 : vector<16x256xf32> to vector<16x256xbf16>
      %c0_30 = arith.constant 0 : index
      %c0_31 = arith.constant 0 : index
      %46 = vector.load %arg11[%c0_30, %c0_31] : memref<16x256xbf16, #tpu.memory_space<vmem>>, vector<16x256xbf16>
      tpu.vector_store %arg11[%c0_30, %c0_31], %45 {strides = array<i32>} : memref<16x256xbf16, #tpu.memory_space<vmem>>, vector<16x256xbf16>,
      %cst_32 = arith.constant 0.000000e+00 : f32
      %47 = vector.broadcast %cst_32 : f32 to vector<16x256xf32>
      %c0_33 = arith.constant 0 : index
      %c0_34 = arith.constant 0 : index
      %48 = vector.load %arg12[%c0_33, %c0_34] : memref<16x256xf32, #tpu.memory_space<vmem>>, vector<16x256xf32>
      tpu.vector_store %arg12[%c0_33, %c0_34], %47 {strides = array<i32>} : memref<16x256xf32, #tpu.memory_space<vmem>>, vector<16x256xf32>,
    } else {
    }
    %c0 = arith.constant 0 : index
    %c0_1 = arith.constant 0 : index
    %3 = vector.load %arg11[%c0, %c0_1] : memref<16x256xbf16, #tpu.memory_space<vmem>>, vector<16x256xbf16>
    %c0_2 = arith.constant 0 : index
    %c0_3 = arith.constant 0 : index
    %4 = vector.load %arg6[%c0_2, %c0_3] : memref<256x256xbf16, #tpu.memory_space<vmem>>, vector<256x256xbf16>
    %cst = arith.constant dense<0.000000e+00> : vector<16x256xf32>
    %5 = tpu.matmul %3, %4, %cst {dimension_numbers = #tpu.dot_dimension_numbers<[1], [0], [0], [1], [0, 0, 1, 1], [], []>} : vector<16x256xbf16>, vector<256x256xbf16>, vector<16x256xf32> -> vector<16x256xf32>
    %c0_4 = arith.constant 0 : index
    %c0_5 = arith.constant 0 : index
    %6 = vector.load %arg7[%c0_4, %c0_5] : memref<256x256xbf16, #tpu.memory_space<vmem>>, vector<256x256xbf16>
    %cst_6 = arith.constant dense<0.000000e+00> : vector<16x256xf32>
    %7 = tpu.matmul %3, %6, %cst_6 {dimension_numbers = #tpu.dot_dimension_numbers<[1], [0], [0], [1], [0, 0, 1, 1], [], []>} : vector<16x256xbf16>, vector<256x256xbf16>, vector<16x256xf32> -> vector<16x256xf32>
    %8 = arith.negf %5 : vector<16x256xf32>
    %9 = math.exp %8 : vector<16x256xf32>
    %cst_7 = arith.constant 1.000000e+00 : f32
    %10 = vector.broadcast %cst_7 : f32 to vector<16x256xf32>
    %11 = arith.addf %10, %9 : vector<16x256xf32>
    %12 = arith.divf %10, %11 : vector<16x256xf32>
    %13 = arith.mulf %5, %12 : vector<16x256xf32>
    %14 = arith.mulf %13, %7 : vector<16x256xf32>
    %c0_8 = arith.constant 0 : index
    %c0_9 = arith.constant 0 : index
    %15 = vector.load %arg12[%c0_8, %c0_9] : memref<16x256xf32, #tpu.memory_space<vmem>>, vector<16x256xf32>
    %16 = arith.truncf %14 : vector<16x256xf32> to vector<16x256xbf16>
    %c0_10 = arith.constant 0 : index
    %c0_11 = arith.constant 0 : index
    %17 = vector.load %arg8[%c0_10, %c0_11] : memref<256x256xbf16, #tpu.memory_space<vmem>>, vector<256x256xbf16>
    %cst_12 = arith.constant dense<0.000000e+00> : vector<16x256xf32>
    %18 = tpu.matmul %16, %17, %cst_12 {dimension_numbers = #tpu.dot_dimension_numbers<[1], [0], [0], [1], [0, 0, 1, 1], [], []>} : vector<16x256xbf16>, vector<256x256xbf16>, vector<16x256xf32> -> vector<16x256xf32>
    %19 = arith.addf %15, %18 : vector<16x256xf32>
    %c0_13 = arith.constant 0 : index
    %c0_14 = arith.constant 0 : index
    %20 = vector.load %arg12[%c0_13, %c0_14] : memref<16x256xf32, #tpu.memory_space<vmem>>, vector<16x256xf32>
    tpu.vector_store %arg12[%c0_13, %c0_14], %19 {strides = array<i32>} : memref<16x256xf32, #tpu.memory_space<vmem>>, vector<16x256xf32>,
    %c1_i32 = arith.constant 1 : i32
    %21 = arith.cmpi eq, %arg1, %c1_i32 : i32
    %22 = arith.extui %21 : i1 to i32
    %c0_i32_15 = arith.constant 0 : i32
    %23 = arith.cmpi ne, %22, %c0_i32_15 : i32
    scf.if %23 {
      %c0_16 = arith.constant 0 : index
      %c0_17 = arith.constant 0 : index
      %24 = vector.load %arg10[%c0_16, %c0_17] : memref<16x256xf32, #tpu.memory_space<vmem>>, vector<16x256xf32>
      %c0_18 = arith.constant 0 : index
      %c0_19 = arith.constant 0 : index
      %25 = vector.load %arg12[%c0_18, %c0_19] : memref<16x256xf32, #tpu.memory_space<vmem>>, vector<16x256xf32>
      %26 = arith.addf %24, %25 : vector<16x256xf32>
      %27 = arith.truncf %26 : vector<16x256xf32> to vector<16x256xbf16>
      %c0_20 = arith.constant 0 : index
      %c0_21 = arith.constant 0 : index
      %28 = vector.load %arg9[%c0_20, %c0_21] : memref<16x256xbf16, #tpu.memory_space<vmem>>, vector<16x256xbf16>
      tpu.vector_store %arg9[%c0_20, %c0_21], %27 {strides = array<i32>} : memref<16x256xbf16, #tpu.memory_space<vmem>>, vector<16x256xbf16>,
    } else {
    }
    return
  }
  func.func @transform_0(%arg0: i32, %arg1: i32) -> (i32, i32) {
    %c0_i32 = arith.constant 0 : i32
    %c0_i32_0 = arith.constant 0 : i32
    return %arg0, %c0_i32 : i32, i32
  }
  func.func @transform_1(%arg0: i32, %arg1: i32) -> (i32, i32) {
    %c0_i32 = arith.constant 0 : i32
    %c0_i32_0 = arith.constant 0 : i32
    return %arg0, %c0_i32 : i32, i32
  }
  func.func @transform_2(%arg0: i32, %arg1: i32) -> (i32, i32) {
    %c0_i32 = arith.constant 0 : i32
    %c0_i32_0 = arith.constant 0 : i32
    %c0_i32_1 = arith.constant 0 : i32
    return %c0_i32, %c0_i32_0 : i32, i32
  }
  func.func @transform_3(%arg0: i32, %arg1: i32) -> (i32, i32) {
    %c0_i32 = arith.constant 0 : i32
    %c0_i32_0 = arith.constant 0 : i32
    %c0_i32_1 = arith.constant 0 : i32
    return %c0_i32, %c0_i32_0 : i32, i32
  }
  func.func @transform_4(%arg0: i32, %arg1: i32) -> (i32, i32) {
    %c0_i32 = arith.constant 0 : i32
    %c0_i32_0 = arith.constant 0 : i32
    return %c0_i32, %arg1 : i32, i32
  }
  func.func @transform_5(%arg0: i32, %arg1: i32) -> (i32, i32) {
    %c0_i32 = arith.constant 0 : i32
    %c0_i32_0 = arith.constant 0 : i32
    return %c0_i32, %arg1 : i32, i32
  }
  func.func @transform_6(%arg0: i32, %arg1: i32) -> (i32, i32) {
    %c0_i32 = arith.constant 0 : i32
    %c0_i32_0 = arith.constant 0 : i32
    return %arg1, %c0_i32 : i32, i32
  }
  func.func @transform_7(%arg0: i32, %arg1: i32) -> (i32, i32) {
    %c0_i32 = arith.constant 0 : i32
    %c0_i32_0 = arith.constant 0 : i32
    return %arg0, %c0_i32 : i32, i32
  }
}

</mosaic_0001>

<llo_original>
// kernel: decoder_layer_forward.4
$region0: #{decoder_layer_forward.4}
  #allocation0 [shape = 'u32[]', space=smem, size = 0x4, offset = 0x4, fixed_abs, tag = 'smem constant byte address 0x4 - core index']
  #allocation1 [shape = 'u32[144,128]{1,0:T(1,128)}', space=vmem, size = 0x12000, scoped, tag = 'internal scratch']
  #allocation2 [shape = 'f32[8,1]{1,0:T(8,128)}', space=vmem, size = 0x1000, scoped, tag = 'scratch operand']
  #allocation3 [shape = 'f32[8,1]{1,0:T(8,128)}', space=vmem, size = 0x1000, scoped, tag = 'scratch operand']
  #allocation4 [shape = 'f32[8,128]{1,0:T(8,128)}', space=vmem, size = 0x1000, scoped, tag = 'scratch operand']
  %s0 = inlined_call_operand.vmem [shape: bf16[2,8,768], index: 0, kind: input, shape index: {}, may-alias: {0,1,2}]
  %s1 = inlined_call_operand.vmem [shape: bf16[2,8,768], index: 1, kind: input, shape index: {}, may-alias: {0,1,2}]
  %s2 = inlined_call_operand.vmem [shape: bf16[2,8,768], index: 2, kind: input, shape index: {}, may-alias: {0,1,2}]
  %s3 = inlined_call_operand.vmem [shape: bf16[2,8,256], index: 3, kind: output, shape index: {0}]
  %s4 = inlined_call_operand.hbm [shape: bf16[2,2,8,128], index: 4, kind: output, shape index: {1}]
  %s5 = inlined_call_operand.hbm [shape: bf16[2,2,8,128], index: 5, kind: output, shape index: {2}]
  %6 = xla_tuple %s3, %s4, %s5
  %s7 = sld [smem:[#allocation0]]
  $region69: #{decoder_layer_forward.4} parent=0
    _
  %s9 = ssub.s32 1, %s7
  %s10 = scalar_select 0, %s9, %s7
  $region1: #{decoder_layer_forward.4} parent=0
    #allocation5 [shape = 'u8[4096]{0}', space=vmem, size = 0x1000, scoped, tag = 'output window, operand 1']
    #allocation6 [shape = 's32[2]{0}', space=sflag, size = 0x8, scoped, tag = 'scoped memory for decoder_layer_forward.4']
    #allocation7 [shape = 'u8[4096]{0}', space=vmem, size = 0x1000, scoped, tag = 'output window, operand 2']
    #allocation8 [shape = 's32[2]{0}', space=sflag, size = 0x8, scoped, tag = 'scoped memory for decoder_layer_forward.4']
    %11 = vsyncpa [#allocation6], 0
    %s12 = scalar_lea.sflag [#allocation6], 1
    %13 = vsyncpa %s12, 0
    %14 = vsyncpa [#allocation8], 0
    %s15 = scalar_lea.sflag [#allocation8], 1
    %16 = vsyncpa %s15, 0
    loop: start=0, step=1, limit=6
    $region2: #{decoder_layer_forward.4} parent=1 // loop_pre_header
      _
    $region3: #{decoder_layer_forward.4} parent=1 // loop_header
      %s18 = sphi 0, %s22
      %p19 = scmp.ge.s32.totalorder %s18, 6
      %s25 = sphi 0, %s51
      %s26 = sphi 0, %s47
      %s27 = sphi 0, %s43
      %s28 = sphi 0, %s39
      %s29 = sphi 0, %s25
      %s30 = sphi 0, %s26
      %s31 = sphi 0, %s27
      %s32 = sphi 0, %s28
      %s33 = sphi 0, %s29
      %s34 = sphi 0, %s30
      %s35 = sphi 0, %s31
      %s36 = sphi 0, %s32
      %s58 = sphi 0, %s60
      %s61 = sphi 0, %s58
      %s62 = sphi 0, %s61
      %s78 = sphi 0, %s62
      %s90 = sphi 0, %s92
      %s93 = sphi 0, %s90
      %s94 = sphi 0, %s93
      %s110 = sphi 0, %s94
      %s122 = sphi 0, %s124
      %s125 = sphi 0, %s122
      %s126 = sphi 0, %s125
      %s142 = sphi 0, %s126
      %s152 = sphi 0, %s154
      %s155 = sphi 0, %s152
      %s156 = sphi 0, %s155
      %s172 = sphi 0, %s156
      %s182 = sphi 0, %s184
      %s185 = sphi 0, %s182
      %s186 = sphi 0, %s185
      %s202 = sphi 0, %s186
      %s212 = sphi 0, %s214
      %s215 = sphi 0, %s212
      %s216 = sphi 0, %s215
      %s232 = sphi 0, %s216
    $region4: #{decoder_layer_forward.4} parent=1 // loop_header_branch
      %21 = sbr.rel (%p19) target = $region8
    $region5: #{decoder_layer_forward.4} parent=1 // loop_body
      %s23 = ssub.s32 %s18, 1
      %s24 = ssub.s32 %s18, 2
      %s37 = sadd.s32 1, %s28
      %p38 = scmp.ge.s32.totalorder %s37, 1
      %s39 = scalar_select %p38, 0, %s37
      %s40 = sadd.s32 1, %s27
      %s41 = scalar_select %p38, %s40, %s27
      %p42 = scmp.ge.s32.totalorder %s41, 1
      %s43 = scalar_select %p42, 0, %s41
      %s44 = sadd.s32 1, %s26
      %s45 = scalar_select %p42, %s44, %s26
      %p46 = scmp.ge.s32.totalorder %s45, 2
      %s47 = scalar_select %p46, 0, %s45
      %s48 = sadd.s32 1, %s25
      %s49 = scalar_select %p46, %s48, %s25
      %p50 = scmp.ge.s32.totalorder %s49, 2
      %s51 = scalar_select %p50, 0, %s49
      %s52 = ssub.s32 %s25, %s51
      %s53 = ssub.s32 %s27, %s43
      %s54 = sor.u32 %s52, %s53
      %s55 = ssub.s32 %s26, %s47
      %s56 = sor.u32 %s54, %s55
      %p57 = scmp.eq.s32.totalorder %s56, 0
      %s59 = sadd.s32 %s58, 1
      %s60 = scalar_select %p57, %s58, %s59
      %p63 = pneg %p57
      %p64 = scmp.eq.s32.totalorder %s18, 3
      %p65 = por %p63, %p64
      %p66 = scmp.ne.s32.totalorder %s58, %s61
      %p67 = scmp.eq.s32.totalorder %s18, 0
      %p68 = por %p66, %p67
      %p69 = scmp.ne.s32.totalorder %s58, %s61
      %p70 = scmp.eq.s32.totalorder %s23, 3
      %p71 = por %p69, %p70
      %p72 = scmp.ne.s32.totalorder %s61, %s62
      %p73 = scmp.eq.s32.totalorder %s23, 0
      %p74 = por %p72, %p73
      %p75 = scmp.ne.s32.totalorder %s61, %s62
      %p76 = scmp.eq.s32.totalorder %s24, 3
      %p77 = por %p75, %p76
      %p79 = scmp.ne.s32.totalorder %s62, %s78
      %p80 = scmp.eq.s32.totalorder %s24, 0
      %p81 = por %p79, %p80
      %s82 = sadd.s32 %s26, 2
      %s83 = sadd.s32 %s47, 2
      %s84 = ssub.s32 %s25, %s51
      %s85 = ssub.s32 %s28, %s39
      %s86 = sor.u32 %s84, %s85
      %s87 = ssub.s32 %s82, %s83
      %s88 = sor.u32 %s86, %s87
      %p89 = scmp.eq.s32.totalorder %s88, 0
      %s91 = sadd.s32 %s90, 1
      %s92 = scalar_select %p89, %s90, %s91
      %p95 = pneg %p89
      %p96 = scmp.eq.s32.totalorder %s18, 3
      %p97 = por %p95, %p96
      %p98 = scmp.ne.s32.totalorder %s90, %s93
      %p99 = scmp.eq.s32.totalorder %s18, 0
      %p100 = por %p98, %p99
      %p101 = scmp.ne.s32.totalorder %s90, %s93
      %p102 = scmp.eq.s32.totalorder %s23, 3
      %p103 = por %p101, %p102
      %p104 = scmp.ne.s32.totalorder %s93, %s94
      %p105 = scmp.eq.s32.totalorder %s23, 0
      %p106 = por %p104, %p105
      %p107 = scmp.ne.s32.totalorder %s93, %s94
      %p108 = scmp.eq.s32.totalorder %s24, 3
      %p109 = por %p107, %p108
      %p111 = scmp.ne.s32.totalorder %s94, %s110
      %p112 = scmp.eq.s32.totalorder %s24, 0
      %p113 = por %p111, %p112
      %s114 = sadd.s32 %s26, 4
      %s115 = sadd.s32 %s47, 4
      %s116 = ssub.s32 %s25, %s51
      %s117 = ssub.s32 %s28, %s39
      %s118 = sor.u32 %s116, %s117
      %s119 = ssub.s32 %s114, %s115
      %s120 = sor.u32 %s118, %s119
      %p121 = scmp.eq.s32.totalorder %s120, 0
      %s123 = sadd.s32 %s122, 1
      %s124 = scalar_select %p121, %s122, %s123
      %p127 = pneg %p121
      %p128 = scmp.eq.s32.totalorder %s18, 3
      %p129 = por %p127, %p128
      %p130 = scmp.ne.s32.totalorder %s122, %s125
      %p131 = scmp.eq.s32.totalorder %s18, 0
      %p132 = por %p130, %p131
      %p133 = scmp.ne.s32.totalorder %s122, %s125
      %p134 = scmp.eq.s32.totalorder %s23, 3
      %p135 = por %p133, %p134
      %p136 = scmp.ne.s32.totalorder %s125, %s126
      %p137 = scmp.eq.s32.totalorder %s23, 0
      %p138 = por %p136, %p137
      %p139 = scmp.ne.s32.totalorder %s125, %s126
      %p140 = scmp.eq.s32.totalorder %s24, 3
      %p141 = por %p139, %p140
      %p143 = scmp.ne.s32.totalorder %s126, %s142
      %p144 = scmp.eq.s32.totalorder %s24, 0
      %p145 = por %p143, %p144
      %s146 = ssub.s32 %s25, %s51
      %s147 = ssub.s32 %s27, %s43
      %s148 = sor.u32 %s146, %s147
      %s149 = ssub.s32 %s26, %s47
      %s150 = sor.u32 %s148, %s149
      %p151 = scmp.eq.s32.totalorder %s150, 0
      %s153 = sadd.s32 %s152, 1
      %s154 = scalar_select %p151, %s152, %s153
      %p157 = pneg %p151
      %p158 = scmp.eq.s32.totalorder %s18, 3
      %p159 = por %p157, %p158
      %p160 = scmp.ne.s32.totalorder %s152, %s155
      %p161 = scmp.eq.s32.totalorder %s18, 0
      %p162 = por %p160, %p161
      %p163 = scmp.ne.s32.totalorder %s152, %s155
      %p164 = scmp.eq.s32.totalorder %s23, 3
      %p165 = por %p163, %p164
      %p166 = scmp.ne.s32.totalorder %s155, %s156
      %p167 = scmp.eq.s32.totalorder %s23, 0
      %p168 = por %p166, %p167
      %p169 = scmp.ne.s32.totalorder %s155, %s156
      %p170 = scmp.eq.s32.totalorder %s24, 3
      %p171 = por %p169, %p170
      %p173 = scmp.ne.s32.totalorder %s156, %s172
      %p174 = scmp.eq.s32.totalorder %s24, 0
      %p175 = por %p173, %p174
      %s176 = ssub.s32 %s25, %s51
      %s177 = ssub.s32 %s26, %s47
      %s178 = sor.u32 %s176, %s177
      %s179 = ssub.s32 %s28, %s39
      %s180 = sor.u32 %s178, %s179
      %p181 = scmp.eq.s32.totalorder %s180, 0
      %s183 = sadd.s32 %s182, 1
      %s184 = scalar_select %p181, %s182, %s183
      %p187 = pneg %p181
      %p188 = scmp.eq.s32.totalorder %s18, 3
      %p189 = por %p187, %p188
      %p190 = scmp.ne.s32.totalorder %s182, %s185
      %p191 = scmp.eq.s32.totalorder %s18, 0
      %p192 = por %p190, %p191
      %p193 = scmp.ne.s32.totalorder %s182, %s185
      %p194 = scmp.eq.s32.totalorder %s23, 3
      %p195 = por %p193, %p194
      %p196 = scmp.ne.s32.totalorder %s185, %s186
      %p197 = scmp.eq.s32.totalorder %s23, 0
      %p198 = por %p196, %p197
      %p199 = scmp.ne.s32.totalorder %s185, %s186
      %p200 = scmp.eq.s32.totalorder %s24, 3
      %p201 = por %p199, %p200
      %p203 = scmp.ne.s32.totalorder %s186, %s202
      %p204 = scmp.eq.s32.totalorder %s24, 0
      %p205 = por %p203, %p204
      %s206 = ssub.s32 %s25, %s51
      %s207 = ssub.s32 %s26, %s47
      %s208 = sor.u32 %s206, %s207
      %s209 = ssub.s32 %s28, %s39
      %s210 = sor.u32 %s208, %s209
      %p211 = scmp.eq.s32.totalorder %s210, 0
      %s213 = sadd.s32 %s212, 1
      %s214 = scalar_select %p211, %s212, %s213
      %p217 = pneg %p211
      %p218 = scmp.eq.s32.totalorder %s18, 3
      %p219 = por %p217, %p218
      %p220 = scmp.ne.s32.totalorder %s212, %s215
      %p221 = scmp.eq.s32.totalorder %s18, 0
      %p222 = por %p220, %p221
      %p223 = scmp.ne.s32.totalorder %s212, %s215
      %p224 = scmp.eq.s32.totalorder %s23, 3
      %p225 = por %p223, %p224
      %p226 = scmp.ne.s32.totalorder %s215, %s216
      %p227 = scmp.eq.s32.totalorder %s23, 0
      %p228 = por %p226, %p227
      %p229 = scmp.ne.s32.totalorder %s215, %s216
      %p230 = scmp.eq.s32.totalorder %s24, 3
      %p231 = por %p229, %p230
      %p233 = scmp.ne.s32.totalorder %s216, %s232
      %p234 = scmp.eq.s32.totalorder %s24, 0
      %p235 = por %p233, %p234
      %p236 = scmp.le.s32.totalorder 1, %s18
      %p237 = scmp.lt.s32.totalorder %s18, 5
      %p238 = pnand %p236, %p237
      %p239 = pneg %p238
      // Predicated region
      $region9: #{decoder_layer_forward.4} parent=5 // pred_check
        _
      $region10: #{decoder_layer_forward.4} parent=5 // pred_check_branch
        %241 = sbr.rel (%p238) target = $region12
      $region11: #{decoder_layer_forward.4} parent=5 // pred_region
        %s242 = ssub.s32 %s18, 1
      $region12: #{decoder_layer_forward.4} parent=5 // pred_fallthru
        _
      %p243 = scmp.lt.s32.totalorder %s18, 4
      // Predicated region
      $region13: #{decoder_layer_forward.4} parent=5 // pred_check
        %p244 = pneg %p243
      $region14: #{decoder_layer_forward.4} parent=5 // pred_check_branch
        %246 = sbr.rel (%p244) target = $region16
      $region15: #{decoder_layer_forward.4} parent=5 // pred_region
        // Predicated region
        $region17: #{decoder_layer_forward.4} parent=15 // pred_check
          %p247 = pneg %p68
        $region18: #{decoder_layer_forward.4} parent=15 // pred_check_branch
          %249 = sbr.rel (%p247) target = $region20
        $region19: #{decoder_layer_forward.4} parent=15 // pred_region
          %p250 = scmp.lt.s32.totalorder %s25, 1
          %s251 = scalar_select %p250, %s25, 1
          %p252 = scmp.lt.s32.totalorder %s27, 0
          %s253 = scalar_select %p252, %s27, 0
          %p254 = scmp.lt.s32.totalorder %s26, 5
          %s255 = scalar_select %p254, %s26, 5
          %s256 = smul.addr %s253, 6
          %s257 = sadd.s32 %s255, %s256
          %s258 = smul.addr %s251, 6
          %s259 = sadd.s32 %s257, %s258
          %s260 = smul.addr %s259, 4
          %s261 = scalar_lea.vmem %s0, %s260
        $region20: #{decoder_layer_forward.4} parent=15 // pred_fallthru
          _
        // Predicated region
        $region21: #{decoder_layer_forward.4} parent=15 // pred_check
          %p262 = pneg %p100
        $region22: #{decoder_layer_forward.4} parent=15 // pred_check_branch
          %264 = sbr.rel (%p262) target = $region24
        $region23: #{decoder_layer_forward.4} parent=15 // pred_region
          %s265 = sadd.s32 %s26, 2
          %p266 = scmp.lt.s32.totalorder %s25, 1
          %s267 = scalar_select %p266, %s25, 1
          %p268 = scmp.lt.s32.totalorder %s28, 0
          %s269 = scalar_select %p268, %s28, 0
          %p270 = scmp.lt.s32.totalorder %s265, 5
          %s271 = scalar_select %p270, %s265, 5
          %s272 = smul.addr %s269, 6
          %s273 = sadd.s32 %s271, %s272
          %s274 = smul.addr %s267, 6
          %s275 = sadd.s32 %s273, %s274
          %s276 = smul.addr %s275, 4
          %s277 = scalar_lea.vmem %s1, %s276
          %s278 = sadd.s32 %s26, 2
        $region24: #{decoder_layer_forward.4} parent=15 // pred_fallthru
          _
        // Predicated region
        $region25: #{decoder_layer_forward.4} parent=15 // pred_check
          %p279 = pneg %p132
        $region26: #{decoder_layer_forward.4} parent=15 // pred_check_branch
          %281 = sbr.rel (%p279) target = $region28
        $region27: #{decoder_layer_forward.4} parent=15 // pred_region
          %s282 = sadd.s32 %s26, 4
          %p283 = scmp.lt.s32.totalorder %s25, 1
          %s284 = scalar_select %p283, %s25, 1
          %p285 = scmp.lt.s32.totalorder %s28, 0
          %s286 = scalar_select %p285, %s28, 0
          %p287 = scmp.lt.s32.totalorder %s282, 5
          %s288 = scalar_select %p287, %s282, 5
          %s289 = smul.addr %s286, 6
          %s290 = sadd.s32 %s288, %s289
          %s291 = smul.addr %s284, 6
          %s292 = sadd.s32 %s290, %s291
          %s293 = smul.addr %s292, 4
          %s294 = scalar_lea.vmem %s2, %s293
          %s295 = sadd.s32 %s26, 4
        $region28: #{decoder_layer_forward.4} parent=15 // pred_fallthru
          _
      $region16: #{decoder_layer_forward.4} parent=5 // pred_fallthru
        _
      %p296 = scmp.le.s32.totalorder 1, %s18
      %p297 = scmp.lt.s32.totalorder %s18, 5
      %p298 = pnand %p296, %p297
      %p299 = pneg %p298
      // Predicated region
      $region29: #{decoder_layer_forward.4} parent=5 // pred_check
        _
      $region30: #{decoder_layer_forward.4} parent=5 // pred_check_branch
        %301 = sbr.rel (%p298) target = $region32
      $region31: #{decoder_layer_forward.4} parent=5 // pred_region
        %s302 = ssub.s32 %s18, 1
        %p303 = scmp.lt.s32.totalorder %s29, 1
        %s304 = scalar_select %p303, %s29, 1
        %p305 = scmp.lt.s32.totalorder %s31, 0
        %s306 = scalar_select %p305, %s31, 0
        %p307 = scmp.lt.s32.totalorder %s30, 5
        %s308 = scalar_select %p307, %s30, 5
        %s309 = smul.addr %s306, 6
        %s310 = sadd.s32 %s308, %s309
        %s311 = smul.addr %s304, 6
        %s312 = sadd.s32 %s310, %s311
        %s313 = smul.addr %s312, 4
        %s314 = scalar_lea.vmem %s0, %s313
        %p315 = pneg %p74
        %p316 = pneg %p71
        %s317 = sadd.s32 %s30, 2
        %p318 = scmp.lt.s32.totalorder %s29, 1
        %s319 = scalar_select %p318, %s29, 1
        %p320 = scmp.lt.s32.totalorder %s32, 0
        %s321 = scalar_select %p320, %s32, 0
        %p322 = scmp.lt.s32.totalorder %s317, 5
        %s323 = scalar_select %p322, %s317, 5
        %s324 = smul.addr %s321, 6
        %s325 = sadd.s32 %s323, %s324
        %s326 = smul.addr %s319, 6
        %s327 = sadd.s32 %s325, %s326
        %s328 = smul.addr %s327, 4
        %s329 = scalar_lea.vmem %s1, %s328
        %p330 = pneg %p106
        %p331 = pneg %p103
        %s332 = sadd.s32 %s30, 4
        %p333 = scmp.lt.s32.totalorder %s29, 1
        %s334 = scalar_select %p333, %s29, 1
        %p335 = scmp.lt.s32.totalorder %s32, 0
        %s336 = scalar_select %p335, %s32, 0
        %p337 = scmp.lt.s32.totalorder %s332, 5
        %s338 = scalar_select %p337, %s332, 5
        %s339 = smul.addr %s336, 6
        %s340 = sadd.s32 %s338, %s339
        %s341 = smul.addr %s334, 6
        %s342 = sadd.s32 %s340, %s341
        %s343 = smul.addr %s342, 4
        %s344 = scalar_lea.vmem %s2, %s343
        %p345 = pneg %p138
        %p346 = pneg %p135
        %p347 = pneg %p168
        %p348 = pneg %p165
        %p349 = scmp.lt.s32.totalorder %s29, 1
        %s350 = scalar_select %p349, %s29, 1
        %p351 = scmp.lt.s32.totalorder %s31, 0
        %s352 = scalar_select %p351, %s31, 0
        %p353 = scmp.lt.s32.totalorder %s30, 1
        %s354 = scalar_select %p353, %s30, 1
        %s355 = smul.addr %s352, 2
        %s356 = sadd.s32 %s354, %s355
        %s357 = smul.addr %s350, 2
        %s358 = sadd.s32 %s356, %s357
        %s359 = smul.addr %s358, 4
        %s360 = scalar_lea.vmem %s3, %s359
        %p361 = pneg %p198
        %p362 = pneg %p195
        %s363 = sand.u32 %s185, 1
        %s364 = scalar_lea.sflag [#allocation6], %s363
        %s365 = sand.u32 %s185, 1
        %s366 = smul.addr %s365, 4
        %s367 = scalar_lea.vmem [#allocation5], %s366
        %p368 = pneg %p228
        %p369 = pneg %p225
        %s370 = sand.u32 %s215, 1
        %s371 = scalar_lea.sflag [#allocation8], %s370
        %s372 = sand.u32 %s215, 1
        %s373 = smul.addr %s372, 4
        %s374 = scalar_lea.vmem [#allocation7], %s373
        %p375 = scmp.lt.s32.totalorder %s29, 1
        %s376 = scalar_select %p375, %s29, 1
        %p377 = scmp.lt.s32.totalorder %s31, 0
        %s378 = scalar_select %p377, %s31, 0
        %p379 = scmp.lt.s32.totalorder %s30, 5
        %s380 = scalar_select %p379, %s30, 5
        %s381 = smul.addr %s378, 6
        %s382 = sadd.s32 %s380, %s381
        %s383 = smul.addr %s376, 6
        %s384 = sadd.s32 %s382, %s383
        %s385 = smul.addr %s384, 4
        %s386 = scalar_lea.vmem %s0, %s385
        %s387 = sadd.s32 %s30, 2
        %p388 = scmp.lt.s32.totalorder %s29, 1
        %s389 = scalar_select %p388, %s29, 1
        %p390 = scmp.lt.s32.totalorder %s32, 0
        %s391 = scalar_select %p390, %s32, 0
        %p392 = scmp.lt.s32.totalorder %s387, 5
        %s393 = scalar_select %p392, %s387, 5
        %s394 = smul.addr %s391, 6
        %s395 = sadd.s32 %s393, %s394
        %s396 = smul.addr %s389, 6
        %s397 = sadd.s32 %s395, %s396
        %s398 = smul.addr %s397, 4
        %s399 = scalar_lea.vmem %s1, %s398
        %s400 = sadd.s32 %s30, 2
        %s401 = sadd.s32 %s30, 4
        %p402 = scmp.lt.s32.totalorder %s29, 1
        %s403 = scalar_select %p402, %s29, 1
        %p404 = scmp.lt.s32.totalorder %s32, 0
        %s405 = scalar_select %p404, %s32, 0
        %p406 = scmp.lt.s32.totalorder %s401, 5
        %s407 = scalar_select %p406, %s401, 5
        %s408 = smul.addr %s405, 6
        %s409 = sadd.s32 %s407, %s408
        %s410 = smul.addr %s403, 6
        %s411 = sadd.s32 %s409, %s410
        %s412 = smul.addr %s411, 4
        %s413 = scalar_lea.vmem %s2, %s412
        %s414 = sadd.s32 %s30, 4
        %p415 = scmp.lt.s32.totalorder %s29, 1
        %s416 = scalar_select %p415, %s29, 1
        %p417 = scmp.lt.s32.totalorder %s31, 0
        %s418 = scalar_select %p417, %s31, 0
        %p419 = scmp.lt.s32.totalorder %s30, 1
        %s420 = scalar_select %p419, %s30, 1
        %s421 = smul.addr %s418, 2
        %s422 = sadd.s32 %s420, %s421
        %s423 = smul.addr %s416, 2
        %s424 = sadd.s32 %s422, %s423
        %s425 = smul.addr %s424, 4
        %s426 = scalar_lea.vmem %s3, %s425
        %p428 = scmp.eq.s32.totalorder %s32, 0
        // Predicated region
        $region33: #{decoder_layer_forward.4} parent=31 // pred_check
          %p429 = pneg %p428
        $region34: #{decoder_layer_forward.4} parent=31 // pred_check_branch
          %431 = sbr.rel (%p429) target = $region36
        $region35: #{decoder_layer_forward.4} parent=31 // pred_region
          %vm432 = vcmask 7168
          %433 = vst.msk [vmem:[#allocation2] sm:$0xff] %vm432, -inf
          %434 = vst.msk [vmem:[#allocation3] sm:$0xff] %vm432, 0.0
          %435 = vst [vmem:[#allocation4] sm:$0xff] 0.0
        $region36: #{decoder_layer_forward.4} parent=31 // pred_fallthru
          _
        %v436 = vld [vmem:[%s386] sm:$0xf]
        %v437 = vld [vmem:[%s399] sm:$0xf]
        %v438 = vld [vmem:[%s413] sm:$0xf]
        %439 = vst [vmem:[%s367] sm:$0xf] %v437
        %440 = vst [vmem:[%s374] sm:$0xf] %v438
        %441 = vmatprep.subr.bf16.mxu0 0
        %442 = vmatpush1.bf16.xpose.msra.mxu0 0
        %443 = vmatprep.subr.bf16.mxu0 0
        %444 = vmatpush1.bf16.xpose.msra.mxu0 0
        %445 = vmatprep.subr.bf16.mxu0 0
        %446 = vmatpush1.bf16.xpose.msra.mxu0 0
        %447 = vmatprep.subr.bf16.mxu0 0
        %448 = vmatpush1.bf16.xpose.msra.mxu0 0
        %449 = vmatprep.subr.bf16.mxu0 0
        %450 = vmatpush1.bf16.xpose.msra.mxu0 0
        %451 = vmatprep.subr.bf16.mxu0 0
        %452 = vmatpush1.bf16.xpose.msra.mxu0 0
        %453 = vmatprep.subr.bf16.mxu0 0
        %454 = vmatpush1.bf16.xpose.msra.mxu0 0
        %455 = vmatprep.subr.bf16.mxu0 0
        %456 = vmatpush1.bf16.xpose.msra.mxu0 %v437
        %457 = vmatprep.subr.bf16.mxu0 0
        %458 = vmatpush2.bf16.xpose.msra.mxu0 0
        %459 = vmatprep.subr.bf16.mxu0 0
        %460 = vmatpush2.bf16.xpose.msra.mxu0 0
        %461 = vmatprep.subr.bf16.mxu0 0
        %462 = vmatpush2.bf16.xpose.msra.mxu0 0
        %463 = vmatprep.subr.bf16.mxu0 0
        %464 = vmatpush2.bf16.xpose.msra.mxu0 0
        %465 = vmatprep.subr.bf16.mxu0 0
        %466 = vmatpush2.bf16.xpose.msra.mxu0 0
        %467 = vmatprep.subr.bf16.mxu0 0
        %468 = vmatpush2.bf16.xpose.msra.mxu0 0
        %469 = vmatprep.subr.bf16.mxu0 0
        %470 = vmatpush2.bf16.xpose.msra.mxu0 0
        %471 = vmatprep.subr.bf16.mxu0 0
        %472 = vmatpush2.bf16.xpose.msra.mxu0 0
        %473 = vmatprep.mubr.bf16.mxu0 0
        %474 = vmatmul.mubr.bf16.gmra.mxu0 %v436
        %v475 = vpop.f32.mrf.mxu0
        %v476 = vadd.f32 0.0, %v475
        %v477 = vpop.f32.mrf.mxu0
        %v478 = vpop.f32.mrf.mxu0
        %v479 = vpop.f32.mrf.mxu0
        %480 = vdwg.mxu0
        %v481 = vmul.f32 %v476, 0.088388346
        %s482 = smul.u32 %s31, 8
        %v483 = vlaneseq
        %v484 = vshrl.u32 %v483, 7
        %v485 = vstv %s482
        %v486 = vadd.s32 %v485, %v484
        %s487 = smul.u32 %s32, 8
        %v488 = vlaneseq
        %v489 = vand.u32 %v488, 127
        %v490 = vstv %s487
        %v491 = vadd.s32 %v490, %v489
        %vm492 = vcmp.ge.s32.totalorder %v486, %v491
        %v493 = vsel %vm492, %v481, -1e+30
        %v494 = vld [vmem:[#allocation2] sm:$0xff]
        %vm495 = vcmask 64512
        %v496 = vsel %vm495, %v493, -inf
        %497 = vmax.xlane.f32.xlu0 %v496
        %v498 = vpop.xlane.xlu0 %497
        %v499 = vmax.f32 %v494, %v498
        %v500 = vsub.f32 %v494, %v499
        %v501 = vmul.f32 %v500, 1.442695
        %v502 = vpow.pop %v501
        %504 = vset.pattern.permute.xlu0 0
        %505 = vperm.xlu0 %504, %v499
        %v506 = vpop.permute.xlu0 %505
        %v508 = vsub.f32 %v493, %v506
        %v509 = vmul.f32 %v508, 1.442695
        %v510 = vpow.pop %v509
        %v511 = vld [vmem:[#allocation3] sm:$0xff]
        %v512 = vmul.f32 %v502, %v511
        %v513 = vsel %vm495, %v510, 0.0
        %514 = vadd.xlane.f32.xlu0 %v513
        %v515 = vpop.xlane.xlu0 %514
        %v516 = vadd.f32 %v512, %v515
        %vm517 = vcmask 7168
        %518 = vst.msk [vmem:[#allocation3] sm:$0xff] %vm517, %v516
        %v519 = vld [vmem:[#allocation4] sm:$0xff]
        %521 = vset.pattern.permute.xlu0 0
        %522 = vperm.xlu0 %521, %v502
        %v523 = vpop.permute.xlu0 %522
        %v525 = vmul.f32 %v523, %v519
        %v526 = vpack.c.bf16 %v510, %v510
        %v528 = vsel %vm495, %v526, 0
        %vm530 = vcmask 1043456
        %v532 = vsel %vm530, %v438, 0
        %534 = vmatprep.subr.bf16.mxu0 0
        %535 = vmatpush1.bf16.msra.mxu0 0
        %536 = vmatprep.subr.bf16.mxu0 0
        %537 = vmatpush1.bf16.msra.mxu0 0
        %538 = vmatprep.subr.bf16.mxu0 0
        %539 = vmatpush1.bf16.msra.mxu0 0
        %540 = vmatprep.subr.bf16.mxu0 0
        %541 = vmatpush1.bf16.msra.mxu0 0
        %542 = vmatprep.subr.bf16.mxu0 0
        %543 = vmatpush1.bf16.msra.mxu0 0
        %544 = vmatprep.subr.bf16.mxu0 0
        %545 = vmatpush1.bf16.msra.mxu0 0
        %546 = vmatprep.subr.bf16.mxu0 0
        %547 = vmatpush1.bf16.msra.mxu0 0
        %548 = vmatprep.subr.bf16.mxu0 0
        %549 = vmatpush1.bf16.msra.mxu0 %v532
        %550 = vmatprep.subr.bf16.mxu0 0
        %551 = vmatpush2.bf16.msra.mxu0 0
        %552 = vmatprep.subr.bf16.mxu0 0
        %553 = vmatpush2.bf16.msra.mxu0 0
        %554 = vmatprep.subr.bf16.mxu0 0
        %555 = vmatpush2.bf16.msra.mxu0 0
        %556 = vmatprep.subr.bf16.mxu0 0
        %557 = vmatpush2.bf16.msra.mxu0 0
        %558 = vmatprep.subr.bf16.mxu0 0
        %559 = vmatpush2.bf16.msra.mxu0 0
        %560 = vmatprep.subr.bf16.mxu0 0
        %561 = vmatpush2.bf16.msra.mxu0 0
        %562 = vmatprep.subr.bf16.mxu0 0
        %563 = vmatpush2.bf16.msra.mxu0 0
        %564 = vmatprep.subr.bf16.mxu0 0
        %565 = vmatpush2.bf16.msra.mxu0 0
        %566 = vmatprep.mubr.bf16.mxu0 0
        %567 = vmatmul.mubr.bf16.gmra.mxu0 %v528
        %v568 = vpop.f32.mrf.mxu0
        %v569 = vadd.f32 0.0, %v568
        %v570 = vpop.f32.mrf.mxu0
        %v571 = vpop.f32.mrf.mxu0
        %v572 = vpop.f32.mrf.mxu0
        %573 = vdwg.mxu0
        %v574 = vadd.f32 %v525, %v569
        %575 = vst [vmem:[#allocation4] sm:$0xff] %v574
        %576 = vst.msk [vmem:[#allocation2] sm:$0xff] %vm517, %v499
        // Predicated region
        $region37: #{decoder_layer_forward.4} parent=31 // pred_check
          %p577 = pneg %p428
        $region38: #{decoder_layer_forward.4} parent=31 // pred_check_branch
          %579 = sbr.rel (%p577) target = $region40
        $region39: #{decoder_layer_forward.4} parent=31 // pred_region
          %v580 = vld [vmem:[#allocation3] sm:$0xff]
          %v581 = vrcp.pop %v580
          %v582 = vld [vmem:[#allocation4] sm:$0xff]
          %584 = vset.pattern.permute.xlu0 0
          %585 = vperm.xlu0 %584, %v581
          %v586 = vpop.permute.xlu0 %585
          %v588 = vmul.f32 %v582, %v586
          %v589 = vpack.c.bf16 %v588, %v588
          %590 = vst [vmem:[%s426] sm:$0xf] %v589
        $region40: #{decoder_layer_forward.4} parent=31 // pred_fallthru
          _
        %p591 = scmp.lt.s32.totalorder %s29, 1
        %s592 = scalar_select %p591, %s29, 1
        %p593 = scmp.lt.s32.totalorder %s31, 0
        %s594 = scalar_select %p593, %s31, 0
        %p595 = scmp.lt.s32.totalorder %s30, 1
        %s596 = scalar_select %p595, %s30, 1
        %s597 = smul.addr %s594, 2
        %s598 = sadd.s32 %s596, %s597
        %s599 = smul.addr %s592, 2
        %s600 = sadd.s32 %s598, %s599
        %s601 = smul.addr %s600, 4
        %s602 = scalar_lea.vmem %s3, %s601
        %s603 = sand.u32 %s185, 1
        %s604 = scalar_lea.sflag [#allocation6], %s603
        %s605 = sand.u32 %s185, 1
        %s606 = smul.addr %s605, 4
        %s607 = scalar_lea.vmem [#allocation5], %s606
        %s608 = sand.u32 %s215, 1
        %s609 = scalar_lea.sflag [#allocation8], %s608
        %s610 = sand.u32 %s215, 1
        %s611 = smul.addr %s610, 4
        %s612 = scalar_lea.vmem [#allocation7], %s611
        // Predicated region
        $region41: #{decoder_layer_forward.4} parent=31 // pred_check
          %p613 = pneg %p165
        $region42: #{decoder_layer_forward.4} parent=31 // pred_check_branch
          %615 = sbr.rel (%p613) target = $region44
        $region43: #{decoder_layer_forward.4} parent=31 // pred_region
          _
        $region44: #{decoder_layer_forward.4} parent=31 // pred_fallthru
          _
        // Predicated region
        $region45: #{decoder_layer_forward.4} parent=31 // pred_check
          %p616 = pneg %p195
        $region46: #{decoder_layer_forward.4} parent=31 // pred_check_branch
          %618 = sbr.rel (%p616) target = $region48
        $region47: #{decoder_layer_forward.4} parent=31 // pred_region
          %s620 = ssub.s32 64, 64
          %621 = vsyncadd %s604, %s620
          %s622 = sadd.s32 %s32, %s30
          %s623 = smul.addr %s29, 2
          %s624 = sadd.s32 %s622, %s623
          %s625 = smul.addr %s624, 64
          %s626 = scalar_lea.hbm %s4, %s625
          %s628 = sshll.u32 %s607, 4
          %s629 = int_to_ptr.vmem [resolvable:$true] %s628
          %631 = dma.vmem_to_hbm [thread:$0]  %s629, 64, %s626, %s604
        $region48: #{decoder_layer_forward.4} parent=31 // pred_fallthru
          _
        // Predicated region
        $region49: #{decoder_layer_forward.4} parent=31 // pred_check
          %p632 = pneg %p225
        $region50: #{decoder_layer_forward.4} parent=31 // pred_check_branch
          %634 = sbr.rel (%p632) target = $region52
        $region51: #{decoder_layer_forward.4} parent=31 // pred_region
          %s636 = ssub.s32 64, 64
          %637 = vsyncadd %s609, %s636
          %s638 = sadd.s32 %s32, %s30
          %s639 = smul.addr %s29, 2
          %s640 = sadd.s32 %s638, %s639
          %s641 = smul.addr %s640, 64
          %s642 = scalar_lea.hbm %s5, %s641
          %s644 = sshll.u32 %s612, 4
          %s645 = int_to_ptr.vmem [resolvable:$true] %s644
          %647 = dma.vmem_to_hbm [thread:$0]  %s645, 64, %s642, %s609
        $region52: #{decoder_layer_forward.4} parent=31 // pred_fallthru
          _
      $region32: #{decoder_layer_forward.4} parent=5 // pred_fallthru
        _
      %p648 = scmp.le.s32.totalorder 2, %s18
      // Predicated region
      $region53: #{decoder_layer_forward.4} parent=5 // pred_check
        %p649 = pneg %p648
      $region54: #{decoder_layer_forward.4} parent=5 // pred_check_branch
        %651 = sbr.rel (%p649) target = $region56
      $region55: #{decoder_layer_forward.4} parent=5 // pred_region
        %s652 = ssub.s32 %s18, 2
        // Predicated region
        $region57: #{decoder_layer_forward.4} parent=55 // pred_check
          %p653 = pneg %p171
        $region58: #{decoder_layer_forward.4} parent=55 // pred_check_branch
          %655 = sbr.rel (%p653) target = $region60
        $region59: #{decoder_layer_forward.4} parent=55 // pred_region
          %p656 = scmp.lt.s32.totalorder %s33, 1
          %s657 = scalar_select %p656, %s33, 1
          %p658 = scmp.lt.s32.totalorder %s35, 0
          %s659 = scalar_select %p658, %s35, 0
          %p660 = scmp.lt.s32.totalorder %s34, 1
          %s661 = scalar_select %p660, %s34, 1
          %s662 = smul.addr %s659, 2
          %s663 = sadd.s32 %s661, %s662
          %s664 = smul.addr %s657, 2
          %s665 = sadd.s32 %s663, %s664
          %s666 = smul.addr %s665, 4
          %s667 = scalar_lea.vmem %s3, %s666
        $region60: #{decoder_layer_forward.4} parent=55 // pred_fallthru
          _
        // Predicated region
        $region61: #{decoder_layer_forward.4} parent=55 // pred_check
          %p668 = pneg %p201
        $region62: #{decoder_layer_forward.4} parent=55 // pred_check_branch
          %670 = sbr.rel (%p668) target = $region64
        $region63: #{decoder_layer_forward.4} parent=55 // pred_region
          %s671 = sand.u32 %s186, 1
          %s672 = scalar_lea.sflag [#allocation6], %s671
          %s673 = sand.u32 %s186, 1
          %s674 = smul.addr %s673, 4
          %s675 = scalar_lea.vmem [#allocation5], %s674
          %676 = dma.done %s672, 64
        $region64: #{decoder_layer_forward.4} parent=55 // pred_fallthru
          _
        // Predicated region
        $region65: #{decoder_layer_forward.4} parent=55 // pred_check
          %p677 = pneg %p231
        $region66: #{decoder_layer_forward.4} parent=55 // pred_check_branch
          %679 = sbr.rel (%p677) target = $region68
        $region67: #{decoder_layer_forward.4} parent=55 // pred_region
          %s680 = sand.u32 %s216, 1
          %s681 = scalar_lea.sflag [#allocation8], %s680
          %s682 = sand.u32 %s216, 1
          %s683 = smul.addr %s682, 4
          %s684 = scalar_lea.vmem [#allocation7], %s683
          %685 = dma.done %s681, 64
        $region68: #{decoder_layer_forward.4} parent=55 // pred_fallthru
          _
      $region56: #{decoder_layer_forward.4} parent=5 // pred_fallthru
        _
    $region6: #{decoder_layer_forward.4} parent=1 // loop_footer
      %s22 = sadd.s32 1, %s18
    $region7: #{decoder_layer_forward.4} parent=1 // loop_footer_branch
      %17 = sbr.rel target = $region3
    $region8: #{decoder_layer_forward.4} parent=1 // loop_exit
      _
    %686 = vsyncpa [#allocation6], 1
    %s687 = scalar_lea.sflag [#allocation6], 1
    %688 = vsyncpa %s687, 1
    %689 = vsyncpa [#allocation8], 1
    %s690 = scalar_lea.sflag [#allocation8], 1
    %691 = vsyncpa %s690, 1

// kernel: decoder_layer_forward.3
$region0: #{decoder_layer_forward.3}
  #allocation0 [shape = 'u32[]', space=smem, size = 0x4, offset = 0x4, fixed_abs, tag = 'smem constant byte address 0x4 - core index']
  #allocation1 [shape = 'u32[144,128]{1,0:T(1,128)}', space=vmem, size = 0x12000, scoped, tag = 'internal scratch']
  %s0 = inlined_call_operand.vmem [shape: bf16[16,256], index: 0, kind: input, shape index: {}]
  %s1 = inlined_call_operand.vmem [shape: bf16[1,256], index: 1, kind: input, shape index: {}]
  %s2 = inlined_call_operand.hbm [shape: bf16[256,768], index: 2, kind: input, shape index: {}]
  %s3 = inlined_call_operand.vmem [shape: f32[16,128], index: 3, kind: input, shape index: {}]
  %s4 = inlined_call_operand.vmem [shape: f32[16,128], index: 4, kind: input, shape index: {}]
  %s5 = inlined_call_operand.vmem [shape: bf16[16,768], index: 5, kind: output, shape index: {}]
  %s6 = sld [smem:[#allocation0]]
  $region99: #{decoder_layer_forward.3} parent=0
    _
  %s8 = ssub.s32 1, %s6
  %s9 = scalar_select 0, %s8, %s6
  $region1: #{decoder_layer_forward.3} parent=0
    #allocation2 [shape = 'u8[262144]{0}', space=vmem, size = 0x40000, scoped, tag = 'input window, operand 2']
    #allocation3 [shape = 's32[2]{0}', space=sflag, size = 0x8, scoped, tag = 'scoped memory for decoder_layer_forward.3']
    #allocation4 [shape = 'u8[16384]{0}', space=vmem, size = 0x4000, scoped, tag = 'output window, operand 0']
    %10 = vsyncpa [#allocation3], 0
    %s11 = scalar_lea.sflag [#allocation3], 1
    %12 = vsyncpa %s11, 0
    loop: start=0, step=1, limit=5
    $region2: #{decoder_layer_forward.3} parent=1 // loop_pre_header
      _
    $region3: #{decoder_layer_forward.3} parent=1 // loop_header
      %s14 = sphi 0, %s18
      %p15 = scmp.ge.s32.totalorder %s14, 5
      %s21 = sphi 0, %s33
      %s22 = sphi 0, %s29
      %s23 = sphi 0, %s21
      %s24 = sphi 0, %s22
      %s25 = sphi 0, %s23
      %s26 = sphi 0, %s24
      %s36 = sphi 0, %s38
      %s39 = sphi 0, %s36
      %s40 = sphi 0, %s39
      %s56 = sphi 0, %s40
      %s60 = sphi 0, %s60
      %s62 = sphi 0, %s60
      %s63 = sphi 0, %s62
      %s77 = sphi 0, %s63
      %s83 = sphi 0, %s85
      %s86 = sphi 0, %s83
      %s87 = sphi 0, %s86
      %s103 = sphi 0, %s87
      %s109 = sphi 0, %s111
      %s112 = sphi 0, %s109
      %s113 = sphi 0, %s112
      %s129 = sphi 0, %s113
      %s135 = sphi 0, %s137
      %s138 = sphi 0, %s135
      %s139 = sphi 0, %s138
      %s155 = sphi 0, %s139
      %s163 = sphi 0, %s165
      %s166 = sphi 0, %s163
      %s167 = sphi 0, %s166
      %s183 = sphi 0, %s167
    $region4: #{decoder_layer_forward.3} parent=1 // loop_header_branch
      %17 = sbr.rel (%p15) target = $region8
    $region5: #{decoder_layer_forward.3} parent=1 // loop_body
      %s19 = ssub.s32 %s14, 1
      %s20 = ssub.s32 %s14, 2
      %s27 = sadd.s32 1, %s22
      %p28 = scmp.ge.s32.totalorder %s27, 3
      %s29 = scalar_select %p28, 0, %s27
      %s30 = sadd.s32 1, %s21
      %s31 = scalar_select %p28, %s30, %s21
      %p32 = scmp.ge.s32.totalorder %s31, 1
      %s33 = scalar_select %p32, 0, %s31
      %s34 = ssub.s32 %s21, %s33
      %p35 = scmp.eq.s32.totalorder %s34, 0
      %s37 = sadd.s32 %s36, 1
      %s38 = scalar_select %p35, %s36, %s37
      %p41 = pneg %p35
      %p42 = scmp.eq.s32.totalorder %s14, 2
      %p43 = por %p41, %p42
      %p44 = scmp.ne.s32.totalorder %s36, %s39
      %p45 = scmp.eq.s32.totalorder %s14, 0
      %p46 = por %p44, %p45
      %p47 = scmp.ne.s32.totalorder %s36, %s39
      %p48 = scmp.eq.s32.totalorder %s19, 2
      %p49 = por %p47, %p48
      %p50 = scmp.ne.s32.totalorder %s39, %s40
      %p51 = scmp.eq.s32.totalorder %s19, 0
      %p52 = por %p50, %p51
      %p53 = scmp.ne.s32.totalorder %s39, %s40
      %p54 = scmp.eq.s32.totalorder %s20, 2
      %p55 = por %p53, %p54
      %p57 = scmp.ne.s32.totalorder %s40, %s56
      %p58 = scmp.eq.s32.totalorder %s20, 0
      %p59 = por %p57, %p58
      %s61 = sadd.s32 %s60, 1
      %p64 = scmp.eq.s32.totalorder %s14, 2
      %p65 = scmp.ne.s32.totalorder %s60, %s62
      %p66 = scmp.eq.s32.totalorder %s14, 0
      %p67 = por %p65, %p66
      %p68 = scmp.ne.s32.totalorder %s60, %s62
      %p69 = scmp.eq.s32.totalorder %s19, 2
      %p70 = por %p68, %p69
      %p71 = scmp.ne.s32.totalorder %s62, %s63
      %p72 = scmp.eq.s32.totalorder %s19, 0
      %p73 = por %p71, %p72
      %p74 = scmp.ne.s32.totalorder %s62, %s63
      %p75 = scmp.eq.s32.totalorder %s20, 2
      %p76 = por %p74, %p75
      %p78 = scmp.ne.s32.totalorder %s63, %s77
      %p79 = scmp.eq.s32.totalorder %s20, 0
      %p80 = por %p78, %p79
      %s81 = ssub.s32 %s22, %s29
      %p82 = scmp.eq.s32.totalorder %s81, 0
      %s84 = sadd.s32 %s83, 1
      %s85 = scalar_select %p82, %s83, %s84
      %p88 = pneg %p82
      %p89 = scmp.eq.s32.totalorder %s14, 2
      %p90 = por %p88, %p89
      %p91 = scmp.ne.s32.totalorder %s83, %s86
      %p92 = scmp.eq.s32.totalorder %s14, 0
      %p93 = por %p91, %p92
      %p94 = scmp.ne.s32.totalorder %s83, %s86
      %p95 = scmp.eq.s32.totalorder %s19, 2
      %p96 = por %p94, %p95
      %p97 = scmp.ne.s32.totalorder %s86, %s87
      %p98 = scmp.eq.s32.totalorder %s19, 0
      %p99 = por %p97, %p98
      %p100 = scmp.ne.s32.totalorder %s86, %s87
      %p101 = scmp.eq.s32.totalorder %s20, 2
      %p102 = por %p100, %p101
      %p104 = scmp.ne.s32.totalorder %s87, %s103
      %p105 = scmp.eq.s32.totalorder %s20, 0
      %p106 = por %p104, %p105
      %s107 = ssub.s32 %s21, %s33
      %p108 = scmp.eq.s32.totalorder %s107, 0
      %s110 = sadd.s32 %s109, 1
      %s111 = scalar_select %p108, %s109, %s110
      %p114 = pneg %p108
      %p115 = scmp.eq.s32.totalorder %s14, 2
      %p116 = por %p114, %p115
      %p117 = scmp.ne.s32.totalorder %s109, %s112
      %p118 = scmp.eq.s32.totalorder %s14, 0
      %p119 = por %p117, %p118
      %p120 = scmp.ne.s32.totalorder %s109, %s112
      %p121 = scmp.eq.s32.totalorder %s19, 2
      %p122 = por %p120, %p121
      %p123 = scmp.ne.s32.totalorder %s112, %s113
      %p124 = scmp.eq.s32.totalorder %s19, 0
      %p125 = por %p123, %p124
      %p126 = scmp.ne.s32.totalorder %s112, %s113
      %p127 = scmp.eq.s32.totalorder %s20, 2
      %p128 = por %p126, %p127
      %p130 = scmp.ne.s32.totalorder %s113, %s129
      %p131 = scmp.eq.s32.totalorder %s20, 0
      %p132 = por %p130, %p131
      %s133 = ssub.s32 %s21, %s33
      %p134 = scmp.eq.s32.totalorder %s133, 0
      %s136 = sadd.s32 %s135, 1
      %s137 = scalar_select %p134, %s135, %s136
      %p140 = pneg %p134
      %p141 = scmp.eq.s32.totalorder %s14, 2
      %p142 = por %p140, %p141
      %p143 = scmp.ne.s32.totalorder %s135, %s138
      %p144 = scmp.eq.s32.totalorder %s14, 0
      %p145 = por %p143, %p144
      %p146 = scmp.ne.s32.totalorder %s135, %s138
      %p147 = scmp.eq.s32.totalorder %s19, 2
      %p148 = por %p146, %p147
      %p149 = scmp.ne.s32.totalorder %s138, %s139
      %p150 = scmp.eq.s32.totalorder %s19, 0
      %p151 = por %p149, %p150
      %p152 = scmp.ne.s32.totalorder %s138, %s139
      %p153 = scmp.eq.s32.totalorder %s20, 2
      %p154 = por %p152, %p153
      %p156 = scmp.ne.s32.totalorder %s139, %s155
      %p157 = scmp.eq.s32.totalorder %s20, 0
      %p158 = por %p156, %p157
      %s159 = ssub.s32 %s21, %s33
      %s160 = ssub.s32 %s22, %s29
      %s161 = sor.u32 %s159, %s160
      %p162 = scmp.eq.s32.totalorder %s161, 0
      %s164 = sadd.s32 %s163, 1
      %s165 = scalar_select %p162, %s163, %s164
      %p168 = pneg %p162
      %p169 = scmp.eq.s32.totalorder %s14, 2
      %p170 = por %p168, %p169
      %p171 = scmp.ne.s32.totalorder %s163, %s166
      %p172 = scmp.eq.s32.totalorder %s14, 0
      %p173 = por %p171, %p172
      %p174 = scmp.ne.s32.totalorder %s163, %s166
      %p175 = scmp.eq.s32.totalorder %s19, 2
      %p176 = por %p174, %p175
      %p177 = scmp.ne.s32.totalorder %s166, %s167
      %p178 = scmp.eq.s32.totalorder %s19, 0
      %p179 = por %p177, %p178
      %p180 = scmp.ne.s32.totalorder %s166, %s167
      %p181 = scmp.eq.s32.totalorder %s20, 2
      %p182 = por %p180, %p181
      %p184 = scmp.ne.s32.totalorder %s167, %s183
      %p185 = scmp.eq.s32.totalorder %s20, 0
      %p186 = por %p184, %p185
      %p187 = scmp.le.s32.totalorder 1, %s14
      %p188 = scmp.lt.s32.totalorder %s14, 4
      %p189 = pnand %p187, %p188
      %p190 = pneg %p189
      // Predicated region
      $region9: #{decoder_layer_forward.3} parent=5 // pred_check
        _
      $region10: #{decoder_layer_forward.3} parent=5 // pred_check_branch
        %192 = sbr.rel (%p189) target = $region12
      $region11: #{decoder_layer_forward.3} parent=5 // pred_region
        %s193 = ssub.s32 %s14, 1
        // Predicated region
        $region13: #{decoder_layer_forward.3} parent=11 // pred_check
          %p194 = pneg %p52
        $region14: #{decoder_layer_forward.3} parent=11 // pred_check_branch
          %196 = sbr.rel (%p194) target = $region16
        $region15: #{decoder_layer_forward.3} parent=11 // pred_region
          %s197 = smul.u32 2, %s23
          %p198 = scmp.lt.s32.totalorder %s197, 1
          %s199 = scalar_select %p198, %s197, 1
          %s200 = smul.addr %s199, 2
          %s201 = smul.addr %s200, 4
          %s202 = scalar_lea.vmem %s0, %s201
          %s203 = smul.u32 2, %s23
        $region16: #{decoder_layer_forward.3} parent=11 // pred_fallthru
          _
        // Predicated region
        $region17: #{decoder_layer_forward.3} parent=11 // pred_check
          %p204 = pneg %p73
        $region18: #{decoder_layer_forward.3} parent=11 // pred_check_branch
          %206 = sbr.rel (%p204) target = $region20
        $region19: #{decoder_layer_forward.3} parent=11 // pred_region
          _
        $region20: #{decoder_layer_forward.3} parent=11 // pred_fallthru
          _
        // Predicated region
        $region21: #{decoder_layer_forward.3} parent=11 // pred_check
          %p207 = pneg %p125
        $region22: #{decoder_layer_forward.3} parent=11 // pred_check_branch
          %209 = sbr.rel (%p207) target = $region24
        $region23: #{decoder_layer_forward.3} parent=11 // pred_region
          %s210 = smul.u32 2, %s23
          %p211 = scmp.lt.s32.totalorder %s210, 1
          %s212 = scalar_select %p211, %s210, 1
          %s213 = smul.addr %s212, 8
          %s214 = scalar_lea.vmem %s3, %s213
          %s215 = smul.u32 2, %s23
        $region24: #{decoder_layer_forward.3} parent=11 // pred_fallthru
          _
        // Predicated region
        $region25: #{decoder_layer_forward.3} parent=11 // pred_check
          %p216 = pneg %p151
        $region26: #{decoder_layer_forward.3} parent=11 // pred_check_branch
          %218 = sbr.rel (%p216) target = $region28
        $region27: #{decoder_layer_forward.3} parent=11 // pred_region
          %s219 = smul.u32 2, %s23
          %p220 = scmp.lt.s32.totalorder %s219, 1
          %s221 = scalar_select %p220, %s219, 1
          %s222 = smul.addr %s221, 8
          %s223 = scalar_lea.vmem %s4, %s222
          %s224 = smul.u32 2, %s23
        $region28: #{decoder_layer_forward.3} parent=11 // pred_fallthru
          _
      $region12: #{decoder_layer_forward.3} parent=5 // pred_fallthru
        _
      %p225 = scmp.lt.s32.totalorder %s14, 3
      // Predicated region
      $region29: #{decoder_layer_forward.3} parent=5 // pred_check
        %p226 = pneg %p225
      $region30: #{decoder_layer_forward.3} parent=5 // pred_check_branch
        %228 = sbr.rel (%p226) target = $region32
      $region31: #{decoder_layer_forward.3} parent=5 // pred_region
        // Predicated region
        $region33: #{decoder_layer_forward.3} parent=31 // pred_check
          %p229 = pneg %p93
        $region34: #{decoder_layer_forward.3} parent=31 // pred_check_branch
          %231 = sbr.rel (%p229) target = $region36
        $region35: #{decoder_layer_forward.3} parent=31 // pred_region
          %s232 = sand.u32 %s83, 1
          %s233 = scalar_lea.sflag [#allocation3], %s232
          %s234 = sand.u32 %s83, 1
          %s235 = smul.addr %s234, 256
          %s236 = scalar_lea.vmem [#allocation2], %s235
          %s237 = smul.u32 2, %s22
          %s239 = ssub.s32 4096, 4096
          %240 = vsyncadd %s233, %s239
          %s241 = smul.addr %s237, 64
          %s242 = scalar_lea.hbm %s2, %s241
          %s243 = sshll.u32 %s236, 4
          %s244 = int_to_ptr.vmem [resolvable:$true] %s243
          %249 = dma.hbm_to_vmem [thread:$0]  %s242, 4096, %s244, %s233, 384, 128, 8
        $region36: #{decoder_layer_forward.3} parent=31 // pred_fallthru
          _
      $region32: #{decoder_layer_forward.3} parent=5 // pred_fallthru
        _
      %p250 = scmp.le.s32.totalorder 1, %s14
      %p251 = scmp.lt.s32.totalorder %s14, 4
      %p252 = pnand %p250, %p251
      %p253 = pneg %p252
      // Predicated region
      $region37: #{decoder_layer_forward.3} parent=5 // pred_check
        _
      $region38: #{decoder_layer_forward.3} parent=5 // pred_check_branch
        %255 = sbr.rel (%p252) target = $region40
      $region39: #{decoder_layer_forward.3} parent=5 // pred_region
        %s256 = ssub.s32 %s14, 1
        %s257 = sand.u32 %s86, 1
        %s258 = scalar_lea.sflag [#allocation3], %s257
        %s259 = sand.u32 %s86, 1
        %s260 = smul.addr %s259, 256
        %s261 = scalar_lea.vmem [#allocation2], %s260
        // Predicated region
        $region41: #{decoder_layer_forward.3} parent=39 // pred_check
          %p262 = pneg %p99
        $region42: #{decoder_layer_forward.3} parent=39 // pred_check_branch
          %264 = sbr.rel (%p262) target = $region44
        $region43: #{decoder_layer_forward.3} parent=39 // pred_region
          %265 = dma.done %s258, 4096
        $region44: #{decoder_layer_forward.3} parent=39 // pred_fallthru
          _
        %s266 = smul.u32 2, %s23
        %p267 = scmp.lt.s32.totalorder %s266, 1
        %s268 = scalar_select %p267, %s266, 1
        %s269 = smul.addr %s268, 2
        %s270 = smul.addr %s269, 4
        %s271 = scalar_lea.vmem %s0, %s270
        %p272 = pneg %p52
        %p273 = pneg %p49
        %p274 = pneg %p73
        %p275 = pneg %p70
        %s276 = sand.u32 %s86, 1
        %s277 = scalar_lea.sflag [#allocation3], %s276
        %s278 = sand.u32 %s86, 1
        %s279 = smul.addr %s278, 256
        %s280 = scalar_lea.vmem [#allocation2], %s279
        %p281 = pneg %p99
        %p282 = pneg %p96
        %s283 = smul.u32 2, %s23
        %p284 = scmp.lt.s32.totalorder %s283, 1
        %s285 = scalar_select %p284, %s283, 1
        %s286 = smul.addr %s285, 8
        %s287 = scalar_lea.vmem %s3, %s286
        %p288 = pneg %p125
        %p289 = pneg %p122
        %s290 = smul.u32 2, %s23
        %p291 = scmp.lt.s32.totalorder %s290, 1
        %s292 = scalar_select %p291, %s290, 1
        %s293 = smul.addr %s292, 8
        %s294 = scalar_lea.vmem %s4, %s293
        %p295 = pneg %p151
        %p296 = pneg %p148
        %p297 = pneg %p179
        %p298 = pneg %p176
        %s299 = sand.u32 %s166, 1
        %s300 = sand.u32 %s166, 1
        %s301 = smul.addr %s300, 16
        %s302 = scalar_lea.vmem [#allocation4], %s301
        %s303 = smul.u32 2, %s23
        %p304 = scmp.lt.s32.totalorder %s303, 1
        %s305 = scalar_select %p304, %s303, 1
        %s306 = smul.addr %s305, 2
        %s307 = smul.addr %s306, 4
        %s308 = scalar_lea.vmem %s0, %s307
        %s309 = smul.u32 2, %s23
        %s310 = smul.u32 2, %s24
        %s311 = smul.u32 2, %s23
        %p312 = scmp.lt.s32.totalorder %s311, 1
        %s313 = scalar_select %p312, %s311, 1
        %s314 = smul.addr %s313, 8
        %s315 = scalar_lea.vmem %s3, %s314
        %s316 = smul.u32 2, %s23
        %s317 = smul.u32 2, %s23
        %p318 = scmp.lt.s32.totalorder %s317, 1
        %s319 = scalar_select %p318, %s317, 1
        %s320 = smul.addr %s319, 8
        %s321 = scalar_lea.vmem %s4, %s320
        %s322 = smul.u32 2, %s23
        %s323 = smul.u32 2, %s23
        %s324 = smul.u32 2, %s24
        %v325 = vld [vmem:[%s308] sm:$0xff]
        %v326 = vld [vmem:[%s308 + $0x8] sm:$0xff]
        %v327 = vunpack.c.l.bf16 %v325
        %v328 = vunpack.c.h.bf16 %v325
        %v329 = vunpack.c.l.bf16 %v326
        %v330 = vunpack.c.h.bf16 %v326
        %v331 = vmul.f32 %v327, %v327
        %v332 = vmul.f32 %v328, %v328
        %v333 = vmul.f32 %v329, %v329
        %v334 = vmul.f32 %v330, %v330
        %v335 = vadd.f32 %v331, %v332
        %336 = vadd.xlane.f32.xlu0 %v335
        %v337 = vpop.xlane.xlu0 %336
        %v338 = vadd.f32 %v333, %v334
        %339 = vadd.xlane.f32.xlu0 %v338
        %v340 = vpop.xlane.xlu0 %339
        %v341 = vrcp.pop 256.0
        %v342 = vmul.f32 %v337, %v341
        %v343 = vmul.f32 %v340, %v341
        %v344 = vadd.f32 %v342, 1e-06
        %v345 = vadd.f32 %v343, 1e-06
        %v346 = vrsqrt.pop %v344
        %v347 = vrsqrt.pop %v345
        %v348 = vmul.f32 %v327, %v346
        %v349 = vmul.f32 %v328, %v346
        %v350 = vmul.f32 %v329, %v347
        %v351 = vmul.f32 %v330, %v347
        %v352 = vld [vmem:[%s1] sm:$0x3]
        %v353 = vunpack.c.l.bf16 %v352
        %v355 = vlaneseq
        %v356 = vshrl.u32 %v355, 7
        %v357 = vsub.s32 0, %v356
        %v358 = vrot.slane %v353, %v357
        %v359 = vlaneseq
        %v360 = vshrl.u32 %v359, 7
        %v361 = vsub.s32 2, %v360
        %v362 = vrot.slane %v353, %v361
        %v365 = vlaneseq
        %v366 = vshrl.u32 %v365, 7
        %v367 = vsub.s32 0, %v366
        %v368 = vrot.slane %v358, %v367
        %v369 = vlaneseq
        %v370 = vshrl.u32 %v369, 7
        %v371 = vsub.s32 0, %v370
        %v372 = vrot.slane %v362, %v371
        %v373 = vmul.f32 %v348, %v368
        %v374 = vmul.f32 %v349, %v372
        %v375 = vmul.f32 %v350, %v368
        %v376 = vmul.f32 %v351, %v372
        %v377 = vpack.c.bf16 %v375, %v373
        %v378 = vpack.c.bf16 %v376, %v374
        %v379 = vld [vmem:[%s261] sm:$0xff]
        %v380 = vld [vmem:[%s261 + $0x8] sm:$0xff]
        %v381 = vld [vmem:[%s261 + $0x10] sm:$0xff]
        %v382 = vld [vmem:[%s261 + $0x18] sm:$0xff]
        %v383 = vld [vmem:[%s261 + $0x20] sm:$0xff]
        %v384 = vld [vmem:[%s261 + $0x28] sm:$0xff]
        %v385 = vld [vmem:[%s261 + $0x30] sm:$0xff]
        %v386 = vld [vmem:[%s261 + $0x38] sm:$0xff]
        %v387 = vld [vmem:[%s261 + $0x40] sm:$0xff]
        %v388 = vld [vmem:[%s261 + $0x48] sm:$0xff]
        %v389 = vld [vmem:[%s261 + $0x50] sm:$0xff]
        %v390 = vld [vmem:[%s261 + $0x58] sm:$0xff]
        %v391 = vld [vmem:[%s261 + $0x60] sm:$0xff]
        %v392 = vld [vmem:[%s261 + $0x68] sm:$0xff]
        %v393 = vld [vmem:[%s261 + $0x70] sm:$0xff]
        %v394 = vld [vmem:[%s261 + $0x78] sm:$0xff]
        %v395 = vld [vmem:[%s261 + $0x80] sm:$0xff]
        %v396 = vld [vmem:[%s261 + $0x88] sm:$0xff]
        %v397 = vld [vmem:[%s261 + $0x90] sm:$0xff]
        %v398 = vld [vmem:[%s261 + $0x98] sm:$0xff]
        %v399 = vld [vmem:[%s261 + $0xa0] sm:$0xff]
        %v400 = vld [vmem:[%s261 + $0xa8] sm:$0xff]
        %v401 = vld [vmem:[%s261 + $0xb0] sm:$0xff]
        %v402 = vld [vmem:[%s261 + $0xb8] sm:$0xff]
        %v403 = vld [vmem:[%s261 + $0xc0] sm:$0xff]
        %v404 = vld [vmem:[%s261 + $0xc8] sm:$0xff]
        %v405 = vld [vmem:[%s261 + $0xd0] sm:$0xff]
        %v406 = vld [vmem:[%s261 + $0xd8] sm:$0xff]
        %v407 = vld [vmem:[%s261 + $0xe0] sm:$0xff]
        %v408 = vld [vmem:[%s261 + $0xe8] sm:$0xff]
        %v409 = vld [vmem:[%s261 + $0xf0] sm:$0xff]
        %v410 = vld [vmem:[%s261 + $0xf8] sm:$0xff]
        %v443 = vunpack.c.l.b16 %v379
        %v444 = vunpack.c.h.b16 %v379
        %v445 = vunpack.c.l.b16 %v380
        %v446 = vunpack.c.h.b16 %v380
        %v447 = vunpack.c.l.b16 %v381
        %v448 = vunpack.c.h.b16 %v381
        %v449 = vunpack.c.l.b16 %v382
        %v450 = vunpack.c.h.b16 %v382
        %v451 = vunpack.c.l.b16 %v383
        %v452 = vunpack.c.h.b16 %v383
        %v453 = vunpack.c.l.b16 %v384
        %v454 = vunpack.c.h.b16 %v384
        %v455 = vunpack.c.l.b16 %v385
        %v456 = vunpack.c.h.b16 %v385
        %v457 = vunpack.c.l.b16 %v386
        %v458 = vunpack.c.h.b16 %v386
        %v459 = vunpack.c.l.b16 %v387
        %v460 = vunpack.c.h.b16 %v387
        %v461 = vunpack.c.l.b16 %v388
        %v462 = vunpack.c.h.b16 %v388
        %v463 = vunpack.c.l.b16 %v389
        %v464 = vunpack.c.h.b16 %v389
        %v465 = vunpack.c.l.b16 %v390
        %v466 = vunpack.c.h.b16 %v390
        %v467 = vunpack.c.l.b16 %v391
        %v468 = vunpack.c.h.b16 %v391
        %v469 = vunpack.c.l.b16 %v392
        %v470 = vunpack.c.h.b16 %v392
        %v471 = vunpack.c.l.b16 %v393
        %v472 = vunpack.c.h.b16 %v393
        %v473 = vunpack.c.l.b16 %v394
        %v474 = vunpack.c.h.b16 %v394
        %v475 = vunpack.c.l.b16 %v395
        %v476 = vunpack.c.h.b16 %v395
        %v477 = vunpack.c.l.b16 %v396
        %v478 = vunpack.c.h.b16 %v396
        %v479 = vunpack.c.l.b16 %v397
        %v480 = vunpack.c.h.b16 %v397
        %v481 = vunpack.c.l.b16 %v398
        %v482 = vunpack.c.h.b16 %v398
        %v483 = vunpack.c.l.b16 %v399
        %v484 = vunpack.c.h.b16 %v399
        %v485 = vunpack.c.l.b16 %v400
        %v486 = vunpack.c.h.b16 %v400
        %v487 = vunpack.c.l.b16 %v401
        %v488 = vunpack.c.h.b16 %v401
        %v489 = vunpack.c.l.b16 %v402
        %v490 = vunpack.c.h.b16 %v402
        %v491 = vunpack.c.l.b16 %v403
        %v492 = vunpack.c.h.b16 %v403
        %v493 = vunpack.c.l.b16 %v404
        %v494 = vunpack.c.h.b16 %v404
        %v495 = vunpack.c.l.b16 %v405
        %v496 = vunpack.c.h.b16 %v405
        %v497 = vunpack.c.l.b16 %v406
        %v498 = vunpack.c.h.b16 %v406
        %v499 = vunpack.c.l.b16 %v407
        %v500 = vunpack.c.h.b16 %v407
        %v501 = vunpack.c.l.b16 %v408
        %v502 = vunpack.c.h.b16 %v408
        %v503 = vunpack.c.l.b16 %v409
        %v504 = vunpack.c.h.b16 %v409
        %v505 = vunpack.c.l.b16 %v410
        %v506 = vunpack.c.h.b16 %v410
        %v507 = vpack.c.b16 %v445, %v443
        %v508 = vpack.c.b16 %v446, %v444
        %v509 = vpack.c.b16 %v449, %v447
        %v510 = vpack.c.b16 %v450, %v448
        %v511 = vpack.c.b16 %v453, %v451
        %v512 = vpack.c.b16 %v454, %v452
        %v513 = vpack.c.b16 %v457, %v455
        %v514 = vpack.c.b16 %v458, %v456
        %v515 = vpack.c.b16 %v461, %v459
        %v516 = vpack.c.b16 %v462, %v460
        %v517 = vpack.c.b16 %v465, %v463
        %v518 = vpack.c.b16 %v466, %v464
        %v519 = vpack.c.b16 %v469, %v467
        %v520 = vpack.c.b16 %v470, %v468
        %v521 = vpack.c.b16 %v473, %v471
        %v522 = vpack.c.b16 %v474, %v472
        %v523 = vpack.c.b16 %v477, %v475
        %v524 = vpack.c.b16 %v478, %v476
        %v525 = vpack.c.b16 %v481, %v479
        %v526 = vpack.c.b16 %v482, %v480
        %v527 = vpack.c.b16 %v485, %v483
        %v528 = vpack.c.b16 %v486, %v484
        %v529 = vpack.c.b16 %v489, %v487
        %v530 = vpack.c.b16 %v490, %v488
        %v531 = vpack.c.b16 %v493, %v491
        %v532 = vpack.c.b16 %v494, %v492
        %v533 = vpack.c.b16 %v497, %v495
        %v534 = vpack.c.b16 %v498, %v496
        %v535 = vpack.c.b16 %v501, %v499
        %v536 = vpack.c.b16 %v502, %v500
        %v537 = vpack.c.b16 %v505, %v503
        %v538 = vpack.c.b16 %v506, %v504
        %571 = vmatprep.subr.bf16.mxu0 %v522
        %572 = vmatpush1.bf16.msra.mxu0 %v521
        %573 = vmatprep.subr.bf16.mxu0 %v520
        %574 = vmatpush1.bf16.msra.mxu0 %v519
        %575 = vmatprep.subr.bf16.mxu0 %v518
        %576 = vmatpush1.bf16.msra.mxu0 %v517
        %577 = vmatprep.subr.bf16.mxu0 %v516
        %578 = vmatpush1.bf16.msra.mxu0 %v515
        %579 = vmatprep.subr.bf16.mxu0 %v514
        %580 = vmatpush1.bf16.msra.mxu0 %v513
        %581 = vmatprep.subr.bf16.mxu0 %v512
        %582 = vmatpush1.bf16.msra.mxu0 %v511
        %583 = vmatprep.subr.bf16.mxu0 %v510
        %584 = vmatpush1.bf16.msra.mxu0 %v509
        %585 = vmatprep.subr.bf16.mxu0 %v508
        %586 = vmatpush1.bf16.msra.mxu0 %v507
        %587 = vmatprep.subr.bf16.mxu0 %v538
        %588 = vmatpush2.bf16.msra.mxu0 %v537
        %589 = vmatprep.subr.bf16.mxu0 %v536
        %590 = vmatpush2.bf16.msra.mxu0 %v535
        %591 = vmatprep.subr.bf16.mxu0 %v534
        %592 = vmatpush2.bf16.msra.mxu0 %v533
        %593 = vmatprep.subr.bf16.mxu0 %v532
        %594 = vmatpush2.bf16.msra.mxu0 %v531
        %595 = vmatprep.subr.bf16.mxu0 %v530
        %596 = vmatpush2.bf16.msra.mxu0 %v529
        %597 = vmatprep.subr.bf16.mxu0 %v528
        %598 = vmatpush2.bf16.msra.mxu0 %v527
        %599 = vmatprep.subr.bf16.mxu0 %v526
        %600 = vmatpush2.bf16.msra.mxu0 %v525
        %601 = vmatprep.subr.bf16.mxu0 %v524
        %602 = vmatpush2.bf16.msra.mxu0 %v523
        %603 = vmatprep.mubr.bf16.mxu0 %v378
        %604 = vmatmul.mubr.bf16.gmra.mxu0 %v377
        %v605 = vpop.f32.mrf.mxu0
        %v606 = vadd.f32 0.0, %v605
        %v607 = vpop.f32.mrf.mxu0
        %v608 = vadd.f32 0.0, %v607
        %v609 = vpop.f32.mrf.mxu0
        %v610 = vadd.f32 0.0, %v609
        %v611 = vpop.f32.mrf.mxu0
        %v612 = vadd.f32 0.0, %v611
        %613 = vdwg.mxu0
        %s614 = smul.u32 %s24, 256
        %p615 = scmp.lt.s32.totalorder %s614, 512
        // Predicated region
        $region45: #{decoder_layer_forward.3} parent=39 // pred_check
          %p616 = pneg %p615
        $region46: #{decoder_layer_forward.3} parent=39 // pred_check_branch
          %618 = sbr.rel (%p616) target = $region48
        $region47: #{decoder_layer_forward.3} parent=39 // pred_region
          %v619 = vcombine.high %v606, 0.0
          %v621 = vunpack.c.l.s4 1983009808
          %v622 = vunpack.c.0.s8 %v621
          %v623 = vlaneseq
          %v624 = vshrl.u32 %v623, 7
          %v625 = vsub.s32 %v622, %v624
          %v626 = vrot.slane %v606, %v625
          %v628 = vunpack.c.l.s4 1983009808
          %v629 = vunpack.c.0.s8 %v628
          %v630 = vlaneseq
          %v631 = vshrl.u32 %v630, 7
          %v632 = vsub.s32 %v629, %v631
          %v633 = vrot.slane %v619, %v632
          %v634 = vcombine.high %v608, 0.0
          %v636 = vunpack.c.l.s4 1983009808
          %v637 = vunpack.c.0.s8 %v636
          %v638 = vlaneseq
          %v639 = vshrl.u32 %v638, 7
          %v640 = vsub.s32 %v637, %v639
          %v641 = vrot.slane %v608, %v640
          %v643 = vunpack.c.l.s4 1983009808
          %v644 = vunpack.c.0.s8 %v643
          %v645 = vlaneseq
          %v646 = vshrl.u32 %v645, 7
          %v647 = vsub.s32 %v644, %v646
          %v648 = vrot.slane %v634, %v647
          %v649 = vcombine.low %v626, %v641
          %v650 = vcombine.high %v626, %v641
          %v652 = vunpack.c.l.s4 1934713408
          %v653 = vunpack.c.0.s8 %v652
          %v654 = vlaneseq
          %v655 = vshrl.u32 %v654, 7
          %v656 = vsub.s32 %v653, %v655
          %v657 = vrot.slane %v649, %v656
          %v659 = vunpack.c.l.s4 1934713408
          %v660 = vunpack.c.0.s8 %v659
          %v661 = vlaneseq
          %v662 = vshrl.u32 %v661, 7
          %v663 = vsub.s32 %v660, %v662
          %v664 = vrot.slane %v650, %v663
          %v665 = vcombine.low %v633, %v648
          %v666 = vcombine.high %v633, %v648
          %v668 = vunpack.c.l.s4 1934713408
          %v669 = vunpack.c.0.s8 %v668
          %v670 = vlaneseq
          %v671 = vshrl.u32 %v670, 7
          %v672 = vsub.s32 %v669, %v671
          %v673 = vrot.slane %v665, %v672
          %v675 = vunpack.c.l.s4 1934713408
          %v676 = vunpack.c.0.s8 %v675
          %v677 = vlaneseq
          %v678 = vshrl.u32 %v677, 7
          %v679 = vsub.s32 %v676, %v678
          %v680 = vrot.slane %v666, %v679
          %v681 = vcombine.high %v657, 0.0
          %v682 = vcombine.high %v664, 0.0
          %v683 = vcombine.high %v673, 0.0
          %v684 = vcombine.high %v680, 0.0
          %v685 = vcombine.high %v610, 0.0
          %v687 = vunpack.c.l.s4 1983009808
          %v688 = vunpack.c.0.s8 %v687
          %v689 = vlaneseq
          %v690 = vshrl.u32 %v689, 7
          %v691 = vsub.s32 %v688, %v690
          %v692 = vrot.slane %v610, %v691
          %v694 = vunpack.c.l.s4 1983009808
          %v695 = vunpack.c.0.s8 %v694
          %v696 = vlaneseq
          %v697 = vshrl.u32 %v696, 7
          %v698 = vsub.s32 %v695, %v697
          %v699 = vrot.slane %v685, %v698
          %v700 = vcombine.high %v612, 0.0
          %v702 = vunpack.c.l.s4 1983009808
          %v703 = vunpack.c.0.s8 %v702
          %v704 = vlaneseq
          %v705 = vshrl.u32 %v704, 7
          %v706 = vsub.s32 %v703, %v705
          %v707 = vrot.slane %v612, %v706
          %v709 = vunpack.c.l.s4 1983009808
          %v710 = vunpack.c.0.s8 %v709
          %v711 = vlaneseq
          %v712 = vshrl.u32 %v711, 7
          %v713 = vsub.s32 %v710, %v712
          %v714 = vrot.slane %v700, %v713
          %v715 = vcombine.low %v692, %v707
          %v716 = vcombine.high %v692, %v707
          %v718 = vunpack.c.l.s4 1934713408
          %v719 = vunpack.c.0.s8 %v718
          %v720 = vlaneseq
          %v721 = vshrl.u32 %v720, 7
          %v722 = vsub.s32 %v719, %v721
          %v723 = vrot.slane %v715, %v722
          %v725 = vunpack.c.l.s4 1934713408
          %v726 = vunpack.c.0.s8 %v725
          %v727 = vlaneseq
          %v728 = vshrl.u32 %v727, 7
          %v729 = vsub.s32 %v726, %v728
          %v730 = vrot.slane %v716, %v729
          %v731 = vcombine.low %v699, %v714
          %v732 = vcombine.high %v699, %v714
          %v734 = vunpack.c.l.s4 1934713408
          %v735 = vunpack.c.0.s8 %v734
          %v736 = vlaneseq
          %v737 = vshrl.u32 %v736, 7
          %v738 = vsub.s32 %v735, %v737
          %v739 = vrot.slane %v731, %v738
          %v741 = vunpack.c.l.s4 1934713408
          %v742 = vunpack.c.0.s8 %v741
          %v743 = vlaneseq
          %v744 = vshrl.u32 %v743, 7
          %v745 = vsub.s32 %v742, %v744
          %v746 = vrot.slane %v732, %v745
          %v747 = vcombine.high %v723, 0.0
          %v748 = vcombine.high %v730, 0.0
          %v749 = vcombine.high %v739, 0.0
          %v750 = vcombine.high %v746, 0.0
          %v751 = vld [vmem:[%s315] sm:$0xff]
          %v752 = vld [vmem:[%s315 + $0x8] sm:$0xff]
          %v755 = vcombine.high %v751, %v751
          %v757 = vunpack.c.l.s4 1966171168
          %v758 = vunpack.c.0.s8 %v757
          %v759 = vlaneseq
          %v760 = vshrl.u32 %v759, 7
          %v761 = vsub.s32 %v758, %v760
          %v762 = vrot.slane %v751, %v761
          %v764 = vunpack.c.l.s4 1966171168
          %v765 = vunpack.c.0.s8 %v764
          %v766 = vlaneseq
          %v767 = vshrl.u32 %v766, 7
          %v768 = vsub.s32 %v765, %v767
          %v769 = vrot.slane %v755, %v768
          %v770 = vcombine.high %v762, %v762
          %v771 = vcombine.high %v769, %v769
          %v773 = vunpack.c.l.s4 1966171168
          %v774 = vunpack.c.0.s8 %v773
          %v775 = vlaneseq
          %v776 = vshrl.u32 %v775, 7
          %v777 = vsub.s32 %v774, %v776
          %v778 = vrot.slane %v762, %v777
          %v780 = vunpack.c.l.s4 1966171168
          %v781 = vunpack.c.0.s8 %v780
          %v782 = vlaneseq
          %v783 = vshrl.u32 %v782, 7
          %v784 = vsub.s32 %v781, %v783
          %v785 = vrot.slane %v769, %v784
          %v787 = vunpack.c.l.s4 1966171168
          %v788 = vunpack.c.0.s8 %v787
          %v789 = vlaneseq
          %v790 = vshrl.u32 %v789, 7
          %v791 = vsub.s32 %v788, %v790
          %v792 = vrot.slane %v770, %v791
          %v794 = vunpack.c.l.s4 1966171168
          %v795 = vunpack.c.0.s8 %v794
          %v796 = vlaneseq
          %v797 = vshrl.u32 %v796, 7
          %v798 = vsub.s32 %v795, %v797
          %v799 = vrot.slane %v771, %v798
          %v800 = vcombine.high %v778, %v778
          %v801 = vcombine.high %v785, %v785
          %v802 = vcombine.high %v792, %v792
          %v803 = vcombine.high %v799, %v799
          %v804 = vcombine.high %v752, %v752
          %v806 = vunpack.c.l.s4 1966171168
          %v807 = vunpack.c.0.s8 %v806
          %v808 = vlaneseq
          %v809 = vshrl.u32 %v808, 7
          %v810 = vsub.s32 %v807, %v809
          %v811 = vrot.slane %v752, %v810
          %v813 = vunpack.c.l.s4 1966171168
          %v814 = vunpack.c.0.s8 %v813
          %v815 = vlaneseq
          %v816 = vshrl.u32 %v815, 7
          %v817 = vsub.s32 %v814, %v816
          %v818 = vrot.slane %v804, %v817
          %v819 = vcombine.high %v811, %v811
          %v820 = vcombine.high %v818, %v818
          %v822 = vunpack.c.l.s4 1966171168
          %v823 = vunpack.c.0.s8 %v822
          %v824 = vlaneseq
          %v825 = vshrl.u32 %v824, 7
          %v826 = vsub.s32 %v823, %v825
          %v827 = vrot.slane %v811, %v826
          %v829 = vunpack.c.l.s4 1966171168
          %v830 = vunpack.c.0.s8 %v829
          %v831 = vlaneseq
          %v832 = vshrl.u32 %v831, 7
          %v833 = vsub.s32 %v830, %v832
          %v834 = vrot.slane %v818, %v833
          %v836 = vunpack.c.l.s4 1966171168
          %v837 = vunpack.c.0.s8 %v836
          %v838 = vlaneseq
          %v839 = vshrl.u32 %v838, 7
          %v840 = vsub.s32 %v837, %v839
          %v841 = vrot.slane %v819, %v840
          %v843 = vunpack.c.l.s4 1966171168
          %v844 = vunpack.c.0.s8 %v843
          %v845 = vlaneseq
          %v846 = vshrl.u32 %v845, 7
          %v847 = vsub.s32 %v844, %v846
          %v848 = vrot.slane %v820, %v847
          %v849 = vcombine.high %v827, %v827
          %v850 = vcombine.high %v834, %v834
          %v851 = vcombine.high %v841, %v841
          %v852 = vcombine.high %v848, %v848
          %v853 = vld [vmem:[%s321] sm:$0xff]
          %v854 = vld [vmem:[%s321 + $0x8] sm:$0xff]
          %v857 = vcombine.high %v853, %v853
          %v859 = vunpack.c.l.s4 1966171168
          %v860 = vunpack.c.0.s8 %v859
          %v861 = vlaneseq
          %v862 = vshrl.u32 %v861, 7
          %v863 = vsub.s32 %v860, %v862
          %v864 = vrot.slane %v853, %v863
          %v866 = vunpack.c.l.s4 1966171168
          %v867 = vunpack.c.0.s8 %v866
          %v868 = vlaneseq
          %v869 = vshrl.u32 %v868, 7
          %v870 = vsub.s32 %v867, %v869
          %v871 = vrot.slane %v857, %v870
          %v872 = vcombine.high %v864, %v864
          %v873 = vcombine.high %v871, %v871
          %v875 = vunpack.c.l.s4 1966171168
          %v876 = vunpack.c.0.s8 %v875
          %v877 = vlaneseq
          %v878 = vshrl.u32 %v877, 7
          %v879 = vsub.s32 %v876, %v878
          %v880 = vrot.slane %v864, %v879
          %v882 = vunpack.c.l.s4 1966171168
          %v883 = vunpack.c.0.s8 %v882
          %v884 = vlaneseq
          %v885 = vshrl.u32 %v884, 7
          %v886 = vsub.s32 %v883, %v885
          %v887 = vrot.slane %v871, %v886
          %v889 = vunpack.c.l.s4 1966171168
          %v890 = vunpack.c.0.s8 %v889
          %v891 = vlaneseq
          %v892 = vshrl.u32 %v891, 7
          %v893 = vsub.s32 %v890, %v892
          %v894 = vrot.slane %v872, %v893
          %v896 = vunpack.c.l.s4 1966171168
          %v897 = vunpack.c.0.s8 %v896
          %v898 = vlaneseq
          %v899 = vshrl.u32 %v898, 7
          %v900 = vsub.s32 %v897, %v899
          %v901 = vrot.slane %v873, %v900
          %v902 = vcombine.high %v880, %v880
          %v903 = vcombine.high %v887, %v887
          %v904 = vcombine.high %v894, %v894
          %v905 = vcombine.high %v901, %v901
          %v906 = vcombine.high %v854, %v854
          %v908 = vunpack.c.l.s4 1966171168
          %v909 = vunpack.c.0.s8 %v908
          %v910 = vlaneseq
          %v911 = vshrl.u32 %v910, 7
          %v912 = vsub.s32 %v909, %v911
          %v913 = vrot.slane %v854, %v912
          %v915 = vunpack.c.l.s4 1966171168
          %v916 = vunpack.c.0.s8 %v915
          %v917 = vlaneseq
          %v918 = vshrl.u32 %v917, 7
          %v919 = vsub.s32 %v916, %v918
          %v920 = vrot.slane %v906, %v919
          %v921 = vcombine.high %v913, %v913
          %v922 = vcombine.high %v920, %v920
          %v924 = vunpack.c.l.s4 1966171168
          %v925 = vunpack.c.0.s8 %v924
          %v926 = vlaneseq
          %v927 = vshrl.u32 %v926, 7
          %v928 = vsub.s32 %v925, %v927
          %v929 = vrot.slane %v913, %v928
          %v931 = vunpack.c.l.s4 1966171168
          %v932 = vunpack.c.0.s8 %v931
          %v933 = vlaneseq
          %v934 = vshrl.u32 %v933, 7
          %v935 = vsub.s32 %v932, %v934
          %v936 = vrot.slane %v920, %v935
          %v938 = vunpack.c.l.s4 1966171168
          %v939 = vunpack.c.0.s8 %v938
          %v940 = vlaneseq
          %v941 = vshrl.u32 %v940, 7
          %v942 = vsub.s32 %v939, %v941
          %v943 = vrot.slane %v921, %v942
          %v945 = vunpack.c.l.s4 1966171168
          %v946 = vunpack.c.0.s8 %v945
          %v947 = vlaneseq
          %v948 = vshrl.u32 %v947, 7
          %v949 = vsub.s32 %v946, %v948
          %v950 = vrot.slane %v922, %v949
          %v951 = vcombine.high %v929, %v929
          %v952 = vcombine.high %v936, %v936
          %v953 = vcombine.high %v943, %v943
          %v954 = vcombine.high %v950, %v950
          %v955 = vlaneseq
          %v956 = vand.u32 %v955, 127
          %vm957 = vcmp.lt.s32.totalorder %v956, 64
          %v958 = vsel %vm957, -1.0, 1.0
          %959 = vrot.lane.b32.xlu0 %v657, 64
          %v960 = vpop.permute.xlu0 %959
          %961 = vrot.lane.b32.xlu0 %v681, 64
          %v962 = vpop.permute.xlu0 %961
          %963 = vrot.lane.b32.xlu0 %v664, 64
          %v964 = vpop.permute.xlu0 %963
          %965 = vrot.lane.b32.xlu0 %v682, 64
          %v966 = vpop.permute.xlu0 %965
          %967 = vrot.lane.b32.xlu0 %v673, 64
          %v968 = vpop.permute.xlu0 %967
          %969 = vrot.lane.b32.xlu0 %v683, 64
          %v970 = vpop.permute.xlu0 %969
          %971 = vrot.lane.b32.xlu0 %v680, 64
          %v972 = vpop.permute.xlu0 %971
          %973 = vrot.lane.b32.xlu0 %v684, 64
          %v974 = vpop.permute.xlu0 %973
          %975 = vrot.lane.b32.xlu0 %v723, 64
          %v976 = vpop.permute.xlu0 %975
          %977 = vrot.lane.b32.xlu0 %v747, 64
          %v978 = vpop.permute.xlu0 %977
          %979 = vrot.lane.b32.xlu0 %v730, 64
          %v980 = vpop.permute.xlu0 %979
          %981 = vrot.lane.b32.xlu0 %v748, 64
          %v982 = vpop.permute.xlu0 %981
          %983 = vrot.lane.b32.xlu0 %v739, 64
          %v984 = vpop.permute.xlu0 %983
          %985 = vrot.lane.b32.xlu0 %v749, 64
          %v986 = vpop.permute.xlu0 %985
          %987 = vrot.lane.b32.xlu0 %v746, 64
          %v988 = vpop.permute.xlu0 %987
          %989 = vrot.lane.b32.xlu0 %v750, 64
          %v990 = vpop.permute.xlu0 %989
          %v991 = vmul.f32 %v960, %v958
          %v992 = vmul.f32 %v962, %v958
          %v993 = vmul.f32 %v964, %v958
          %v994 = vmul.f32 %v966, %v958
          %v995 = vmul.f32 %v968, %v958
          %v996 = vmul.f32 %v970, %v958
          %v997 = vmul.f32 %v972, %v958
          %v998 = vmul.f32 %v974, %v958
          %v999 = vmul.f32 %v976, %v958
          %v1000 = vmul.f32 %v978, %v958
          %v1001 = vmul.f32 %v980, %v958
          %v1002 = vmul.f32 %v982, %v958
          %v1003 = vmul.f32 %v984, %v958
          %v1004 = vmul.f32 %v986, %v958
          %v1005 = vmul.f32 %v988, %v958
          %v1006 = vmul.f32 %v990, %v958
          %v1007 = vlaneseq
          %v1008 = vshrl.u32 %v1007, 7
          %v1009 = vsub.s32 0, %v1008
          %v1010 = vrot.slane %v778, %v1009
          %v1011 = vlaneseq
          %v1012 = vshrl.u32 %v1011, 7
          %v1013 = vsub.s32 0, %v1012
          %v1014 = vrot.slane %v792, %v1013
          %v1015 = vlaneseq
          %v1016 = vshrl.u32 %v1015, 7
          %v1017 = vsub.s32 0, %v1016
          %v1018 = vrot.slane %v800, %v1017
          %v1019 = vlaneseq
          %v1020 = vshrl.u32 %v1019, 7
          %v1021 = vsub.s32 0, %v1020
          %v1022 = vrot.slane %v802, %v1021
          %v1023 = vlaneseq
          %v1024 = vshrl.u32 %v1023, 7
          %v1025 = vsub.s32 0, %v1024
          %v1026 = vrot.slane %v785, %v1025
          %v1027 = vlaneseq
          %v1028 = vshrl.u32 %v1027, 7
          %v1029 = vsub.s32 0, %v1028
          %v1030 = vrot.slane %v799, %v1029
          %v1031 = vlaneseq
          %v1032 = vshrl.u32 %v1031, 7
          %v1033 = vsub.s32 0, %v1032
          %v1034 = vrot.slane %v801, %v1033
          %v1035 = vlaneseq
          %v1036 = vshrl.u32 %v1035, 7
          %v1037 = vsub.s32 0, %v1036
          %v1038 = vrot.slane %v803, %v1037
          %v1039 = vlaneseq
          %v1040 = vshrl.u32 %v1039, 7
          %v1041 = vsub.s32 0, %v1040
          %v1042 = vrot.slane %v827, %v1041
          %v1043 = vlaneseq
          %v1044 = vshrl.u32 %v1043, 7
          %v1045 = vsub.s32 0, %v1044
          %v1046 = vrot.slane %v841, %v1045
          %v1047 = vlaneseq
          %v1048 = vshrl.u32 %v1047, 7
          %v1049 = vsub.s32 0, %v1048
          %v1050 = vrot.slane %v849, %v1049
          %v1051 = vlaneseq
          %v1052 = vshrl.u32 %v1051, 7
          %v1053 = vsub.s32 0, %v1052
          %v1054 = vrot.slane %v851, %v1053
          %v1055 = vlaneseq
          %v1056 = vshrl.u32 %v1055, 7
          %v1057 = vsub.s32 0, %v1056
          %v1058 = vrot.slane %v834, %v1057
          %v1059 = vlaneseq
          %v1060 = vshrl.u32 %v1059, 7
          %v1061 = vsub.s32 0, %v1060
          %v1062 = vrot.slane %v848, %v1061
          %v1063 = vlaneseq
          %v1064 = vshrl.u32 %v1063, 7
          %v1065 = vsub.s32 0, %v1064
          %v1066 = vrot.slane %v850, %v1065
          %v1067 = vlaneseq
          %v1068 = vshrl.u32 %v1067, 7
          %v1069 = vsub.s32 0, %v1068
          %v1070 = vrot.slane %v852, %v1069
          %v1087 = vmul.f32 %v657, %v1010
          %v1088 = vmul.f32 %v681, %v1014
          %v1089 = vmul.f32 %v664, %v1018
          %v1090 = vmul.f32 %v682, %v1022
          %v1091 = vmul.f32 %v673, %v1026
          %v1092 = vmul.f32 %v683, %v1030
          %v1093 = vmul.f32 %v680, %v1034
          %v1094 = vmul.f32 %v684, %v1038
          %v1095 = vmul.f32 %v723, %v1042
          %v1096 = vmul.f32 %v747, %v1046
          %v1097 = vmul.f32 %v730, %v1050
          %v1098 = vmul.f32 %v748, %v1054
          %v1099 = vmul.f32 %v739, %v1058
          %v1100 = vmul.f32 %v749, %v1062
          %v1101 = vmul.f32 %v746, %v1066
          %v1102 = vmul.f32 %v750, %v1070
          %v1103 = vlaneseq
          %v1104 = vshrl.u32 %v1103, 7
          %v1105 = vsub.s32 0, %v1104
          %v1106 = vrot.slane %v880, %v1105
          %v1107 = vlaneseq
          %v1108 = vshrl.u32 %v1107, 7
          %v1109 = vsub.s32 0, %v1108
          %v1110 = vrot.slane %v894, %v1109
          %v1111 = vlaneseq
          %v1112 = vshrl.u32 %v1111, 7
          %v1113 = vsub.s32 0, %v1112
          %v1114 = vrot.slane %v902, %v1113
          %v1115 = vlaneseq
          %v1116 = vshrl.u32 %v1115, 7
          %v1117 = vsub.s32 0, %v1116
          %v1118 = vrot.slane %v904, %v1117
          %v1119 = vlaneseq
          %v1120 = vshrl.u32 %v1119, 7
          %v1121 = vsub.s32 0, %v1120
          %v1122 = vrot.slane %v887, %v1121
          %v1123 = vlaneseq
          %v1124 = vshrl.u32 %v1123, 7
          %v1125 = vsub.s32 0, %v1124
          %v1126 = vrot.slane %v901, %v1125
          %v1127 = vlaneseq
          %v1128 = vshrl.u32 %v1127, 7
          %v1129 = vsub.s32 0, %v1128
          %v1130 = vrot.slane %v903, %v1129
          %v1131 = vlaneseq
          %v1132 = vshrl.u32 %v1131, 7
          %v1133 = vsub.s32 0, %v1132
          %v1134 = vrot.slane %v905, %v1133
          %v1135 = vlaneseq
          %v1136 = vshrl.u32 %v1135, 7
          %v1137 = vsub.s32 0, %v1136
          %v1138 = vrot.slane %v929, %v1137
          %v1139 = vlaneseq
          %v1140 = vshrl.u32 %v1139, 7
          %v1141 = vsub.s32 0, %v1140
          %v1142 = vrot.slane %v943, %v1141
          %v1143 = vlaneseq
          %v1144 = vshrl.u32 %v1143, 7
          %v1145 = vsub.s32 0, %v1144
          %v1146 = vrot.slane %v951, %v1145
          %v1147 = vlaneseq
          %v1148 = vshrl.u32 %v1147, 7
          %v1149 = vsub.s32 0, %v1148
          %v1150 = vrot.slane %v953, %v1149
          %v1151 = vlaneseq
          %v1152 = vshrl.u32 %v1151, 7
          %v1153 = vsub.s32 0, %v1152
          %v1154 = vrot.slane %v936, %v1153
          %v1155 = vlaneseq
          %v1156 = vshrl.u32 %v1155, 7
          %v1157 = vsub.s32 0, %v1156
          %v1158 = vrot.slane %v950, %v1157
          %v1159 = vlaneseq
          %v1160 = vshrl.u32 %v1159, 7
          %v1161 = vsub.s32 0, %v1160
          %v1162 = vrot.slane %v952, %v1161
          %v1163 = vlaneseq
          %v1164 = vshrl.u32 %v1163, 7
          %v1165 = vsub.s32 0, %v1164
          %v1166 = vrot.slane %v954, %v1165
          %v1183 = vmul.f32 %v991, %v1106
          %v1184 = vmul.f32 %v992, %v1110
          %v1185 = vmul.f32 %v993, %v1114
          %v1186 = vmul.f32 %v994, %v1118
          %v1187 = vmul.f32 %v995, %v1122
          %v1188 = vmul.f32 %v996, %v1126
          %v1189 = vmul.f32 %v997, %v1130
          %v1190 = vmul.f32 %v998, %v1134
          %v1191 = vmul.f32 %v999, %v1138
          %v1192 = vmul.f32 %v1000, %v1142
          %v1193 = vmul.f32 %v1001, %v1146
          %v1194 = vmul.f32 %v1002, %v1150
          %v1195 = vmul.f32 %v1003, %v1154
          %v1196 = vmul.f32 %v1004, %v1158
          %v1197 = vmul.f32 %v1005, %v1162
          %v1198 = vmul.f32 %v1006, %v1166
          %v1199 = vadd.f32 %v1087, %v1183
          %v1200 = vadd.f32 %v1088, %v1184
          %v1201 = vadd.f32 %v1089, %v1185
          %v1202 = vadd.f32 %v1090, %v1186
          %v1203 = vadd.f32 %v1091, %v1187
          %v1204 = vadd.f32 %v1092, %v1188
          %v1205 = vadd.f32 %v1093, %v1189
          %v1206 = vadd.f32 %v1094, %v1190
          %v1207 = vadd.f32 %v1095, %v1191
          %v1208 = vadd.f32 %v1096, %v1192
          %v1209 = vadd.f32 %v1097, %v1193
          %v1210 = vadd.f32 %v1098, %v1194
          %v1211 = vadd.f32 %v1099, %v1195
          %v1212 = vadd.f32 %v1100, %v1196
          %v1213 = vadd.f32 %v1101, %v1197
          %v1214 = vadd.f32 %v1102, %v1198
          %v1215 = vcombine.low %v1199, %v1201
          %v1217 = vunpack.c.l.s4 1983009808
          %v1218 = vunpack.c.0.s8 %v1217
          %v1219 = vlaneseq
          %v1220 = vshrl.u32 %v1219, 7
          %v1221 = vsub.s32 %v1218, %v1220
          %v1222 = vrot.slane %v1215, %v1221
          %v1223 = vcombine.low %v1200, %v1202
          %v1225 = vunpack.c.l.s4 1983009808
          %v1226 = vunpack.c.0.s8 %v1225
          %v1227 = vlaneseq
          %v1228 = vshrl.u32 %v1227, 7
          %v1229 = vsub.s32 %v1226, %v1228
          %v1230 = vrot.slane %v1223, %v1229
          %v1231 = vcombine.low %v1203, %v1205
          %v1233 = vunpack.c.l.s4 1983009808
          %v1234 = vunpack.c.0.s8 %v1233
          %v1235 = vlaneseq
          %v1236 = vshrl.u32 %v1235, 7
          %v1237 = vsub.s32 %v1234, %v1236
          %v1238 = vrot.slane %v1231, %v1237
          %v1239 = vcombine.low %v1204, %v1206
          %v1241 = vunpack.c.l.s4 1983009808
          %v1242 = vunpack.c.0.s8 %v1241
          %v1243 = vlaneseq
          %v1244 = vshrl.u32 %v1243, 7
          %v1245 = vsub.s32 %v1242, %v1244
          %v1246 = vrot.slane %v1239, %v1245
          %v1247 = vcombine.low %v1222, %v1230
          %v1249 = vunpack.c.l.s4 1934713408
          %v1250 = vunpack.c.0.s8 %v1249
          %v1251 = vlaneseq
          %v1252 = vshrl.u32 %v1251, 7
          %v1253 = vsub.s32 %v1250, %v1252
          %v1254 = vrot.slane %v1247, %v1253
          %v1255 = vcombine.low %v1238, %v1246
          %v1257 = vunpack.c.l.s4 1934713408
          %v1258 = vunpack.c.0.s8 %v1257
          %v1259 = vlaneseq
          %v1260 = vshrl.u32 %v1259, 7
          %v1261 = vsub.s32 %v1258, %v1260
          %v1262 = vrot.slane %v1255, %v1261
          %v1263 = vcombine.low %v1254, %v1262
          %v1264 = vcombine.high %v1254, %v1262
          %v1265 = vcombine.low %v1207, %v1209
          %v1267 = vunpack.c.l.s4 1983009808
          %v1268 = vunpack.c.0.s8 %v1267
          %v1269 = vlaneseq
          %v1270 = vshrl.u32 %v1269, 7
          %v1271 = vsub.s32 %v1268, %v1270
          %v1272 = vrot.slane %v1265, %v1271
          %v1273 = vcombine.low %v1208, %v1210
          %v1275 = vunpack.c.l.s4 1983009808
          %v1276 = vunpack.c.0.s8 %v1275
          %v1277 = vlaneseq
          %v1278 = vshrl.u32 %v1277, 7
          %v1279 = vsub.s32 %v1276, %v1278
          %v1280 = vrot.slane %v1273, %v1279
          %v1281 = vcombine.low %v1211, %v1213
          %v1283 = vunpack.c.l.s4 1983009808
          %v1284 = vunpack.c.0.s8 %v1283
          %v1285 = vlaneseq
          %v1286 = vshrl.u32 %v1285, 7
          %v1287 = vsub.s32 %v1284, %v1286
          %v1288 = vrot.slane %v1281, %v1287
          %v1289 = vcombine.low %v1212, %v1214
          %v1291 = vunpack.c.l.s4 1983009808
          %v1292 = vunpack.c.0.s8 %v1291
          %v1293 = vlaneseq
          %v1294 = vshrl.u32 %v1293, 7
          %v1295 = vsub.s32 %v1292, %v1294
          %v1296 = vrot.slane %v1289, %v1295
          %v1297 = vcombine.low %v1272, %v1280
          %v1299 = vunpack.c.l.s4 1934713408
          %v1300 = vunpack.c.0.s8 %v1299
          %v1301 = vlaneseq
          %v1302 = vshrl.u32 %v1301, 7
          %v1303 = vsub.s32 %v1300, %v1302
          %v1304 = vrot.slane %v1297, %v1303
          %v1305 = vcombine.low %v1288, %v1296
          %v1307 = vunpack.c.l.s4 1934713408
          %v1308 = vunpack.c.0.s8 %v1307
          %v1309 = vlaneseq
          %v1310 = vshrl.u32 %v1309, 7
          %v1311 = vsub.s32 %v1308, %v1310
          %v1312 = vrot.slane %v1305, %v1311
          %v1313 = vcombine.low %v1304, %v1312
          %v1314 = vcombine.high %v1304, %v1312
          %v1315 = vpack.c.bf16 %v1313, %v1263
          %v1316 = vpack.c.bf16 %v1314, %v1264
          %v1319 = vunpack.c.l.b16 %v1315
          %v1320 = vunpack.c.l.b16 %v1316
          %v1321 = vunpack.c.h.b16 %v1315
          %v1322 = vunpack.c.h.b16 %v1316
          %v1323 = vpack.c.b16 %v1320, %v1319
          %v1324 = vpack.c.b16 %v1322, %v1321
          %1327 = vst [vmem:[%s302] sm:$0xff] %v1323
          %1328 = vst [vmem:[%s302 + $0x8] sm:$0xff] %v1324
        $region48: #{decoder_layer_forward.3} parent=39 // pred_fallthru
          _
        %p1329 = scmp.ge.s32.totalorder %s614, 512
        // Predicated region
        $region49: #{decoder_layer_forward.3} parent=39 // pred_check
          %p1330 = pneg %p1329
        $region50: #{decoder_layer_forward.3} parent=39 // pred_check_branch
          %1332 = sbr.rel (%p1330) target = $region52
        $region51: #{decoder_layer_forward.3} parent=39 // pred_region
          %v1333 = vpack.c.bf16 %v610, %v606
          %v1334 = vpack.c.bf16 %v612, %v608
          %v1337 = vunpack.c.l.b16 %v1333
          %v1338 = vunpack.c.l.b16 %v1334
          %v1339 = vunpack.c.h.b16 %v1333
          %v1340 = vunpack.c.h.b16 %v1334
          %v1341 = vpack.c.b16 %v1338, %v1337
          %v1342 = vpack.c.b16 %v1340, %v1339
          %1345 = vst [vmem:[%s302] sm:$0xff] %v1341
          %1346 = vst [vmem:[%s302 + $0x8] sm:$0xff] %v1342
        $region52: #{decoder_layer_forward.3} parent=39 // pred_fallthru
          _
        %s1347 = sand.u32 %s166, 1
        %s1348 = sand.u32 %s166, 1
        %s1349 = smul.addr %s1348, 16
        %s1350 = scalar_lea.vmem [#allocation4], %s1349
        // Predicated region
        $region53: #{decoder_layer_forward.3} parent=39 // pred_check
          %p1351 = pneg %p176
        $region54: #{decoder_layer_forward.3} parent=39 // pred_check_branch
          %1353 = sbr.rel (%p1351) target = $region56
        $region55: #{decoder_layer_forward.3} parent=39 // pred_region
          %s1354 = smul.u32 2, %s23
          %s1355 = smul.u32 2, %s24
          %s1356 = smul.addr %s1354, 6
          %s1357 = sadd.s32 %s1355, %s1356
          %s1358 = smul.addr %s1357, 4
          %s1359 = scalar_lea.vmem %s5, %s1358
          // Predicated region
          $region57: #{decoder_layer_forward.3} parent=55 // pred_check
            _
          $region58: #{decoder_layer_forward.3} parent=55 // pred_check_branch
            %1361 = sbr.rel (0) target = $region60
          $region59: #{decoder_layer_forward.3} parent=55 // pred_region
            // Predicated region
            $region61: #{decoder_layer_forward.3} parent=59 // pred_check
              _
            $region62: #{decoder_layer_forward.3} parent=59 // pred_check_branch
              %1363 = sbr.rel (0) target = $region64
            $region63: #{decoder_layer_forward.3} parent=59 // pred_region
              // Predicated region
              $region76: #{decoder_layer_forward.3} parent=63 // pred_check
                _
              $region77: #{decoder_layer_forward.3} parent=63 // pred_check_branch
                %1381 = sbr.rel (0) target = $region79
              $region78: #{decoder_layer_forward.3} parent=63 // pred_region
                loop: start=0, step=1, limit=1
                $region80: #{decoder_layer_forward.3} parent=78 // loop_pre_header
                  _
                $region81: #{decoder_layer_forward.3} parent=78 // loop_header
                  %s1383 = sphi 0, %s1387
                  %p1384 = scmp.ge.s32.totalorder %s1383, 1
                  %s1388 = sphi %s1350, %s1350
                  %s1389 = sphi %s1359, %s1359
                $region82: #{decoder_layer_forward.3} parent=78 // loop_header_branch
                  %1386 = sbr.rel (%p1384) target = $region86
                $region83: #{decoder_layer_forward.3} parent=78 // loop_body
                  %v1390 = vld [vmem:[%s1388] sm:$0xff]
                  %1391 = vst [vmem:[%s1389] sm:$0xff] %v1390
                  %v1392 = vld [vmem:[%s1388 + $0x8] sm:$0xff]
                  %1393 = vst [vmem:[%s1389 + $0x18] sm:$0xff] %v1392
                $region84: #{decoder_layer_forward.3} parent=78 // loop_footer
                  %s1387 = sadd.s32 1, %s1383
                $region85: #{decoder_layer_forward.3} parent=78 // loop_footer_branch
                  %1382 = sbr.rel target = $region81
                $region86: #{decoder_layer_forward.3} parent=78 // loop_exit
                  _
              $region79: #{decoder_layer_forward.3} parent=63 // pred_fallthru
                _
              // Predicated region
              $region87: #{decoder_layer_forward.3} parent=63 // pred_check
                _
              $region88: #{decoder_layer_forward.3} parent=63 // pred_check_branch
                %1395 = sbr.rel target = $region90
              $region89: #{decoder_layer_forward.3} parent=63 // pred_region
                _
              $region90: #{decoder_layer_forward.3} parent=63 // pred_fallthru
                _
            $region64: #{decoder_layer_forward.3} parent=59 // pred_fallthru
              _
            // Predicated region
            $region65: #{decoder_layer_forward.3} parent=59 // pred_check
              _
            $region66: #{decoder_layer_forward.3} parent=59 // pred_check_branch
              %1365 = sbr.rel target = $region68
            $region67: #{decoder_layer_forward.3} parent=59 // pred_region
              %s1367 = ssub.s32 256, 1
              loop: start=0, step=1, limit=1
              $region69: #{decoder_layer_forward.3} parent=67 // loop_pre_header
                _
              $region70: #{decoder_layer_forward.3} parent=67 // loop_header
                %s1369 = sphi 0, %s1373
                %p1370 = scmp.ge.s32.totalorder %s1369, 1
                %s1374 = sphi %s1350, %s1350
                %s1375 = sphi %s1359, %s1359
              $region71: #{decoder_layer_forward.3} parent=67 // loop_header_branch
                %1372 = sbr.rel (%p1370) target = $region75
              $region72: #{decoder_layer_forward.3} parent=67 // loop_body
                %v1376 = vld [vmem:[%s1374] sm:%s1367]
                %1377 = vst [vmem:[%s1375] sm:%s1367] %v1376
                %v1378 = vld [vmem:[%s1374 + $0x8] sm:%s1367]
                %1379 = vst [vmem:[%s1375 + $0x18] sm:%s1367] %v1378
              $region73: #{decoder_layer_forward.3} parent=67 // loop_footer
                %s1373 = sadd.s32 1, %s1369
              $region74: #{decoder_layer_forward.3} parent=67 // loop_footer_branch
                %1368 = sbr.rel target = $region70
              $region75: #{decoder_layer_forward.3} parent=67 // loop_exit
                _
            $region68: #{decoder_layer_forward.3} parent=59 // pred_fallthru
              _
          $region60: #{decoder_layer_forward.3} parent=55 // pred_fallthru
            _
          %1396 = vnop
        $region56: #{decoder_layer_forward.3} parent=39 // pred_fallthru
          _
      $region40: #{decoder_layer_forward.3} parent=5 // pred_fallthru
        _
      %p1397 = scmp.le.s32.totalorder 2, %s14
      // Predicated region
      $region91: #{decoder_layer_forward.3} parent=5 // pred_check
        %p1398 = pneg %p1397
      $region92: #{decoder_layer_forward.3} parent=5 // pred_check_branch
        %1400 = sbr.rel (%p1398) target = $region94
      $region93: #{decoder_layer_forward.3} parent=5 // pred_region
        %s1401 = ssub.s32 %s14, 2
        // Predicated region
        $region95: #{decoder_layer_forward.3} parent=93 // pred_check
          %p1402 = pneg %p182
        $region96: #{decoder_layer_forward.3} parent=93 // pred_check_branch
          %1404 = sbr.rel (%p1402) target = $region98
        $region97: #{decoder_layer_forward.3} parent=93 // pred_region
          %s1405 = sand.u32 %s167, 1
          %s1406 = sand.u32 %s167, 1
          %s1407 = smul.addr %s1406, 16
          %s1408 = scalar_lea.vmem [#allocation4], %s1407
        $region98: #{decoder_layer_forward.3} parent=93 // pred_fallthru
          _
      $region94: #{decoder_layer_forward.3} parent=5 // pred_fallthru
        _
    $region6: #{decoder_layer_forward.3} parent=1 // loop_footer
      %s18 = sadd.s32 1, %s14
    $region7: #{decoder_layer_forward.3} parent=1 // loop_footer_branch
      %13 = sbr.rel target = $region3
    $region8: #{decoder_layer_forward.3} parent=1 // loop_exit
      _
    %1409 = vsyncpa [#allocation3], 1
    %s1410 = scalar_lea.sflag [#allocation3], 1
    %1411 = vsyncpa %s1410, 1

// kernel: decoder_layer_forward.5
$region0: #{decoder_layer_forward.5}
  #allocation0 [shape = 'u32[]', space=smem, size = 0x4, offset = 0x4, fixed_abs, tag = 'smem constant byte address 0x4 - core index']
  #allocation1 [shape = 'u32[144,128]{1,0:T(1,128)}', space=vmem, size = 0x12000, scoped, tag = 'internal scratch']
  #allocation2 [shape = 'f32[16,256]{1,0:T(8,128)}', space=vmem, size = 0x4000, scoped, tag = 'scratch operand']
  #allocation3 [shape = 'bf16[16,256]{1,0:T(8,128)(2,1)}', space=vmem, size = 0x2000, scoped, tag = 'scratch operand']
  #allocation4 [shape = 'f32[16,256]{1,0:T(8,128)}', space=vmem, size = 0x4000, scoped, tag = 'scratch operand']
  %s0 = inlined_call_operand.vmem [shape: bf16[16,256], index: 0, kind: input, shape index: {}]
  %s1 = inlined_call_operand.vmem [shape: bf16[16,256], index: 1, kind: input, shape index: {}]
  %s2 = inlined_call_operand.vmem [shape: bf16[256,256], index: 2, kind: input, shape index: {}]
  %s3 = inlined_call_operand.vmem [shape: bf16[1,256], index: 3, kind: input, shape index: {}]
  %s4 = inlined_call_operand.vmem [shape: bf16[256,512], index: 4, kind: input, shape index: {}]
  %s5 = inlined_call_operand.vmem [shape: bf16[256,512], index: 5, kind: input, shape index: {}]
  %s6 = inlined_call_operand.hbm [shape: bf16[512,256], index: 6, kind: input, shape index: {}]
  %s7 = inlined_call_operand.hbm [shape: bf16[16,256], index: 7, kind: output, shape index: {}]
  %s8 = sld [smem:[#allocation0]]
  $region149: #{decoder_layer_forward.5} parent=0
    _
  %s10 = ssub.s32 1, %s8
  %s11 = scalar_select 0, %s10, %s8
  $region1: #{decoder_layer_forward.5} parent=0
    #allocation5 [shape = 'u8[262144]{0}', space=vmem, size = 0x40000, scoped, tag = 'input window, operand 4']
    #allocation6 [shape = 'u8[262144]{0}', space=vmem, size = 0x40000, scoped, tag = 'input window, operand 5']
    #allocation7 [shape = 'u8[262144]{0}', space=vmem, size = 0x40000, scoped, tag = 'input window, operand 6']
    #allocation8 [shape = 's32[2]{0}', space=sflag, size = 0x8, scoped, tag = 'scoped memory for decoder_layer_forward.5']
    #allocation9 [shape = 's32[2]{0}', space=sflag, size = 0x8, scoped, tag = 'scoped memory for decoder_layer_forward.5']
    #allocation10 [shape = 'u8[8192]{0}', space=vmem, size = 0x2000, scoped, tag = 'output window, operand 0, single buffered']
    %12 = vsyncpa [#allocation8], 0
    %s13 = scalar_lea.sflag [#allocation8], 1
    %14 = vsyncpa %s13, 0
    %15 = vsyncpa [#allocation9], 0
    loop: start=0, step=1, limit=4
    $region2: #{decoder_layer_forward.5} parent=1 // loop_pre_header
      _
    $region3: #{decoder_layer_forward.5} parent=1 // loop_header
      %s17 = sphi 0, %s21
      %p18 = scmp.ge.s32.totalorder %s17, 4
      %s24 = sphi 0, %s36
      %s25 = sphi 0, %s32
      %s26 = sphi 0, %s24
      %s27 = sphi 0, %s25
      %s28 = sphi 0, %s26
      %s29 = sphi 0, %s27
      %s39 = sphi 0, %s41
      %s42 = sphi 0, %s39
      %s43 = sphi 0, %s42
      %s59 = sphi 0, %s43
      %s65 = sphi 0, %s67
      %s68 = sphi 0, %s65
      %s69 = sphi 0, %s68
      %s85 = sphi 0, %s69
      %s89 = sphi 0, %s89
      %s91 = sphi 0, %s89
      %s92 = sphi 0, %s91
      %s106 = sphi 0, %s92
      %s110 = sphi 0, %s110
      %s112 = sphi 0, %s110
      %s113 = sphi 0, %s112
      %s127 = sphi 0, %s113
      %s133 = sphi 0, %s135
      %s136 = sphi 0, %s133
      %s137 = sphi 0, %s136
      %s153 = sphi 0, %s137
      %s159 = sphi 0, %s161
      %s162 = sphi 0, %s159
      %s163 = sphi 0, %s162
      %s179 = sphi 0, %s163
      %s185 = sphi 0, %s187
      %s188 = sphi 0, %s185
      %s189 = sphi 0, %s188
      %s205 = sphi 0, %s189
      %s211 = sphi 0, %s213
      %s214 = sphi 0, %s211
      %s215 = sphi 0, %s214
      %s231 = sphi 0, %s215
    $region4: #{decoder_layer_forward.5} parent=1 // loop_header_branch
      %20 = sbr.rel (%p18) target = $region8
    $region5: #{decoder_layer_forward.5} parent=1 // loop_body
      %s22 = ssub.s32 %s17, 1
      %s23 = ssub.s32 %s17, 2
      %s30 = sadd.s32 1, %s25
      %p31 = scmp.ge.s32.totalorder %s30, 2
      %s32 = scalar_select %p31, 0, %s30
      %s33 = sadd.s32 1, %s24
      %s34 = scalar_select %p31, %s33, %s24
      %p35 = scmp.ge.s32.totalorder %s34, 1
      %s36 = scalar_select %p35, 0, %s34
      %s37 = ssub.s32 %s24, %s36
      %p38 = scmp.eq.s32.totalorder %s37, 0
      %s40 = sadd.s32 %s39, 1
      %s41 = scalar_select %p38, %s39, %s40
      %p44 = pneg %p38
      %p45 = scmp.eq.s32.totalorder %s17, 1
      %p46 = por %p44, %p45
      %p47 = scmp.ne.s32.totalorder %s39, %s42
      %p48 = scmp.eq.s32.totalorder %s17, 0
      %p49 = por %p47, %p48
      %p50 = scmp.ne.s32.totalorder %s39, %s42
      %p51 = scmp.eq.s32.totalorder %s22, 1
      %p52 = por %p50, %p51
      %p53 = scmp.ne.s32.totalorder %s42, %s43
      %p54 = scmp.eq.s32.totalorder %s22, 0
      %p55 = por %p53, %p54
      %p56 = scmp.ne.s32.totalorder %s42, %s43
      %p57 = scmp.eq.s32.totalorder %s23, 1
      %p58 = por %p56, %p57
      %p60 = scmp.ne.s32.totalorder %s43, %s59
      %p61 = scmp.eq.s32.totalorder %s23, 0
      %p62 = por %p60, %p61
      %s63 = ssub.s32 %s24, %s36
      %p64 = scmp.eq.s32.totalorder %s63, 0
      %s66 = sadd.s32 %s65, 1
      %s67 = scalar_select %p64, %s65, %s66
      %p70 = pneg %p64
      %p71 = scmp.eq.s32.totalorder %s17, 1
      %p72 = por %p70, %p71
      %p73 = scmp.ne.s32.totalorder %s65, %s68
      %p74 = scmp.eq.s32.totalorder %s17, 0
      %p75 = por %p73, %p74
      %p76 = scmp.ne.s32.totalorder %s65, %s68
      %p77 = scmp.eq.s32.totalorder %s22, 1
      %p78 = por %p76, %p77
      %p79 = scmp.ne.s32.totalorder %s68, %s69
      %p80 = scmp.eq.s32.totalorder %s22, 0
      %p81 = por %p79, %p80
      %p82 = scmp.ne.s32.totalorder %s68, %s69
      %p83 = scmp.eq.s32.totalorder %s23, 1
      %p84 = por %p82, %p83
      %p86 = scmp.ne.s32.totalorder %s69, %s85
      %p87 = scmp.eq.s32.totalorder %s23, 0
      %p88 = por %p86, %p87
      %s90 = sadd.s32 %s89, 1
      %p93 = scmp.eq.s32.totalorder %s17, 1
      %p94 = scmp.ne.s32.totalorder %s89, %s91
      %p95 = scmp.eq.s32.totalorder %s17, 0
      %p96 = por %p94, %p95
      %p97 = scmp.ne.s32.totalorder %s89, %s91
      %p98 = scmp.eq.s32.totalorder %s22, 1
      %p99 = por %p97, %p98
      %p100 = scmp.ne.s32.totalorder %s91, %s92
      %p101 = scmp.eq.s32.totalorder %s22, 0
      %p102 = por %p100, %p101
      %p103 = scmp.ne.s32.totalorder %s91, %s92
      %p104 = scmp.eq.s32.totalorder %s23, 1
      %p105 = por %p103, %p104
      %p107 = scmp.ne.s32.totalorder %s92, %s106
      %p108 = scmp.eq.s32.totalorder %s23, 0
      %p109 = por %p107, %p108
      %s111 = sadd.s32 %s110, 1
      %p114 = scmp.eq.s32.totalorder %s17, 1
      %p115 = scmp.ne.s32.totalorder %s110, %s112
      %p116 = scmp.eq.s32.totalorder %s17, 0
      %p117 = por %p115, %p116
      %p118 = scmp.ne.s32.totalorder %s110, %s112
      %p119 = scmp.eq.s32.totalorder %s22, 1
      %p120 = por %p118, %p119
      %p121 = scmp.ne.s32.totalorder %s112, %s113
      %p122 = scmp.eq.s32.totalorder %s22, 0
      %p123 = por %p121, %p122
      %p124 = scmp.ne.s32.totalorder %s112, %s113
      %p125 = scmp.eq.s32.totalorder %s23, 1
      %p126 = por %p124, %p125
      %p128 = scmp.ne.s32.totalorder %s113, %s127
      %p129 = scmp.eq.s32.totalorder %s23, 0
      %p130 = por %p128, %p129
      %s131 = ssub.s32 %s25, %s32
      %p132 = scmp.eq.s32.totalorder %s131, 0
      %s134 = sadd.s32 %s133, 1
      %s135 = scalar_select %p132, %s133, %s134
      %p138 = pneg %p132
      %p139 = scmp.eq.s32.totalorder %s17, 1
      %p140 = por %p138, %p139
      %p141 = scmp.ne.s32.totalorder %s133, %s136
      %p142 = scmp.eq.s32.totalorder %s17, 0
      %p143 = por %p141, %p142
      %p144 = scmp.ne.s32.totalorder %s133, %s136
      %p145 = scmp.eq.s32.totalorder %s22, 1
      %p146 = por %p144, %p145
      %p147 = scmp.ne.s32.totalorder %s136, %s137
      %p148 = scmp.eq.s32.totalorder %s22, 0
      %p149 = por %p147, %p148
      %p150 = scmp.ne.s32.totalorder %s136, %s137
      %p151 = scmp.eq.s32.totalorder %s23, 1
      %p152 = por %p150, %p151
      %p154 = scmp.ne.s32.totalorder %s137, %s153
      %p155 = scmp.eq.s32.totalorder %s23, 0
      %p156 = por %p154, %p155
      %s157 = ssub.s32 %s25, %s32
      %p158 = scmp.eq.s32.totalorder %s157, 0
      %s160 = sadd.s32 %s159, 1
      %s161 = scalar_select %p158, %s159, %s160
      %p164 = pneg %p158
      %p165 = scmp.eq.s32.totalorder %s17, 1
      %p166 = por %p164, %p165
      %p167 = scmp.ne.s32.totalorder %s159, %s162
      %p168 = scmp.eq.s32.totalorder %s17, 0
      %p169 = por %p167, %p168
      %p170 = scmp.ne.s32.totalorder %s159, %s162
      %p171 = scmp.eq.s32.totalorder %s22, 1
      %p172 = por %p170, %p171
      %p173 = scmp.ne.s32.totalorder %s162, %s163
      %p174 = scmp.eq.s32.totalorder %s22, 0
      %p175 = por %p173, %p174
      %p176 = scmp.ne.s32.totalorder %s162, %s163
      %p177 = scmp.eq.s32.totalorder %s23, 1
      %p178 = por %p176, %p177
      %p180 = scmp.ne.s32.totalorder %s163, %s179
      %p181 = scmp.eq.s32.totalorder %s23, 0
      %p182 = por %p180, %p181
      %s183 = ssub.s32 %s25, %s32
      %p184 = scmp.eq.s32.totalorder %s183, 0
      %s186 = sadd.s32 %s185, 1
      %s187 = scalar_select %p184, %s185, %s186
      %p190 = pneg %p184
      %p191 = scmp.eq.s32.totalorder %s17, 1
      %p192 = por %p190, %p191
      %p193 = scmp.ne.s32.totalorder %s185, %s188
      %p194 = scmp.eq.s32.totalorder %s17, 0
      %p195 = por %p193, %p194
      %p196 = scmp.ne.s32.totalorder %s185, %s188
      %p197 = scmp.eq.s32.totalorder %s22, 1
      %p198 = por %p196, %p197
      %p199 = scmp.ne.s32.totalorder %s188, %s189
      %p200 = scmp.eq.s32.totalorder %s22, 0
      %p201 = por %p199, %p200
      %p202 = scmp.ne.s32.totalorder %s188, %s189
      %p203 = scmp.eq.s32.totalorder %s23, 1
      %p204 = por %p202, %p203
      %p206 = scmp.ne.s32.totalorder %s189, %s205
      %p207 = scmp.eq.s32.totalorder %s23, 0
      %p208 = por %p206, %p207
      %s209 = ssub.s32 %s24, %s36
      %p210 = scmp.eq.s32.totalorder %s209, 0
      %s212 = sadd.s32 %s211, 1
      %s213 = scalar_select %p210, %s211, %s212
      %p216 = pneg %p210
      %p217 = scmp.eq.s32.totalorder %s17, 1
      %p218 = por %p216, %p217
      %p219 = scmp.ne.s32.totalorder %s211, %s214
      %p220 = scmp.eq.s32.totalorder %s17, 0
      %p221 = por %p219, %p220
      %p222 = scmp.ne.s32.totalorder %s211, %s214
      %p223 = scmp.eq.s32.totalorder %s22, 1
      %p224 = por %p222, %p223
      %p225 = scmp.ne.s32.totalorder %s214, %s215
      %p226 = scmp.eq.s32.totalorder %s22, 0
      %p227 = por %p225, %p226
      %p228 = scmp.ne.s32.totalorder %s214, %s215
      %p229 = scmp.eq.s32.totalorder %s23, 1
      %p230 = por %p228, %p229
      %p232 = scmp.ne.s32.totalorder %s215, %s231
      %p233 = scmp.eq.s32.totalorder %s23, 0
      %p234 = por %p232, %p233
      %p235 = scmp.le.s32.totalorder 1, %s17
      %p236 = scmp.lt.s32.totalorder %s17, 3
      %p237 = pnand %p235, %p236
      %p238 = pneg %p237
      // Predicated region
      $region9: #{decoder_layer_forward.5} parent=5 // pred_check
        _
      $region10: #{decoder_layer_forward.5} parent=5 // pred_check_branch
        %240 = sbr.rel (%p237) target = $region12
      $region11: #{decoder_layer_forward.5} parent=5 // pred_region
        %s241 = ssub.s32 %s17, 1
        // Predicated region
        $region13: #{decoder_layer_forward.5} parent=11 // pred_check
          %p242 = pneg %p55
        $region14: #{decoder_layer_forward.5} parent=11 // pred_check_branch
          %244 = sbr.rel (%p242) target = $region16
        $region15: #{decoder_layer_forward.5} parent=11 // pred_region
          %s245 = smul.u32 2, %s26
          %p246 = scmp.lt.s32.totalorder %s245, 1
          %s247 = scalar_select %p246, %s245, 1
          %s248 = smul.addr %s247, 2
          %s249 = smul.addr %s248, 4
          %s250 = scalar_lea.vmem %s0, %s249
          %s251 = smul.u32 2, %s26
        $region16: #{decoder_layer_forward.5} parent=11 // pred_fallthru
          _
        // Predicated region
        $region17: #{decoder_layer_forward.5} parent=11 // pred_check
          %p252 = pneg %p81
        $region18: #{decoder_layer_forward.5} parent=11 // pred_check_branch
          %254 = sbr.rel (%p252) target = $region20
        $region19: #{decoder_layer_forward.5} parent=11 // pred_region
          %s255 = smul.u32 2, %s26
          %p256 = scmp.lt.s32.totalorder %s255, 1
          %s257 = scalar_select %p256, %s255, 1
          %s258 = smul.addr %s257, 2
          %s259 = smul.addr %s258, 4
          %s260 = scalar_lea.vmem %s1, %s259
          %s261 = smul.u32 2, %s26
        $region20: #{decoder_layer_forward.5} parent=11 // pred_fallthru
          _
        // Predicated region
        $region21: #{decoder_layer_forward.5} parent=11 // pred_check
          %p262 = pneg %p102
        $region22: #{decoder_layer_forward.5} parent=11 // pred_check_branch
          %264 = sbr.rel (%p262) target = $region24
        $region23: #{decoder_layer_forward.5} parent=11 // pred_region
          _
        $region24: #{decoder_layer_forward.5} parent=11 // pred_fallthru
          _
        // Predicated region
        $region25: #{decoder_layer_forward.5} parent=11 // pred_check
          %p265 = pneg %p123
        $region26: #{decoder_layer_forward.5} parent=11 // pred_check_branch
          %267 = sbr.rel (%p265) target = $region28
        $region27: #{decoder_layer_forward.5} parent=11 // pred_region
          _
        $region28: #{decoder_layer_forward.5} parent=11 // pred_fallthru
          _
      $region12: #{decoder_layer_forward.5} parent=5 // pred_fallthru
        _
      %p268 = scmp.lt.s32.totalorder %s17, 2
      // Predicated region
      $region29: #{decoder_layer_forward.5} parent=5 // pred_check
        %p269 = pneg %p268
      $region30: #{decoder_layer_forward.5} parent=5 // pred_check_branch
        %271 = sbr.rel (%p269) target = $region32
      $region31: #{decoder_layer_forward.5} parent=5 // pred_region
        // Predicated region
        $region33: #{decoder_layer_forward.5} parent=31 // pred_check
          %p272 = pneg %p143
        $region34: #{decoder_layer_forward.5} parent=31 // pred_check_branch
          %274 = sbr.rel (%p272) target = $region36
        $region35: #{decoder_layer_forward.5} parent=31 // pred_region
          %s275 = sand.u32 %s133, 1
          %s276 = sand.u32 %s133, 1
          %s277 = smul.addr %s276, 256
          %s278 = scalar_lea.vmem [#allocation5], %s277
          %s279 = smul.u32 2, %s25
          %s280 = smul.addr %s279, 4
          %s281 = scalar_lea.vmem %s4, %s280
          // Predicated region
          $region37: #{decoder_layer_forward.5} parent=35 // pred_check
            _
          $region38: #{decoder_layer_forward.5} parent=35 // pred_check_branch
            %283 = sbr.rel (0) target = $region40
          $region39: #{decoder_layer_forward.5} parent=35 // pred_region
            // Predicated region
            $region41: #{decoder_layer_forward.5} parent=39 // pred_check
              _
            $region42: #{decoder_layer_forward.5} parent=39 // pred_check_branch
              %285 = sbr.rel (0) target = $region44
            $region43: #{decoder_layer_forward.5} parent=39 // pred_region
              // Predicated region
              $region56: #{decoder_layer_forward.5} parent=43 // pred_check
                _
              $region57: #{decoder_layer_forward.5} parent=43 // pred_check_branch
                %363 = sbr.rel (0) target = $region59
              $region58: #{decoder_layer_forward.5} parent=43 // pred_region
                loop: start=0, step=1, limit=1
                $region60: #{decoder_layer_forward.5} parent=58 // loop_pre_header
                  _
                $region61: #{decoder_layer_forward.5} parent=58 // loop_header
                  %s365 = sphi 0, %s369
                  %p366 = scmp.ge.s32.totalorder %s365, 1
                  %s370 = sphi %s281, %s281
                  %s371 = sphi %s278, %s278
                $region62: #{decoder_layer_forward.5} parent=58 // loop_header_branch
                  %368 = sbr.rel (%p366) target = $region66
                $region63: #{decoder_layer_forward.5} parent=58 // loop_body
                  %v372 = vld [vmem:[%s370] sm:$0xff]
                  %373 = vst [vmem:[%s371] sm:$0xff] %v372
                  %v374 = vld [vmem:[%s370 + $0x10] sm:$0xff]
                  %375 = vst [vmem:[%s371 + $0x8] sm:$0xff] %v374
                  %v376 = vld [vmem:[%s370 + $0x20] sm:$0xff]
                  %377 = vst [vmem:[%s371 + $0x10] sm:$0xff] %v376
                  %v378 = vld [vmem:[%s370 + $0x30] sm:$0xff]
                  %379 = vst [vmem:[%s371 + $0x18] sm:$0xff] %v378
                  %v380 = vld [vmem:[%s370 + $0x40] sm:$0xff]
                  %381 = vst [vmem:[%s371 + $0x20] sm:$0xff] %v380
                  %v382 = vld [vmem:[%s370 + $0x50] sm:$0xff]
                  %383 = vst [vmem:[%s371 + $0x28] sm:$0xff] %v382
                  %v384 = vld [vmem:[%s370 + $0x60] sm:$0xff]
                  %385 = vst [vmem:[%s371 + $0x30] sm:$0xff] %v384
                  %v386 = vld [vmem:[%s370 + $0x70] sm:$0xff]
                  %387 = vst [vmem:[%s371 + $0x38] sm:$0xff] %v386
                  %v388 = vld [vmem:[%s370 + $0x80] sm:$0xff]
                  %389 = vst [vmem:[%s371 + $0x40] sm:$0xff] %v388
                  %v390 = vld [vmem:[%s370 + $0x90] sm:$0xff]
                  %391 = vst [vmem:[%s371 + $0x48] sm:$0xff] %v390
                  %v392 = vld [vmem:[%s370 + $0xa0] sm:$0xff]
                  %393 = vst [vmem:[%s371 + $0x50] sm:$0xff] %v392
                  %v394 = vld [vmem:[%s370 + $0xb0] sm:$0xff]
                  %395 = vst [vmem:[%s371 + $0x58] sm:$0xff] %v394
                  %v396 = vld [vmem:[%s370 + $0xc0] sm:$0xff]
                  %397 = vst [vmem:[%s371 + $0x60] sm:$0xff] %v396
                  %v398 = vld [vmem:[%s370 + $0xd0] sm:$0xff]
                  %399 = vst [vmem:[%s371 + $0x68] sm:$0xff] %v398
                  %v400 = vld [vmem:[%s370 + $0xe0] sm:$0xff]
                  %401 = vst [vmem:[%s371 + $0x70] sm:$0xff] %v400
                  %v402 = vld [vmem:[%s370 + $0xf0] sm:$0xff]
                  %403 = vst [vmem:[%s371 + $0x78] sm:$0xff] %v402
                  %v404 = vld [vmem:[%s370 + $0x100] sm:$0xff]
                  %405 = vst [vmem:[%s371 + $0x80] sm:$0xff] %v404
                  %v406 = vld [vmem:[%s370 + $0x110] sm:$0xff]
                  %407 = vst [vmem:[%s371 + $0x88] sm:$0xff] %v406
                  %v408 = vld [vmem:[%s370 + $0x120] sm:$0xff]
                  %409 = vst [vmem:[%s371 + $0x90] sm:$0xff] %v408
                  %v410 = vld [vmem:[%s370 + $0x130] sm:$0xff]
                  %411 = vst [vmem:[%s371 + $0x98] sm:$0xff] %v410
                  %v412 = vld [vmem:[%s370 + $0x140] sm:$0xff]
                  %413 = vst [vmem:[%s371 + $0xa0] sm:$0xff] %v412
                  %v414 = vld [vmem:[%s370 + $0x150] sm:$0xff]
                  %415 = vst [vmem:[%s371 + $0xa8] sm:$0xff] %v414
                  %v416 = vld [vmem:[%s370 + $0x160] sm:$0xff]
                  %417 = vst [vmem:[%s371 + $0xb0] sm:$0xff] %v416
                  %v418 = vld [vmem:[%s370 + $0x170] sm:$0xff]
                  %419 = vst [vmem:[%s371 + $0xb8] sm:$0xff] %v418
                  %v420 = vld [vmem:[%s370 + $0x180] sm:$0xff]
                  %421 = vst [vmem:[%s371 + $0xc0] sm:$0xff] %v420
                  %v422 = vld [vmem:[%s370 + $0x190] sm:$0xff]
                  %423 = vst [vmem:[%s371 + $0xc8] sm:$0xff] %v422
                  %v424 = vld [vmem:[%s370 + $0x1a0] sm:$0xff]
                  %425 = vst [vmem:[%s371 + $0xd0] sm:$0xff] %v424
                  %v426 = vld [vmem:[%s370 + $0x1b0] sm:$0xff]
                  %427 = vst [vmem:[%s371 + $0xd8] sm:$0xff] %v426
                  %v428 = vld [vmem:[%s370 + $0x1c0] sm:$0xff]
                  %429 = vst [vmem:[%s371 + $0xe0] sm:$0xff] %v428
                  %v430 = vld [vmem:[%s370 + $0x1d0] sm:$0xff]
                  %431 = vst [vmem:[%s371 + $0xe8] sm:$0xff] %v430
                  %v432 = vld [vmem:[%s370 + $0x1e0] sm:$0xff]
                  %433 = vst [vmem:[%s371 + $0xf0] sm:$0xff] %v432
                  %v434 = vld [vmem:[%s370 + $0x1f0] sm:$0xff]
                  %435 = vst [vmem:[%s371 + $0xf8] sm:$0xff] %v434
                $region64: #{decoder_layer_forward.5} parent=58 // loop_footer
                  %s369 = sadd.s32 1, %s365
                $region65: #{decoder_layer_forward.5} parent=58 // loop_footer_branch
                  %364 = sbr.rel target = $region61
                $region66: #{decoder_layer_forward.5} parent=58 // loop_exit
                  _
              $region59: #{decoder_layer_forward.5} parent=43 // pred_fallthru
                _
              // Predicated region
              $region67: #{decoder_layer_forward.5} parent=43 // pred_check
                _
              $region68: #{decoder_layer_forward.5} parent=43 // pred_check_branch
                %437 = sbr.rel target = $region70
              $region69: #{decoder_layer_forward.5} parent=43 // pred_region
                _
              $region70: #{decoder_layer_forward.5} parent=43 // pred_fallthru
                _
            $region44: #{decoder_layer_forward.5} parent=39 // pred_fallthru
              _
            // Predicated region
            $region45: #{decoder_layer_forward.5} parent=39 // pred_check
              _
            $region46: #{decoder_layer_forward.5} parent=39 // pred_check_branch
              %287 = sbr.rel target = $region48
            $region47: #{decoder_layer_forward.5} parent=39 // pred_region
              %s289 = ssub.s32 256, 1
              loop: start=0, step=1, limit=1
              $region49: #{decoder_layer_forward.5} parent=47 // loop_pre_header
                _
              $region50: #{decoder_layer_forward.5} parent=47 // loop_header
                %s291 = sphi 0, %s295
                %p292 = scmp.ge.s32.totalorder %s291, 1
                %s296 = sphi %s281, %s281
                %s297 = sphi %s278, %s278
              $region51: #{decoder_layer_forward.5} parent=47 // loop_header_branch
                %294 = sbr.rel (%p292) target = $region55
              $region52: #{decoder_layer_forward.5} parent=47 // loop_body
                %v298 = vld [vmem:[%s296] sm:%s289]
                %299 = vst [vmem:[%s297] sm:%s289] %v298
                %v300 = vld [vmem:[%s296 + $0x10] sm:%s289]
                %301 = vst [vmem:[%s297 + $0x8] sm:%s289] %v300
                %v302 = vld [vmem:[%s296 + $0x20] sm:%s289]
                %303 = vst [vmem:[%s297 + $0x10] sm:%s289] %v302
                %v304 = vld [vmem:[%s296 + $0x30] sm:%s289]
                %305 = vst [vmem:[%s297 + $0x18] sm:%s289] %v304
                %v306 = vld [vmem:[%s296 + $0x40] sm:%s289]
                %307 = vst [vmem:[%s297 + $0x20] sm:%s289] %v306
                %v308 = vld [vmem:[%s296 + $0x50] sm:%s289]
                %309 = vst [vmem:[%s297 + $0x28] sm:%s289] %v308
                %v310 = vld [vmem:[%s296 + $0x60] sm:%s289]
                %311 = vst [vmem:[%s297 + $0x30] sm:%s289] %v310
                %v312 = vld [vmem:[%s296 + $0x70] sm:%s289]
                %313 = vst [vmem:[%s297 + $0x38] sm:%s289] %v312
                %v314 = vld [vmem:[%s296 + $0x80] sm:%s289]
                %315 = vst [vmem:[%s297 + $0x40] sm:%s289] %v314
                %v316 = vld [vmem:[%s296 + $0x90] sm:%s289]
                %317 = vst [vmem:[%s297 + $0x48] sm:%s289] %v316
                %v318 = vld [vmem:[%s296 + $0xa0] sm:%s289]
                %319 = vst [vmem:[%s297 + $0x50] sm:%s289] %v318
                %v320 = vld [vmem:[%s296 + $0xb0] sm:%s289]
                %321 = vst [vmem:[%s297 + $0x58] sm:%s289] %v320
                %v322 = vld [vmem:[%s296 + $0xc0] sm:%s289]
                %323 = vst [vmem:[%s297 + $0x60] sm:%s289] %v322
                %v324 = vld [vmem:[%s296 + $0xd0] sm:%s289]
                %325 = vst [vmem:[%s297 + $0x68] sm:%s289] %v324
                %v326 = vld [vmem:[%s296 + $0xe0] sm:%s289]
                %327 = vst [vmem:[%s297 + $0x70] sm:%s289] %v326
                %v328 = vld [vmem:[%s296 + $0xf0] sm:%s289]
                %329 = vst [vmem:[%s297 + $0x78] sm:%s289] %v328
                %v330 = vld [vmem:[%s296 + $0x100] sm:%s289]
                %331 = vst [vmem:[%s297 + $0x80] sm:%s289] %v330
                %v332 = vld [vmem:[%s296 + $0x110] sm:%s289]
                %333 = vst [vmem:[%s297 + $0x88] sm:%s289] %v332
                %v334 = vld [vmem:[%s296 + $0x120] sm:%s289]
                %335 = vst [vmem:[%s297 + $0x90] sm:%s289] %v334
                %v336 = vld [vmem:[%s296 + $0x130] sm:%s289]
                %337 = vst [vmem:[%s297 + $0x98] sm:%s289] %v336
                %v338 = vld [vmem:[%s296 + $0x140] sm:%s289]
                %339 = vst [vmem:[%s297 + $0xa0] sm:%s289] %v338
                %v340 = vld [vmem:[%s296 + $0x150] sm:%s289]
                %341 = vst [vmem:[%s297 + $0xa8] sm:%s289] %v340
                %v342 = vld [vmem:[%s296 + $0x160] sm:%s289]
                %343 = vst [vmem:[%s297 + $0xb0] sm:%s289] %v342
                %v344 = vld [vmem:[%s296 + $0x170] sm:%s289]
                %345 = vst [vmem:[%s297 + $0xb8] sm:%s289] %v344
                %v346 = vld [vmem:[%s296 + $0x180] sm:%s289]
                %347 = vst [vmem:[%s297 + $0xc0] sm:%s289] %v346
                %v348 = vld [vmem:[%s296 + $0x190] sm:%s289]
                %349 = vst [vmem:[%s297 + $0xc8] sm:%s289] %v348
                %v350 = vld [vmem:[%s296 + $0x1a0] sm:%s289]
                %351 = vst [vmem:[%s297 + $0xd0] sm:%s289] %v350
                %v352 = vld [vmem:[%s296 + $0x1b0] sm:%s289]
                %353 = vst [vmem:[%s297 + $0xd8] sm:%s289] %v352
                %v354 = vld [vmem:[%s296 + $0x1c0] sm:%s289]
                %355 = vst [vmem:[%s297 + $0xe0] sm:%s289] %v354
                %v356 = vld [vmem:[%s296 + $0x1d0] sm:%s289]
                %357 = vst [vmem:[%s297 + $0xe8] sm:%s289] %v356
                %v358 = vld [vmem:[%s296 + $0x1e0] sm:%s289]
                %359 = vst [vmem:[%s297 + $0xf0] sm:%s289] %v358
                %v360 = vld [vmem:[%s296 + $0x1f0] sm:%s289]
                %361 = vst [vmem:[%s297 + $0xf8] sm:%s289] %v360
              $region53: #{decoder_layer_forward.5} parent=47 // loop_footer
                %s295 = sadd.s32 1, %s291
              $region54: #{decoder_layer_forward.5} parent=47 // loop_footer_branch
                %290 = sbr.rel target = $region50
              $region55: #{decoder_layer_forward.5} parent=47 // loop_exit
                _
            $region48: #{decoder_layer_forward.5} parent=39 // pred_fallthru
              _
          $region40: #{decoder_layer_forward.5} parent=35 // pred_fallthru
            _
          %438 = vnop
        $region36: #{decoder_layer_forward.5} parent=31 // pred_fallthru
          _
        // Predicated region
        $region71: #{decoder_layer_forward.5} parent=31 // pred_check
          %p439 = pneg %p169
        $region72: #{decoder_layer_forward.5} parent=31 // pred_check_branch
          %441 = sbr.rel (%p439) target = $region74
        $region73: #{decoder_layer_forward.5} parent=31 // pred_region
          %s442 = sand.u32 %s159, 1
          %s443 = sand.u32 %s159, 1
          %s444 = smul.addr %s443, 256
          %s445 = scalar_lea.vmem [#allocation6], %s444
          %s446 = smul.u32 2, %s25
          %s447 = smul.addr %s446, 4
          %s448 = scalar_lea.vmem %s5, %s447
          // Predicated region
          $region75: #{decoder_layer_forward.5} parent=73 // pred_check
            _
          $region76: #{decoder_layer_forward.5} parent=73 // pred_check_branch
            %450 = sbr.rel (0) target = $region78
          $region77: #{decoder_layer_forward.5} parent=73 // pred_region
            // Predicated region
            $region79: #{decoder_layer_forward.5} parent=77 // pred_check
              _
            $region80: #{decoder_layer_forward.5} parent=77 // pred_check_branch
              %452 = sbr.rel (0) target = $region82
            $region81: #{decoder_layer_forward.5} parent=77 // pred_region
              // Predicated region
              $region94: #{decoder_layer_forward.5} parent=81 // pred_check
                _
              $region95: #{decoder_layer_forward.5} parent=81 // pred_check_branch
                %530 = sbr.rel (0) target = $region97
              $region96: #{decoder_layer_forward.5} parent=81 // pred_region
                loop: start=0, step=1, limit=1
                $region98: #{decoder_layer_forward.5} parent=96 // loop_pre_header
                  _
                $region99: #{decoder_layer_forward.5} parent=96 // loop_header
                  %s532 = sphi 0, %s536
                  %p533 = scmp.ge.s32.totalorder %s532, 1
                  %s537 = sphi %s448, %s448
                  %s538 = sphi %s445, %s445
                $region100: #{decoder_layer_forward.5} parent=96 // loop_header_branch
                  %535 = sbr.rel (%p533) target = $region104
                $region101: #{decoder_layer_forward.5} parent=96 // loop_body
                  %v539 = vld [vmem:[%s537] sm:$0xff]
                  %540 = vst [vmem:[%s538] sm:$0xff] %v539
                  %v541 = vld [vmem:[%s537 + $0x10] sm:$0xff]
                  %542 = vst [vmem:[%s538 + $0x8] sm:$0xff] %v541
                  %v543 = vld [vmem:[%s537 + $0x20] sm:$0xff]
                  %544 = vst [vmem:[%s538 + $0x10] sm:$0xff] %v543
                  %v545 = vld [vmem:[%s537 + $0x30] sm:$0xff]
                  %546 = vst [vmem:[%s538 + $0x18] sm:$0xff] %v545
                  %v547 = vld [vmem:[%s537 + $0x40] sm:$0xff]
                  %548 = vst [vmem:[%s538 + $0x20] sm:$0xff] %v547
                  %v549 = vld [vmem:[%s537 + $0x50] sm:$0xff]
                  %550 = vst [vmem:[%s538 + $0x28] sm:$0xff] %v549
                  %v551 = vld [vmem:[%s537 + $0x60] sm:$0xff]
                  %552 = vst [vmem:[%s538 + $0x30] sm:$0xff] %v551
                  %v553 = vld [vmem:[%s537 + $0x70] sm:$0xff]
                  %554 = vst [vmem:[%s538 + $0x38] sm:$0xff] %v553
                  %v555 = vld [vmem:[%s537 + $0x80] sm:$0xff]
                  %556 = vst [vmem:[%s538 + $0x40] sm:$0xff] %v555
                  %v557 = vld [vmem:[%s537 + $0x90] sm:$0xff]
                  %558 = vst [vmem:[%s538 + $0x48] sm:$0xff] %v557
                  %v559 = vld [vmem:[%s537 + $0xa0] sm:$0xff]
                  %560 = vst [vmem:[%s538 + $0x50] sm:$0xff] %v559
                  %v561 = vld [vmem:[%s537 + $0xb0] sm:$0xff]
                  %562 = vst [vmem:[%s538 + $0x58] sm:$0xff] %v561
                  %v563 = vld [vmem:[%s537 + $0xc0] sm:$0xff]
                  %564 = vst [vmem:[%s538 + $0x60] sm:$0xff] %v563
                  %v565 = vld [vmem:[%s537 + $0xd0] sm:$0xff]
                  %566 = vst [vmem:[%s538 + $0x68] sm:$0xff] %v565
                  %v567 = vld [vmem:[%s537 + $0xe0] sm:$0xff]
                  %568 = vst [vmem:[%s538 + $0x70] sm:$0xff] %v567
                  %v569 = vld [vmem:[%s537 + $0xf0] sm:$0xff]
                  %570 = vst [vmem:[%s538 + $0x78] sm:$0xff] %v569
                  %v571 = vld [vmem:[%s537 + $0x100] sm:$0xff]
                  %572 = vst [vmem:[%s538 + $0x80] sm:$0xff] %v571
                  %v573 = vld [vmem:[%s537 + $0x110] sm:$0xff]
                  %574 = vst [vmem:[%s538 + $0x88] sm:$0xff] %v573
                  %v575 = vld [vmem:[%s537 + $0x120] sm:$0xff]
                  %576 = vst [vmem:[%s538 + $0x90] sm:$0xff] %v575
                  %v577 = vld [vmem:[%s537 + $0x130] sm:$0xff]
                  %578 = vst [vmem:[%s538 + $0x98] sm:$0xff] %v577
                  %v579 = vld [vmem:[%s537 + $0x140] sm:$0xff]
                  %580 = vst [vmem:[%s538 + $0xa0] sm:$0xff] %v579
                  %v581 = vld [vmem:[%s537 + $0x150] sm:$0xff]
                  %582 = vst [vmem:[%s538 + $0xa8] sm:$0xff] %v581
                  %v583 = vld [vmem:[%s537 + $0x160] sm:$0xff]
                  %584 = vst [vmem:[%s538 + $0xb0] sm:$0xff] %v583
                  %v585 = vld [vmem:[%s537 + $0x170] sm:$0xff]
                  %586 = vst [vmem:[%s538 + $0xb8] sm:$0xff] %v585
                  %v587 = vld [vmem:[%s537 + $0x180] sm:$0xff]
                  %588 = vst [vmem:[%s538 + $0xc0] sm:$0xff] %v587
                  %v589 = vld [vmem:[%s537 + $0x190] sm:$0xff]
                  %590 = vst [vmem:[%s538 + $0xc8] sm:$0xff] %v589
                  %v591 = vld [vmem:[%s537 + $0x1a0] sm:$0xff]
                  %592 = vst [vmem:[%s538 + $0xd0] sm:$0xff] %v591
                  %v593 = vld [vmem:[%s537 + $0x1b0] sm:$0xff]
                  %594 = vst [vmem:[%s538 + $0xd8] sm:$0xff] %v593
                  %v595 = vld [vmem:[%s537 + $0x1c0] sm:$0xff]
                  %596 = vst [vmem:[%s538 + $0xe0] sm:$0xff] %v595
                  %v597 = vld [vmem:[%s537 + $0x1d0] sm:$0xff]
                  %598 = vst [vmem:[%s538 + $0xe8] sm:$0xff] %v597
                  %v599 = vld [vmem:[%s537 + $0x1e0] sm:$0xff]
                  %600 = vst [vmem:[%s538 + $0xf0] sm:$0xff] %v599
                  %v601 = vld [vmem:[%s537 + $0x1f0] sm:$0xff]
                  %602 = vst [vmem:[%s538 + $0xf8] sm:$0xff] %v601
                $region102: #{decoder_layer_forward.5} parent=96 // loop_footer
                  %s536 = sadd.s32 1, %s532
                $region103: #{decoder_layer_forward.5} parent=96 // loop_footer_branch
                  %531 = sbr.rel target = $region99
                $region104: #{decoder_layer_forward.5} parent=96 // loop_exit
                  _
              $region97: #{decoder_layer_forward.5} parent=81 // pred_fallthru
                _
              // Predicated region
              $region105: #{decoder_layer_forward.5} parent=81 // pred_check
                _
              $region106: #{decoder_layer_forward.5} parent=81 // pred_check_branch
                %604 = sbr.rel target = $region108
              $region107: #{decoder_layer_forward.5} parent=81 // pred_region
                _
              $region108: #{decoder_layer_forward.5} parent=81 // pred_fallthru
                _
            $region82: #{decoder_layer_forward.5} parent=77 // pred_fallthru
              _
            // Predicated region
            $region83: #{decoder_layer_forward.5} parent=77 // pred_check
              _
            $region84: #{decoder_layer_forward.5} parent=77 // pred_check_branch
              %454 = sbr.rel target = $region86
            $region85: #{decoder_layer_forward.5} parent=77 // pred_region
              %s456 = ssub.s32 256, 1
              loop: start=0, step=1, limit=1
              $region87: #{decoder_layer_forward.5} parent=85 // loop_pre_header
                _
              $region88: #{decoder_layer_forward.5} parent=85 // loop_header
                %s458 = sphi 0, %s462
                %p459 = scmp.ge.s32.totalorder %s458, 1
                %s463 = sphi %s448, %s448
                %s464 = sphi %s445, %s445
              $region89: #{decoder_layer_forward.5} parent=85 // loop_header_branch
                %461 = sbr.rel (%p459) target = $region93
              $region90: #{decoder_layer_forward.5} parent=85 // loop_body
                %v465 = vld [vmem:[%s463] sm:%s456]
                %466 = vst [vmem:[%s464] sm:%s456] %v465
                %v467 = vld [vmem:[%s463 + $0x10] sm:%s456]
                %468 = vst [vmem:[%s464 + $0x8] sm:%s456] %v467
                %v469 = vld [vmem:[%s463 + $0x20] sm:%s456]
                %470 = vst [vmem:[%s464 + $0x10] sm:%s456] %v469
                %v471 = vld [vmem:[%s463 + $0x30] sm:%s456]
                %472 = vst [vmem:[%s464 + $0x18] sm:%s456] %v471
                %v473 = vld [vmem:[%s463 + $0x40] sm:%s456]
                %474 = vst [vmem:[%s464 + $0x20] sm:%s456] %v473
                %v475 = vld [vmem:[%s463 + $0x50] sm:%s456]
                %476 = vst [vmem:[%s464 + $0x28] sm:%s456] %v475
                %v477 = vld [vmem:[%s463 + $0x60] sm:%s456]
                %478 = vst [vmem:[%s464 + $0x30] sm:%s456] %v477
                %v479 = vld [vmem:[%s463 + $0x70] sm:%s456]
                %480 = vst [vmem:[%s464 + $0x38] sm:%s456] %v479
                %v481 = vld [vmem:[%s463 + $0x80] sm:%s456]
                %482 = vst [vmem:[%s464 + $0x40] sm:%s456] %v481
                %v483 = vld [vmem:[%s463 + $0x90] sm:%s456]
                %484 = vst [vmem:[%s464 + $0x48] sm:%s456] %v483
                %v485 = vld [vmem:[%s463 + $0xa0] sm:%s456]
                %486 = vst [vmem:[%s464 + $0x50] sm:%s456] %v485
                %v487 = vld [vmem:[%s463 + $0xb0] sm:%s456]
                %488 = vst [vmem:[%s464 + $0x58] sm:%s456] %v487
                %v489 = vld [vmem:[%s463 + $0xc0] sm:%s456]
                %490 = vst [vmem:[%s464 + $0x60] sm:%s456] %v489
                %v491 = vld [vmem:[%s463 + $0xd0] sm:%s456]
                %492 = vst [vmem:[%s464 + $0x68] sm:%s456] %v491
                %v493 = vld [vmem:[%s463 + $0xe0] sm:%s456]
                %494 = vst [vmem:[%s464 + $0x70] sm:%s456] %v493
                %v495 = vld [vmem:[%s463 + $0xf0] sm:%s456]
                %496 = vst [vmem:[%s464 + $0x78] sm:%s456] %v495
                %v497 = vld [vmem:[%s463 + $0x100] sm:%s456]
                %498 = vst [vmem:[%s464 + $0x80] sm:%s456] %v497
                %v499 = vld [vmem:[%s463 + $0x110] sm:%s456]
                %500 = vst [vmem:[%s464 + $0x88] sm:%s456] %v499
                %v501 = vld [vmem:[%s463 + $0x120] sm:%s456]
                %502 = vst [vmem:[%s464 + $0x90] sm:%s456] %v501
                %v503 = vld [vmem:[%s463 + $0x130] sm:%s456]
                %504 = vst [vmem:[%s464 + $0x98] sm:%s456] %v503
                %v505 = vld [vmem:[%s463 + $0x140] sm:%s456]
                %506 = vst [vmem:[%s464 + $0xa0] sm:%s456] %v505
                %v507 = vld [vmem:[%s463 + $0x150] sm:%s456]
                %508 = vst [vmem:[%s464 + $0xa8] sm:%s456] %v507
                %v509 = vld [vmem:[%s463 + $0x160] sm:%s456]
                %510 = vst [vmem:[%s464 + $0xb0] sm:%s456] %v509
                %v511 = vld [vmem:[%s463 + $0x170] sm:%s456]
                %512 = vst [vmem:[%s464 + $0xb8] sm:%s456] %v511
                %v513 = vld [vmem:[%s463 + $0x180] sm:%s456]
                %514 = vst [vmem:[%s464 + $0xc0] sm:%s456] %v513
                %v515 = vld [vmem:[%s463 + $0x190] sm:%s456]
                %516 = vst [vmem:[%s464 + $0xc8] sm:%s456] %v515
                %v517 = vld [vmem:[%s463 + $0x1a0] sm:%s456]
                %518 = vst [vmem:[%s464 + $0xd0] sm:%s456] %v517
                %v519 = vld [vmem:[%s463 + $0x1b0] sm:%s456]
                %520 = vst [vmem:[%s464 + $0xd8] sm:%s456] %v519
                %v521 = vld [vmem:[%s463 + $0x1c0] sm:%s456]
                %522 = vst [vmem:[%s464 + $0xe0] sm:%s456] %v521
                %v523 = vld [vmem:[%s463 + $0x1d0] sm:%s456]
                %524 = vst [vmem:[%s464 + $0xe8] sm:%s456] %v523
                %v525 = vld [vmem:[%s463 + $0x1e0] sm:%s456]
                %526 = vst [vmem:[%s464 + $0xf0] sm:%s456] %v525
                %v527 = vld [vmem:[%s463 + $0x1f0] sm:%s456]
                %528 = vst [vmem:[%s464 + $0xf8] sm:%s456] %v527
              $region91: #{decoder_layer_forward.5} parent=85 // loop_footer
                %s462 = sadd.s32 1, %s458
              $region92: #{decoder_layer_forward.5} parent=85 // loop_footer_branch
                %457 = sbr.rel target = $region88
              $region93: #{decoder_layer_forward.5} parent=85 // loop_exit
                _
            $region86: #{decoder_layer_forward.5} parent=77 // pred_fallthru
              _
          $region78: #{decoder_layer_forward.5} parent=73 // pred_fallthru
            _
          %605 = vnop
        $region74: #{decoder_layer_forward.5} parent=31 // pred_fallthru
          _
        // Predicated region
        $region109: #{decoder_layer_forward.5} parent=31 // pred_check
          %p606 = pneg %p195
        $region110: #{decoder_layer_forward.5} parent=31 // pred_check_branch
          %608 = sbr.rel (%p606) target = $region112
        $region111: #{decoder_layer_forward.5} parent=31 // pred_region
          %s609 = sand.u32 %s185, 1
          %s610 = scalar_lea.sflag [#allocation8], %s609
          %s611 = sand.u32 %s185, 1
          %s612 = smul.addr %s611, 256
          %s613 = scalar_lea.vmem [#allocation7], %s612
          %s614 = smul.u32 32, %s25
          %s616 = ssub.s32 4096, 4096
          %617 = vsyncadd %s610, %s616
          %s618 = smul.addr %s614, 2
          %s619 = smul.addr %s618, 64
          %s620 = scalar_lea.hbm %s6, %s619
          %s621 = sshll.u32 %s613, 4
          %s622 = int_to_ptr.vmem [resolvable:$true] %s621
          %627 = dma.hbm_to_vmem [thread:$0]  %s620, 4096, %s622, %s610, 128, 128, 8
        $region112: #{decoder_layer_forward.5} parent=31 // pred_fallthru
          _
      $region32: #{decoder_layer_forward.5} parent=5 // pred_fallthru
        _
      %p628 = scmp.le.s32.totalorder 1, %s17
      %p629 = scmp.lt.s32.totalorder %s17, 3
      %p630 = pnand %p628, %p629
      %p631 = pneg %p630
      // Predicated region
      $region113: #{decoder_layer_forward.5} parent=5 // pred_check
        _
      $region114: #{decoder_layer_forward.5} parent=5 // pred_check_branch
        %633 = sbr.rel (%p630) target = $region116
      $region115: #{decoder_layer_forward.5} parent=5 // pred_region
        %s634 = ssub.s32 %s17, 1
        %s635 = sand.u32 %s136, 1
        %s636 = sand.u32 %s136, 1
        %s637 = smul.addr %s636, 256
        %s638 = scalar_lea.vmem [#allocation5], %s637
        // Predicated region
        $region117: #{decoder_layer_forward.5} parent=115 // pred_check
          %p639 = pneg %p149
        $region118: #{decoder_layer_forward.5} parent=115 // pred_check_branch
          %641 = sbr.rel (%p639) target = $region120
        $region119: #{decoder_layer_forward.5} parent=115 // pred_region
          _
        $region120: #{decoder_layer_forward.5} parent=115 // pred_fallthru
          _
        %s642 = sand.u32 %s162, 1
        %s643 = sand.u32 %s162, 1
        %s644 = smul.addr %s643, 256
        %s645 = scalar_lea.vmem [#allocation6], %s644
        // Predicated region
        $region121: #{decoder_layer_forward.5} parent=115 // pred_check
          %p646 = pneg %p175
        $region122: #{decoder_layer_forward.5} parent=115 // pred_check_branch
          %648 = sbr.rel (%p646) target = $region124
        $region123: #{decoder_layer_forward.5} parent=115 // pred_region
          _
        $region124: #{decoder_layer_forward.5} parent=115 // pred_fallthru
          _
        %s649 = sand.u32 %s188, 1
        %s650 = scalar_lea.sflag [#allocation8], %s649
        %s651 = sand.u32 %s188, 1
        %s652 = smul.addr %s651, 256
        %s653 = scalar_lea.vmem [#allocation7], %s652
        // Predicated region
        $region125: #{decoder_layer_forward.5} parent=115 // pred_check
          %p654 = pneg %p201
        $region126: #{decoder_layer_forward.5} parent=115 // pred_check_branch
          %656 = sbr.rel (%p654) target = $region128
        $region127: #{decoder_layer_forward.5} parent=115 // pred_region
          %657 = dma.done %s650, 4096
        $region128: #{decoder_layer_forward.5} parent=115 // pred_fallthru
          _
        %s658 = smul.u32 2, %s26
        %p659 = scmp.lt.s32.totalorder %s658, 1
        %s660 = scalar_select %p659, %s658, 1
        %s661 = smul.addr %s660, 2
        %s662 = smul.addr %s661, 4
        %s663 = scalar_lea.vmem %s0, %s662
        %p664 = pneg %p55
        %p665 = pneg %p52
        %s666 = smul.u32 2, %s26
        %p667 = scmp.lt.s32.totalorder %s666, 1
        %s668 = scalar_select %p667, %s666, 1
        %s669 = smul.addr %s668, 2
        %s670 = smul.addr %s669, 4
        %s671 = scalar_lea.vmem %s1, %s670
        %p672 = pneg %p81
        %p673 = pneg %p78
        %p674 = pneg %p102
        %p675 = pneg %p99
        %p676 = pneg %p123
        %p677 = pneg %p120
        %s678 = sand.u32 %s136, 1
        %s679 = sand.u32 %s136, 1
        %s680 = smul.addr %s679, 256
        %s681 = scalar_lea.vmem [#allocation5], %s680
        %p682 = pneg %p149
        %p683 = pneg %p146
        %s684 = sand.u32 %s162, 1
        %s685 = sand.u32 %s162, 1
        %s686 = smul.addr %s685, 256
        %s687 = scalar_lea.vmem [#allocation6], %s686
        %p688 = pneg %p175
        %p689 = pneg %p172
        %s690 = sand.u32 %s188, 1
        %s691 = scalar_lea.sflag [#allocation8], %s690
        %s692 = sand.u32 %s188, 1
        %s693 = smul.addr %s692, 256
        %s694 = scalar_lea.vmem [#allocation7], %s693
        %p695 = pneg %p201
        %p696 = pneg %p198
        %p697 = pneg %p227
        %p698 = pneg %p224
        %s699 = smul.u32 2, %s26
        %p700 = scmp.lt.s32.totalorder %s699, 1
        %s701 = scalar_select %p700, %s699, 1
        %s702 = smul.addr %s701, 2
        %s703 = smul.addr %s702, 4
        %s704 = scalar_lea.vmem %s0, %s703
        %s705 = smul.u32 2, %s26
        %s706 = smul.u32 2, %s26
        %p707 = scmp.lt.s32.totalorder %s706, 1
        %s708 = scalar_select %p707, %s706, 1
        %s709 = smul.addr %s708, 2
        %s710 = smul.addr %s709, 4
        %s711 = scalar_lea.vmem %s1, %s710
        %s712 = smul.u32 2, %s26
        %s713 = smul.u32 2, %s27
        %s714 = smul.u32 2, %s27
        %s715 = smul.u32 32, %s27
        %s716 = smul.u32 2, %s26
        %p717 = scmp.eq.s32.totalorder %s27, 0
        // Predicated region
        $region129: #{decoder_layer_forward.5} parent=115 // pred_check
          %p718 = pneg %p717
        $region130: #{decoder_layer_forward.5} parent=115 // pred_check_branch
          %720 = sbr.rel (%p718) target = $region132
        $region131: #{decoder_layer_forward.5} parent=115 // pred_region
          %v721 = vld [vmem:[%s704] sm:$0xff]
          %v722 = vld [vmem:[%s704 + $0x8] sm:$0xff]
          %v723 = vld [vmem:[%s2] sm:$0xff]
          %v724 = vld [vmem:[%s2 + $0x8] sm:$0xff]
          %v725 = vld [vmem:[%s2 + $0x10] sm:$0xff]
          %v726 = vld [vmem:[%s2 + $0x18] sm:$0xff]
          %v727 = vld [vmem:[%s2 + $0x20] sm:$0xff]
          %v728 = vld [vmem:[%s2 + $0x28] sm:$0xff]
          %v729 = vld [vmem:[%s2 + $0x30] sm:$0xff]
          %v730 = vld [vmem:[%s2 + $0x38] sm:$0xff]
          %v731 = vld [vmem:[%s2 + $0x40] sm:$0xff]
          %v732 = vld [vmem:[%s2 + $0x48] sm:$0xff]
          %v733 = vld [vmem:[%s2 + $0x50] sm:$0xff]
          %v734 = vld [vmem:[%s2 + $0x58] sm:$0xff]
          %v735 = vld [vmem:[%s2 + $0x60] sm:$0xff]
          %v736 = vld [vmem:[%s2 + $0x68] sm:$0xff]
          %v737 = vld [vmem:[%s2 + $0x70] sm:$0xff]
          %v738 = vld [vmem:[%s2 + $0x78] sm:$0xff]
          %v739 = vld [vmem:[%s2 + $0x80] sm:$0xff]
          %v740 = vld [vmem:[%s2 + $0x88] sm:$0xff]
          %v741 = vld [vmem:[%s2 + $0x90] sm:$0xff]
          %v742 = vld [vmem:[%s2 + $0x98] sm:$0xff]
          %v743 = vld [vmem:[%s2 + $0xa0] sm:$0xff]
          %v744 = vld [vmem:[%s2 + $0xa8] sm:$0xff]
          %v745 = vld [vmem:[%s2 + $0xb0] sm:$0xff]
          %v746 = vld [vmem:[%s2 + $0xb8] sm:$0xff]
          %v747 = vld [vmem:[%s2 + $0xc0] sm:$0xff]
          %v748 = vld [vmem:[%s2 + $0xc8] sm:$0xff]
          %v749 = vld [vmem:[%s2 + $0xd0] sm:$0xff]
          %v750 = vld [vmem:[%s2 + $0xd8] sm:$0xff]
          %v751 = vld [vmem:[%s2 + $0xe0] sm:$0xff]
          %v752 = vld [vmem:[%s2 + $0xe8] sm:$0xff]
          %v753 = vld [vmem:[%s2 + $0xf0] sm:$0xff]
          %v754 = vld [vmem:[%s2 + $0xf8] sm:$0xff]
          %v757 = vunpack.c.l.b16 %v721
          %v758 = vunpack.c.h.b16 %v721
          %v759 = vunpack.c.l.b16 %v722
          %v760 = vunpack.c.h.b16 %v722
          %v761 = vpack.c.b16 %v759, %v757
          %v762 = vpack.c.b16 %v760, %v758
          %v797 = vunpack.c.l.b16 %v723
          %v798 = vunpack.c.h.b16 %v723
          %v799 = vunpack.c.l.b16 %v724
          %v800 = vunpack.c.h.b16 %v724
          %v801 = vunpack.c.l.b16 %v725
          %v802 = vunpack.c.h.b16 %v725
          %v803 = vunpack.c.l.b16 %v726
          %v804 = vunpack.c.h.b16 %v726
          %v805 = vunpack.c.l.b16 %v727
          %v806 = vunpack.c.h.b16 %v727
          %v807 = vunpack.c.l.b16 %v728
          %v808 = vunpack.c.h.b16 %v728
          %v809 = vunpack.c.l.b16 %v729
          %v810 = vunpack.c.h.b16 %v729
          %v811 = vunpack.c.l.b16 %v730
          %v812 = vunpack.c.h.b16 %v730
          %v813 = vunpack.c.l.b16 %v731
          %v814 = vunpack.c.h.b16 %v731
          %v815 = vunpack.c.l.b16 %v732
          %v816 = vunpack.c.h.b16 %v732
          %v817 = vunpack.c.l.b16 %v733
          %v818 = vunpack.c.h.b16 %v733
          %v819 = vunpack.c.l.b16 %v734
          %v820 = vunpack.c.h.b16 %v734
          %v821 = vunpack.c.l.b16 %v735
          %v822 = vunpack.c.h.b16 %v735
          %v823 = vunpack.c.l.b16 %v736
          %v824 = vunpack.c.h.b16 %v736
          %v825 = vunpack.c.l.b16 %v737
          %v826 = vunpack.c.h.b16 %v737
          %v827 = vunpack.c.l.b16 %v738
          %v828 = vunpack.c.h.b16 %v738
          %v829 = vunpack.c.l.b16 %v739
          %v830 = vunpack.c.h.b16 %v739
          %v831 = vunpack.c.l.b16 %v740
          %v832 = vunpack.c.h.b16 %v740
          %v833 = vunpack.c.l.b16 %v741
          %v834 = vunpack.c.h.b16 %v741
          %v835 = vunpack.c.l.b16 %v742
          %v836 = vunpack.c.h.b16 %v742
          %v837 = vunpack.c.l.b16 %v743
          %v838 = vunpack.c.h.b16 %v743
          %v839 = vunpack.c.l.b16 %v744
          %v840 = vunpack.c.h.b16 %v744
          %v841 = vunpack.c.l.b16 %v745
          %v842 = vunpack.c.h.b16 %v745
          %v843 = vunpack.c.l.b16 %v746
          %v844 = vunpack.c.h.b16 %v746
          %v845 = vunpack.c.l.b16 %v747
          %v846 = vunpack.c.h.b16 %v747
          %v847 = vunpack.c.l.b16 %v748
          %v848 = vunpack.c.h.b16 %v748
          %v849 = vunpack.c.l.b16 %v749
          %v850 = vunpack.c.h.b16 %v749
          %v851 = vunpack.c.l.b16 %v750
          %v852 = vunpack.c.h.b16 %v750
          %v853 = vunpack.c.l.b16 %v751
          %v854 = vunpack.c.h.b16 %v751
          %v855 = vunpack.c.l.b16 %v752
          %v856 = vunpack.c.h.b16 %v752
          %v857 = vunpack.c.l.b16 %v753
          %v858 = vunpack.c.h.b16 %v753
          %v859 = vunpack.c.l.b16 %v754
          %v860 = vunpack.c.h.b16 %v754
          %v861 = vpack.c.b16 %v799, %v797
          %v862 = vpack.c.b16 %v800, %v798
          %v863 = vpack.c.b16 %v803, %v801
          %v864 = vpack.c.b16 %v804, %v802
          %v865 = vpack.c.b16 %v807, %v805
          %v866 = vpack.c.b16 %v808, %v806
          %v867 = vpack.c.b16 %v811, %v809
          %v868 = vpack.c.b16 %v812, %v810
          %v869 = vpack.c.b16 %v815, %v813
          %v870 = vpack.c.b16 %v816, %v814
          %v871 = vpack.c.b16 %v819, %v817
          %v872 = vpack.c.b16 %v820, %v818
          %v873 = vpack.c.b16 %v823, %v821
          %v874 = vpack.c.b16 %v824, %v822
          %v875 = vpack.c.b16 %v827, %v825
          %v876 = vpack.c.b16 %v828, %v826
          %v877 = vpack.c.b16 %v831, %v829
          %v878 = vpack.c.b16 %v832, %v830
          %v879 = vpack.c.b16 %v835, %v833
          %v880 = vpack.c.b16 %v836, %v834
          %v881 = vpack.c.b16 %v839, %v837
          %v882 = vpack.c.b16 %v840, %v838
          %v883 = vpack.c.b16 %v843, %v841
          %v884 = vpack.c.b16 %v844, %v842
          %v885 = vpack.c.b16 %v847, %v845
          %v886 = vpack.c.b16 %v848, %v846
          %v887 = vpack.c.b16 %v851, %v849
          %v888 = vpack.c.b16 %v852, %v850
          %v889 = vpack.c.b16 %v855, %v853
          %v890 = vpack.c.b16 %v856, %v854
          %v891 = vpack.c.b16 %v859, %v857
          %v892 = vpack.c.b16 %v860, %v858
          %925 = vmatprep.subr.bf16.mxu0 %v876
          %926 = vmatpush1.bf16.msra.mxu0 %v875
          %927 = vmatprep.subr.bf16.mxu0 %v874
          %928 = vmatpush1.bf16.msra.mxu0 %v873
          %929 = vmatprep.subr.bf16.mxu0 %v872
          %930 = vmatpush1.bf16.msra.mxu0 %v871
          %931 = vmatprep.subr.bf16.mxu0 %v870
          %932 = vmatpush1.bf16.msra.mxu0 %v869
          %933 = vmatprep.subr.bf16.mxu0 %v868
          %934 = vmatpush1.bf16.msra.mxu0 %v867
          %935 = vmatprep.subr.bf16.mxu0 %v866
          %936 = vmatpush1.bf16.msra.mxu0 %v865
          %937 = vmatprep.subr.bf16.mxu0 %v864
          %938 = vmatpush1.bf16.msra.mxu0 %v863
          %939 = vmatprep.subr.bf16.mxu0 %v862
          %940 = vmatpush1.bf16.msra.mxu0 %v861
          %941 = vmatprep.subr.bf16.mxu0 %v892
          %942 = vmatpush2.bf16.msra.mxu0 %v891
          %943 = vmatprep.subr.bf16.mxu0 %v890
          %944 = vmatpush2.bf16.msra.mxu0 %v889
          %945 = vmatprep.subr.bf16.mxu0 %v888
          %946 = vmatpush2.bf16.msra.mxu0 %v887
          %947 = vmatprep.subr.bf16.mxu0 %v886
          %948 = vmatpush2.bf16.msra.mxu0 %v885
          %949 = vmatprep.subr.bf16.mxu0 %v884
          %950 = vmatpush2.bf16.msra.mxu0 %v883
          %951 = vmatprep.subr.bf16.mxu0 %v882
          %952 = vmatpush2.bf16.msra.mxu0 %v881
          %953 = vmatprep.subr.bf16.mxu0 %v880
          %954 = vmatpush2.bf16.msra.mxu0 %v879
          %955 = vmatprep.subr.bf16.mxu0 %v878
          %956 = vmatpush2.bf16.msra.mxu0 %v877
          %957 = vmatprep.mubr.bf16.mxu0 %v762
          %958 = vmatmul.mubr.bf16.gmra.mxu0 %v761
          %v959 = vpop.f32.mrf.mxu0
          %v960 = vadd.f32 0.0, %v959
          %v961 = vpop.f32.mrf.mxu0
          %v962 = vadd.f32 0.0, %v961
          %v963 = vpop.f32.mrf.mxu0
          %v964 = vadd.f32 0.0, %v963
          %v965 = vpop.f32.mrf.mxu0
          %v966 = vadd.f32 0.0, %v965
          %967 = vdwg.mxu0
          %v968 = vld [vmem:[%s711] sm:$0xff]
          %v969 = vld [vmem:[%s711 + $0x8] sm:$0xff]
          %v970 = vunpack.c.l.bf16 %v968
          %v971 = vunpack.c.h.bf16 %v968
          %v972 = vunpack.c.l.bf16 %v969
          %v973 = vunpack.c.h.bf16 %v969
          %v974 = vadd.f32 %v970, %v960
          %v975 = vadd.f32 %v971, %v962
          %v976 = vadd.f32 %v972, %v964
          %v977 = vadd.f32 %v973, %v966
          %978 = vst [vmem:[#allocation2] sm:$0xff] %v974
          %979 = vst [vmem:[#allocation2 + $0x8] sm:$0xff] %v975
          %980 = vst [vmem:[#allocation2 + $0x10] sm:$0xff] %v976
          %981 = vst [vmem:[#allocation2 + $0x18] sm:$0xff] %v977
          %v982 = vmul.f32 %v974, %v974
          %v983 = vmul.f32 %v975, %v975
          %v984 = vmul.f32 %v976, %v976
          %v985 = vmul.f32 %v977, %v977
          %v986 = vadd.f32 %v982, %v983
          %987 = vadd.xlane.f32.xlu0 %v986
          %v988 = vpop.xlane.xlu0 %987
          %v989 = vadd.f32 %v984, %v985
          %990 = vadd.xlane.f32.xlu0 %v989
          %v991 = vpop.xlane.xlu0 %990
          %v992 = vrcp.pop 256.0
          %v993 = vmul.f32 %v988, %v992
          %v994 = vmul.f32 %v991, %v992
          %v995 = vadd.f32 %v993, 1e-06
          %v996 = vadd.f32 %v994, 1e-06
          %v997 = vrsqrt.pop %v995
          %v998 = vrsqrt.pop %v996
          %v999 = vmul.f32 %v974, %v997
          %v1000 = vmul.f32 %v975, %v997
          %v1001 = vmul.f32 %v976, %v998
          %v1002 = vmul.f32 %v977, %v998
          %v1003 = vld [vmem:[%s3] sm:$0x3]
          %v1004 = vunpack.c.l.bf16 %v1003
          %v1006 = vlaneseq
          %v1007 = vshrl.u32 %v1006, 7
          %v1008 = vsub.s32 0, %v1007
          %v1009 = vrot.slane %v1004, %v1008
          %v1010 = vlaneseq
          %v1011 = vshrl.u32 %v1010, 7
          %v1012 = vsub.s32 2, %v1011
          %v1013 = vrot.slane %v1004, %v1012
          %v1016 = vlaneseq
          %v1017 = vshrl.u32 %v1016, 7
          %v1018 = vsub.s32 0, %v1017
          %v1019 = vrot.slane %v1009, %v1018
          %v1020 = vlaneseq
          %v1021 = vshrl.u32 %v1020, 7
          %v1022 = vsub.s32 0, %v1021
          %v1023 = vrot.slane %v1013, %v1022
          %v1024 = vmul.f32 %v999, %v1019
          %v1025 = vmul.f32 %v1000, %v1023
          %v1026 = vmul.f32 %v1001, %v1019
          %v1027 = vmul.f32 %v1002, %v1023
          %v1028 = vpack.c.bf16 %v1026, %v1024
          %v1029 = vpack.c.bf16 %v1027, %v1025
          %v1032 = vunpack.c.l.b16 %v1028
          %v1033 = vunpack.c.l.b16 %v1029
          %v1034 = vunpack.c.h.b16 %v1028
          %v1035 = vunpack.c.h.b16 %v1029
          %v1036 = vpack.c.b16 %v1033, %v1032
          %v1037 = vpack.c.b16 %v1035, %v1034
          %1040 = vst [vmem:[#allocation3] sm:$0xff] %v1036
          %1041 = vst [vmem:[#allocation3 + $0x8] sm:$0xff] %v1037
          %1042 = vst [vmem:[#allocation4] sm:$0xff] 0.0
          %1043 = vst [vmem:[#allocation4 + $0x8] sm:$0xff] 0.0
          %1044 = vst [vmem:[#allocation4 + $0x10] sm:$0xff] 0.0
          %1045 = vst [vmem:[#allocation4 + $0x18] sm:$0xff] 0.0
        $region132: #{decoder_layer_forward.5} parent=115 // pred_fallthru
          _
        %v1046 = vld [vmem:[#allocation3] sm:$0xff]
        %v1047 = vld [vmem:[#allocation3 + $0x8] sm:$0xff]
        %v1048 = vld [vmem:[%s638] sm:$0xff]
        %v1049 = vld [vmem:[%s638 + $0x8] sm:$0xff]
        %v1050 = vld [vmem:[%s638 + $0x10] sm:$0xff]
        %v1051 = vld [vmem:[%s638 + $0x18] sm:$0xff]
        %v1052 = vld [vmem:[%s638 + $0x20] sm:$0xff]
        %v1053 = vld [vmem:[%s638 + $0x28] sm:$0xff]
        %v1054 = vld [vmem:[%s638 + $0x30] sm:$0xff]
        %v1055 = vld [vmem:[%s638 + $0x38] sm:$0xff]
        %v1056 = vld [vmem:[%s638 + $0x40] sm:$0xff]
        %v1057 = vld [vmem:[%s638 + $0x48] sm:$0xff]
        %v1058 = vld [vmem:[%s638 + $0x50] sm:$0xff]
        %v1059 = vld [vmem:[%s638 + $0x58] sm:$0xff]
        %v1060 = vld [vmem:[%s638 + $0x60] sm:$0xff]
        %v1061 = vld [vmem:[%s638 + $0x68] sm:$0xff]
        %v1062 = vld [vmem:[%s638 + $0x70] sm:$0xff]
        %v1063 = vld [vmem:[%s638 + $0x78] sm:$0xff]
        %v1064 = vld [vmem:[%s638 + $0x80] sm:$0xff]
        %v1065 = vld [vmem:[%s638 + $0x88] sm:$0xff]
        %v1066 = vld [vmem:[%s638 + $0x90] sm:$0xff]
        %v1067 = vld [vmem:[%s638 + $0x98] sm:$0xff]
        %v1068 = vld [vmem:[%s638 + $0xa0] sm:$0xff]
        %v1069 = vld [vmem:[%s638 + $0xa8] sm:$0xff]
        %v1070 = vld [vmem:[%s638 + $0xb0] sm:$0xff]
        %v1071 = vld [vmem:[%s638 + $0xb8] sm:$0xff]
        %v1072 = vld [vmem:[%s638 + $0xc0] sm:$0xff]
        %v1073 = vld [vmem:[%s638 + $0xc8] sm:$0xff]
        %v1074 = vld [vmem:[%s638 + $0xd0] sm:$0xff]
        %v1075 = vld [vmem:[%s638 + $0xd8] sm:$0xff]
        %v1076 = vld [vmem:[%s638 + $0xe0] sm:$0xff]
        %v1077 = vld [vmem:[%s638 + $0xe8] sm:$0xff]
        %v1078 = vld [vmem:[%s638 + $0xf0] sm:$0xff]
        %v1079 = vld [vmem:[%s638 + $0xf8] sm:$0xff]
        %v1082 = vunpack.c.l.b16 %v1046
        %v1083 = vunpack.c.h.b16 %v1046
        %v1084 = vunpack.c.l.b16 %v1047
        %v1085 = vunpack.c.h.b16 %v1047
        %v1086 = vpack.c.b16 %v1084, %v1082
        %v1087 = vpack.c.b16 %v1085, %v1083
        %v1122 = vunpack.c.l.b16 %v1048
        %v1123 = vunpack.c.h.b16 %v1048
        %v1124 = vunpack.c.l.b16 %v1049
        %v1125 = vunpack.c.h.b16 %v1049
        %v1126 = vunpack.c.l.b16 %v1050
        %v1127 = vunpack.c.h.b16 %v1050
        %v1128 = vunpack.c.l.b16 %v1051
        %v1129 = vunpack.c.h.b16 %v1051
        %v1130 = vunpack.c.l.b16 %v1052
        %v1131 = vunpack.c.h.b16 %v1052
        %v1132 = vunpack.c.l.b16 %v1053
        %v1133 = vunpack.c.h.b16 %v1053
        %v1134 = vunpack.c.l.b16 %v1054
        %v1135 = vunpack.c.h.b16 %v1054
        %v1136 = vunpack.c.l.b16 %v1055
        %v1137 = vunpack.c.h.b16 %v1055
        %v1138 = vunpack.c.l.b16 %v1056
        %v1139 = vunpack.c.h.b16 %v1056
        %v1140 = vunpack.c.l.b16 %v1057
        %v1141 = vunpack.c.h.b16 %v1057
        %v1142 = vunpack.c.l.b16 %v1058
        %v1143 = vunpack.c.h.b16 %v1058
        %v1144 = vunpack.c.l.b16 %v1059
        %v1145 = vunpack.c.h.b16 %v1059
        %v1146 = vunpack.c.l.b16 %v1060
        %v1147 = vunpack.c.h.b16 %v1060
        %v1148 = vunpack.c.l.b16 %v1061
        %v1149 = vunpack.c.h.b16 %v1061
        %v1150 = vunpack.c.l.b16 %v1062
        %v1151 = vunpack.c.h.b16 %v1062
        %v1152 = vunpack.c.l.b16 %v1063
        %v1153 = vunpack.c.h.b16 %v1063
        %v1154 = vunpack.c.l.b16 %v1064
        %v1155 = vunpack.c.h.b16 %v1064
        %v1156 = vunpack.c.l.b16 %v1065
        %v1157 = vunpack.c.h.b16 %v1065
        %v1158 = vunpack.c.l.b16 %v1066
        %v1159 = vunpack.c.h.b16 %v1066
        %v1160 = vunpack.c.l.b16 %v1067
        %v1161 = vunpack.c.h.b16 %v1067
        %v1162 = vunpack.c.l.b16 %v1068
        %v1163 = vunpack.c.h.b16 %v1068
        %v1164 = vunpack.c.l.b16 %v1069
        %v1165 = vunpack.c.h.b16 %v1069
        %v1166 = vunpack.c.l.b16 %v1070
        %v1167 = vunpack.c.h.b16 %v1070
        %v1168 = vunpack.c.l.b16 %v1071
        %v1169 = vunpack.c.h.b16 %v1071
        %v1170 = vunpack.c.l.b16 %v1072
        %v1171 = vunpack.c.h.b16 %v1072
        %v1172 = vunpack.c.l.b16 %v1073
        %v1173 = vunpack.c.h.b16 %v1073
        %v1174 = vunpack.c.l.b16 %v1074
        %v1175 = vunpack.c.h.b16 %v1074
        %v1176 = vunpack.c.l.b16 %v1075
        %v1177 = vunpack.c.h.b16 %v1075
        %v1178 = vunpack.c.l.b16 %v1076
        %v1179 = vunpack.c.h.b16 %v1076
        %v1180 = vunpack.c.l.b16 %v1077
        %v1181 = vunpack.c.h.b16 %v1077
        %v1182 = vunpack.c.l.b16 %v1078
        %v1183 = vunpack.c.h.b16 %v1078
        %v1184 = vunpack.c.l.b16 %v1079
        %v1185 = vunpack.c.h.b16 %v1079
        %v1186 = vpack.c.b16 %v1124, %v1122
        %v1187 = vpack.c.b16 %v1125, %v1123
        %v1188 = vpack.c.b16 %v1128, %v1126
        %v1189 = vpack.c.b16 %v1129, %v1127
        %v1190 = vpack.c.b16 %v1132, %v1130
        %v1191 = vpack.c.b16 %v1133, %v1131
        %v1192 = vpack.c.b16 %v1136, %v1134
        %v1193 = vpack.c.b16 %v1137, %v1135
        %v1194 = vpack.c.b16 %v1140, %v1138
        %v1195 = vpack.c.b16 %v1141, %v1139
        %v1196 = vpack.c.b16 %v1144, %v1142
        %v1197 = vpack.c.b16 %v1145, %v1143
        %v1198 = vpack.c.b16 %v1148, %v1146
        %v1199 = vpack.c.b16 %v1149, %v1147
        %v1200 = vpack.c.b16 %v1152, %v1150
        %v1201 = vpack.c.b16 %v1153, %v1151
        %v1202 = vpack.c.b16 %v1156, %v1154
        %v1203 = vpack.c.b16 %v1157, %v1155
        %v1204 = vpack.c.b16 %v1160, %v1158
        %v1205 = vpack.c.b16 %v1161, %v1159
        %v1206 = vpack.c.b16 %v1164, %v1162
        %v1207 = vpack.c.b16 %v1165, %v1163
        %v1208 = vpack.c.b16 %v1168, %v1166
        %v1209 = vpack.c.b16 %v1169, %v1167
        %v1210 = vpack.c.b16 %v1172, %v1170
        %v1211 = vpack.c.b16 %v1173, %v1171
        %v1212 = vpack.c.b16 %v1176, %v1174
        %v1213 = vpack.c.b16 %v1177, %v1175
        %v1214 = vpack.c.b16 %v1180, %v1178
        %v1215 = vpack.c.b16 %v1181, %v1179
        %v1216 = vpack.c.b16 %v1184, %v1182
        %v1217 = vpack.c.b16 %v1185, %v1183
        %1250 = vmatprep.subr.bf16.mxu0 %v1201
        %1251 = vmatpush1.bf16.msra.mxu0 %v1200
        %1252 = vmatprep.subr.bf16.mxu0 %v1199
        %1253 = vmatpush1.bf16.msra.mxu0 %v1198
        %1254 = vmatprep.subr.bf16.mxu0 %v1197
        %1255 = vmatpush1.bf16.msra.mxu0 %v1196
        %1256 = vmatprep.subr.bf16.mxu0 %v1195
        %1257 = vmatpush1.bf16.msra.mxu0 %v1194
        %1258 = vmatprep.subr.bf16.mxu0 %v1193
        %1259 = vmatpush1.bf16.msra.mxu0 %v1192
        %1260 = vmatprep.subr.bf16.mxu0 %v1191
        %1261 = vmatpush1.bf16.msra.mxu0 %v1190
        %1262 = vmatprep.subr.bf16.mxu0 %v1189
        %1263 = vmatpush1.bf16.msra.mxu0 %v1188
        %1264 = vmatprep.subr.bf16.mxu0 %v1187
        %1265 = vmatpush1.bf16.msra.mxu0 %v1186
        %1266 = vmatprep.subr.bf16.mxu0 %v1217
        %1267 = vmatpush2.bf16.msra.mxu0 %v1216
        %1268 = vmatprep.subr.bf16.mxu0 %v1215
        %1269 = vmatpush2.bf16.msra.mxu0 %v1214
        %1270 = vmatprep.subr.bf16.mxu0 %v1213
        %1271 = vmatpush2.bf16.msra.mxu0 %v1212
        %1272 = vmatprep.subr.bf16.mxu0 %v1211
        %1273 = vmatpush2.bf16.msra.mxu0 %v1210
        %1274 = vmatprep.subr.bf16.mxu0 %v1209
        %1275 = vmatpush2.bf16.msra.mxu0 %v1208
        %1276 = vmatprep.subr.bf16.mxu0 %v1207
        %1277 = vmatpush2.bf16.msra.mxu0 %v1206
        %1278 = vmatprep.subr.bf16.mxu0 %v1205
        %1279 = vmatpush2.bf16.msra.mxu0 %v1204
        %1280 = vmatprep.subr.bf16.mxu0 %v1203
        %1281 = vmatpush2.bf16.msra.mxu0 %v1202
        %1282 = vmatprep.mubr.bf16.mxu0 %v1087
        %1283 = vmatmul.mubr.bf16.gmra.mxu0 %v1086
        %v1284 = vpop.f32.mrf.mxu0
        %v1285 = vadd.f32 0.0, %v1284
        %v1286 = vpop.f32.mrf.mxu0
        %v1287 = vadd.f32 0.0, %v1286
        %v1288 = vpop.f32.mrf.mxu0
        %v1289 = vadd.f32 0.0, %v1288
        %v1290 = vpop.f32.mrf.mxu0
        %v1291 = vadd.f32 0.0, %v1290
        %1292 = vdwg.mxu0
        %v1293 = vld [vmem:[%s645] sm:$0xff]
        %v1294 = vld [vmem:[%s645 + $0x8] sm:$0xff]
        %v1295 = vld [vmem:[%s645 + $0x10] sm:$0xff]
        %v1296 = vld [vmem:[%s645 + $0x18] sm:$0xff]
        %v1297 = vld [vmem:[%s645 + $0x20] sm:$0xff]
        %v1298 = vld [vmem:[%s645 + $0x28] sm:$0xff]
        %v1299 = vld [vmem:[%s645 + $0x30] sm:$0xff]
        %v1300 = vld [vmem:[%s645 + $0x38] sm:$0xff]
        %v1301 = vld [vmem:[%s645 + $0x40] sm:$0xff]
        %v1302 = vld [vmem:[%s645 + $0x48] sm:$0xff]
        %v1303 = vld [vmem:[%s645 + $0x50] sm:$0xff]
        %v1304 = vld [vmem:[%s645 + $0x58] sm:$0xff]
        %v1305 = vld [vmem:[%s645 + $0x60] sm:$0xff]
        %v1306 = vld [vmem:[%s645 + $0x68] sm:$0xff]
        %v1307 = vld [vmem:[%s645 + $0x70] sm:$0xff]
        %v1308 = vld [vmem:[%s645 + $0x78] sm:$0xff]
        %v1309 = vld [vmem:[%s645 + $0x80] sm:$0xff]
        %v1310 = vld [vmem:[%s645 + $0x88] sm:$0xff]
        %v1311 = vld [vmem:[%s645 + $0x90] sm:$0xff]
        %v1312 = vld [vmem:[%s645 + $0x98] sm:$0xff]
        %v1313 = vld [vmem:[%s645 + $0xa0] sm:$0xff]
        %v1314 = vld [vmem:[%s645 + $0xa8] sm:$0xff]
        %v1315 = vld [vmem:[%s645 + $0xb0] sm:$0xff]
        %v1316 = vld [vmem:[%s645 + $0xb8] sm:$0xff]
        %v1317 = vld [vmem:[%s645 + $0xc0] sm:$0xff]
        %v1318 = vld [vmem:[%s645 + $0xc8] sm:$0xff]
        %v1319 = vld [vmem:[%s645 + $0xd0] sm:$0xff]
        %v1320 = vld [vmem:[%s645 + $0xd8] sm:$0xff]
        %v1321 = vld [vmem:[%s645 + $0xe0] sm:$0xff]
        %v1322 = vld [vmem:[%s645 + $0xe8] sm:$0xff]
        %v1323 = vld [vmem:[%s645 + $0xf0] sm:$0xff]
        %v1324 = vld [vmem:[%s645 + $0xf8] sm:$0xff]
        %v1357 = vunpack.c.l.b16 %v1293
        %v1358 = vunpack.c.h.b16 %v1293
        %v1359 = vunpack.c.l.b16 %v1294
        %v1360 = vunpack.c.h.b16 %v1294
        %v1361 = vunpack.c.l.b16 %v1295
        %v1362 = vunpack.c.h.b16 %v1295
        %v1363 = vunpack.c.l.b16 %v1296
        %v1364 = vunpack.c.h.b16 %v1296
        %v1365 = vunpack.c.l.b16 %v1297
        %v1366 = vunpack.c.h.b16 %v1297
        %v1367 = vunpack.c.l.b16 %v1298
        %v1368 = vunpack.c.h.b16 %v1298
        %v1369 = vunpack.c.l.b16 %v1299
        %v1370 = vunpack.c.h.b16 %v1299
        %v1371 = vunpack.c.l.b16 %v1300
        %v1372 = vunpack.c.h.b16 %v1300
        %v1373 = vunpack.c.l.b16 %v1301
        %v1374 = vunpack.c.h.b16 %v1301
        %v1375 = vunpack.c.l.b16 %v1302
        %v1376 = vunpack.c.h.b16 %v1302
        %v1377 = vunpack.c.l.b16 %v1303
        %v1378 = vunpack.c.h.b16 %v1303
        %v1379 = vunpack.c.l.b16 %v1304
        %v1380 = vunpack.c.h.b16 %v1304
        %v1381 = vunpack.c.l.b16 %v1305
        %v1382 = vunpack.c.h.b16 %v1305
        %v1383 = vunpack.c.l.b16 %v1306
        %v1384 = vunpack.c.h.b16 %v1306
        %v1385 = vunpack.c.l.b16 %v1307
        %v1386 = vunpack.c.h.b16 %v1307
        %v1387 = vunpack.c.l.b16 %v1308
        %v1388 = vunpack.c.h.b16 %v1308
        %v1389 = vunpack.c.l.b16 %v1309
        %v1390 = vunpack.c.h.b16 %v1309
        %v1391 = vunpack.c.l.b16 %v1310
        %v1392 = vunpack.c.h.b16 %v1310
        %v1393 = vunpack.c.l.b16 %v1311
        %v1394 = vunpack.c.h.b16 %v1311
        %v1395 = vunpack.c.l.b16 %v1312
        %v1396 = vunpack.c.h.b16 %v1312
        %v1397 = vunpack.c.l.b16 %v1313
        %v1398 = vunpack.c.h.b16 %v1313
        %v1399 = vunpack.c.l.b16 %v1314
        %v1400 = vunpack.c.h.b16 %v1314
        %v1401 = vunpack.c.l.b16 %v1315
        %v1402 = vunpack.c.h.b16 %v1315
        %v1403 = vunpack.c.l.b16 %v1316
        %v1404 = vunpack.c.h.b16 %v1316
        %v1405 = vunpack.c.l.b16 %v1317
        %v1406 = vunpack.c.h.b16 %v1317
        %v1407 = vunpack.c.l.b16 %v1318
        %v1408 = vunpack.c.h.b16 %v1318
        %v1409 = vunpack.c.l.b16 %v1319
        %v1410 = vunpack.c.h.b16 %v1319
        %v1411 = vunpack.c.l.b16 %v1320
        %v1412 = vunpack.c.h.b16 %v1320
        %v1413 = vunpack.c.l.b16 %v1321
        %v1414 = vunpack.c.h.b16 %v1321
        %v1415 = vunpack.c.l.b16 %v1322
        %v1416 = vunpack.c.h.b16 %v1322
        %v1417 = vunpack.c.l.b16 %v1323
        %v1418 = vunpack.c.h.b16 %v1323
        %v1419 = vunpack.c.l.b16 %v1324
        %v1420 = vunpack.c.h.b16 %v1324
        %v1421 = vpack.c.b16 %v1359, %v1357
        %v1422 = vpack.c.b16 %v1360, %v1358
        %v1423 = vpack.c.b16 %v1363, %v1361
        %v1424 = vpack.c.b16 %v1364, %v1362
        %v1425 = vpack.c.b16 %v1367, %v1365
        %v1426 = vpack.c.b16 %v1368, %v1366
        %v1427 = vpack.c.b16 %v1371, %v1369
        %v1428 = vpack.c.b16 %v1372, %v1370
        %v1429 = vpack.c.b16 %v1375, %v1373
        %v1430 = vpack.c.b16 %v1376, %v1374
        %v1431 = vpack.c.b16 %v1379, %v1377
        %v1432 = vpack.c.b16 %v1380, %v1378
        %v1433 = vpack.c.b16 %v1383, %v1381
        %v1434 = vpack.c.b16 %v1384, %v1382
        %v1435 = vpack.c.b16 %v1387, %v1385
        %v1436 = vpack.c.b16 %v1388, %v1386
        %v1437 = vpack.c.b16 %v1391, %v1389
        %v1438 = vpack.c.b16 %v1392, %v1390
        %v1439 = vpack.c.b16 %v1395, %v1393
        %v1440 = vpack.c.b16 %v1396, %v1394
        %v1441 = vpack.c.b16 %v1399, %v1397
        %v1442 = vpack.c.b16 %v1400, %v1398
        %v1443 = vpack.c.b16 %v1403, %v1401
        %v1444 = vpack.c.b16 %v1404, %v1402
        %v1445 = vpack.c.b16 %v1407, %v1405
        %v1446 = vpack.c.b16 %v1408, %v1406
        %v1447 = vpack.c.b16 %v1411, %v1409
        %v1448 = vpack.c.b16 %v1412, %v1410
        %v1449 = vpack.c.b16 %v1415, %v1413
        %v1450 = vpack.c.b16 %v1416, %v1414
        %v1451 = vpack.c.b16 %v1419, %v1417
        %v1452 = vpack.c.b16 %v1420, %v1418
        %1485 = vmatprep.subr.bf16.mxu0 %v1436
        %1486 = vmatpush1.bf16.msra.mxu0 %v1435
        %1487 = vmatprep.subr.bf16.mxu0 %v1434
        %1488 = vmatpush1.bf16.msra.mxu0 %v1433
        %1489 = vmatprep.subr.bf16.mxu0 %v1432
        %1490 = vmatpush1.bf16.msra.mxu0 %v1431
        %1491 = vmatprep.subr.bf16.mxu0 %v1430
        %1492 = vmatpush1.bf16.msra.mxu0 %v1429
        %1493 = vmatprep.subr.bf16.mxu0 %v1428
        %1494 = vmatpush1.bf16.msra.mxu0 %v1427
        %1495 = vmatprep.subr.bf16.mxu0 %v1426
        %1496 = vmatpush1.bf16.msra.mxu0 %v1425
        %1497 = vmatprep.subr.bf16.mxu0 %v1424
        %1498 = vmatpush1.bf16.msra.mxu0 %v1423
        %1499 = vmatprep.subr.bf16.mxu0 %v1422
        %1500 = vmatpush1.bf16.msra.mxu0 %v1421
        %1501 = vmatprep.subr.bf16.mxu0 %v1452
        %1502 = vmatpush2.bf16.msra.mxu0 %v1451
        %1503 = vmatprep.subr.bf16.mxu0 %v1450
        %1504 = vmatpush2.bf16.msra.mxu0 %v1449
        %1505 = vmatprep.subr.bf16.mxu0 %v1448
        %1506 = vmatpush2.bf16.msra.mxu0 %v1447
        %1507 = vmatprep.subr.bf16.mxu0 %v1446
        %1508 = vmatpush2.bf16.msra.mxu0 %v1445
        %1509 = vmatprep.subr.bf16.mxu0 %v1444
        %1510 = vmatpush2.bf16.msra.mxu0 %v1443
        %1511 = vmatprep.subr.bf16.mxu0 %v1442
        %1512 = vmatpush2.bf16.msra.mxu0 %v1441
        %1513 = vmatprep.subr.bf16.mxu0 %v1440
        %1514 = vmatpush2.bf16.msra.mxu0 %v1439
        %1515 = vmatprep.subr.bf16.mxu0 %v1438
        %1516 = vmatpush2.bf16.msra.mxu0 %v1437
        %1517 = vmatprep.mubr.bf16.mxu0 %v1087
        %1518 = vmatmul.mubr.bf16.gmra.mxu0 %v1086
        %v1519 = vpop.f32.mrf.mxu0
        %v1520 = vadd.f32 0.0, %v1519
        %v1521 = vpop.f32.mrf.mxu0
        %v1522 = vadd.f32 0.0, %v1521
        %v1523 = vpop.f32.mrf.mxu0
        %v1524 = vadd.f32 0.0, %v1523
        %v1525 = vpop.f32.mrf.mxu0
        %v1526 = vadd.f32 0.0, %v1525
        %1527 = vdwg.mxu0
        %v1528 = vxor.u32 %v1285, 2147483648
        %v1529 = vxor.u32 %v1287, 2147483648
        %v1530 = vxor.u32 %v1289, 2147483648
        %v1531 = vxor.u32 %v1291, 2147483648
        %v1532 = vmul.f32 %v1528, 1.442695
        %v1533 = vpow.pop %v1532
        %v1534 = vmul.f32 %v1529, 1.442695
        %v1535 = vpow.pop %v1534
        %v1536 = vmul.f32 %v1530, 1.442695
        %v1537 = vpow.pop %v1536
        %v1538 = vmul.f32 %v1531, 1.442695
        %v1539 = vpow.pop %v1538
        %v1540 = vadd.f32 %v1533, 1.0
        %v1541 = vadd.f32 %v1535, 1.0
        %v1542 = vadd.f32 %v1537, 1.0
        %v1543 = vadd.f32 %v1539, 1.0
        %v1544 = vrcp.pop %v1540
        %v1545 = vmul.f32 1.0, %v1544
        %v1546 = vrcp.pop %v1541
        %v1547 = vmul.f32 1.0, %v1546
        %v1548 = vrcp.pop %v1542
        %v1549 = vmul.f32 1.0, %v1548
        %v1550 = vrcp.pop %v1543
        %v1551 = vmul.f32 1.0, %v1550
        %v1552 = vmul.f32 %v1285, %v1545
        %v1553 = vmul.f32 %v1287, %v1547
        %v1554 = vmul.f32 %v1289, %v1549
        %v1555 = vmul.f32 %v1291, %v1551
        %v1556 = vmul.f32 %v1552, %v1520
        %v1557 = vmul.f32 %v1553, %v1522
        %v1558 = vmul.f32 %v1554, %v1524
        %v1559 = vmul.f32 %v1555, %v1526
        %v1560 = vld [vmem:[#allocation4] sm:$0xff]
        %v1561 = vld [vmem:[#allocation4 + $0x8] sm:$0xff]
        %v1562 = vld [vmem:[#allocation4 + $0x10] sm:$0xff]
        %v1563 = vld [vmem:[#allocation4 + $0x18] sm:$0xff]
        %v1564 = vpack.c.bf16 %v1558, %v1556
        %v1565 = vpack.c.bf16 %v1559, %v1557
        %v1566 = vld [vmem:[%s653] sm:$0xff]
        %v1567 = vld [vmem:[%s653 + $0x8] sm:$0xff]
        %v1568 = vld [vmem:[%s653 + $0x10] sm:$0xff]
        %v1569 = vld [vmem:[%s653 + $0x18] sm:$0xff]
        %v1570 = vld [vmem:[%s653 + $0x20] sm:$0xff]
        %v1571 = vld [vmem:[%s653 + $0x28] sm:$0xff]
        %v1572 = vld [vmem:[%s653 + $0x30] sm:$0xff]
        %v1573 = vld [vmem:[%s653 + $0x38] sm:$0xff]
        %v1574 = vld [vmem:[%s653 + $0x40] sm:$0xff]
        %v1575 = vld [vmem:[%s653 + $0x48] sm:$0xff]
        %v1576 = vld [vmem:[%s653 + $0x50] sm:$0xff]
        %v1577 = vld [vmem:[%s653 + $0x58] sm:$0xff]
        %v1578 = vld [vmem:[%s653 + $0x60] sm:$0xff]
        %v1579 = vld [vmem:[%s653 + $0x68] sm:$0xff]
        %v1580 = vld [vmem:[%s653 + $0x70] sm:$0xff]
        %v1581 = vld [vmem:[%s653 + $0x78] sm:$0xff]
        %v1582 = vld [vmem:[%s653 + $0x80] sm:$0xff]
        %v1583 = vld [vmem:[%s653 + $0x88] sm:$0xff]
        %v1584 = vld [vmem:[%s653 + $0x90] sm:$0xff]
        %v1585 = vld [vmem:[%s653 + $0x98] sm:$0xff]
        %v1586 = vld [vmem:[%s653 + $0xa0] sm:$0xff]
        %v1587 = vld [vmem:[%s653 + $0xa8] sm:$0xff]
        %v1588 = vld [vmem:[%s653 + $0xb0] sm:$0xff]
        %v1589 = vld [vmem:[%s653 + $0xb8] sm:$0xff]
        %v1590 = vld [vmem:[%s653 + $0xc0] sm:$0xff]
        %v1591 = vld [vmem:[%s653 + $0xc8] sm:$0xff]
        %v1592 = vld [vmem:[%s653 + $0xd0] sm:$0xff]
        %v1593 = vld [vmem:[%s653 + $0xd8] sm:$0xff]
        %v1594 = vld [vmem:[%s653 + $0xe0] sm:$0xff]
        %v1595 = vld [vmem:[%s653 + $0xe8] sm:$0xff]
        %v1596 = vld [vmem:[%s653 + $0xf0] sm:$0xff]
        %v1597 = vld [vmem:[%s653 + $0xf8] sm:$0xff]
        %v1630 = vunpack.c.l.b16 %v1566
        %v1631 = vunpack.c.h.b16 %v1566
        %v1632 = vunpack.c.l.b16 %v1567
        %v1633 = vunpack.c.h.b16 %v1567
        %v1634 = vunpack.c.l.b16 %v1568
        %v1635 = vunpack.c.h.b16 %v1568
        %v1636 = vunpack.c.l.b16 %v1569
        %v1637 = vunpack.c.h.b16 %v1569
        %v1638 = vunpack.c.l.b16 %v1570
        %v1639 = vunpack.c.h.b16 %v1570
        %v1640 = vunpack.c.l.b16 %v1571
        %v1641 = vunpack.c.h.b16 %v1571
        %v1642 = vunpack.c.l.b16 %v1572
        %v1643 = vunpack.c.h.b16 %v1572
        %v1644 = vunpack.c.l.b16 %v1573
        %v1645 = vunpack.c.h.b16 %v1573
        %v1646 = vunpack.c.l.b16 %v1574
        %v1647 = vunpack.c.h.b16 %v1574
        %v1648 = vunpack.c.l.b16 %v1575
        %v1649 = vunpack.c.h.b16 %v1575
        %v1650 = vunpack.c.l.b16 %v1576
        %v1651 = vunpack.c.h.b16 %v1576
        %v1652 = vunpack.c.l.b16 %v1577
        %v1653 = vunpack.c.h.b16 %v1577
        %v1654 = vunpack.c.l.b16 %v1578
        %v1655 = vunpack.c.h.b16 %v1578
        %v1656 = vunpack.c.l.b16 %v1579
        %v1657 = vunpack.c.h.b16 %v1579
        %v1658 = vunpack.c.l.b16 %v1580
        %v1659 = vunpack.c.h.b16 %v1580
        %v1660 = vunpack.c.l.b16 %v1581
        %v1661 = vunpack.c.h.b16 %v1581
        %v1662 = vunpack.c.l.b16 %v1582
        %v1663 = vunpack.c.h.b16 %v1582
        %v1664 = vunpack.c.l.b16 %v1583
        %v1665 = vunpack.c.h.b16 %v1583
        %v1666 = vunpack.c.l.b16 %v1584
        %v1667 = vunpack.c.h.b16 %v1584
        %v1668 = vunpack.c.l.b16 %v1585
        %v1669 = vunpack.c.h.b16 %v1585
        %v1670 = vunpack.c.l.b16 %v1586
        %v1671 = vunpack.c.h.b16 %v1586
        %v1672 = vunpack.c.l.b16 %v1587
        %v1673 = vunpack.c.h.b16 %v1587
        %v1674 = vunpack.c.l.b16 %v1588
        %v1675 = vunpack.c.h.b16 %v1588
        %v1676 = vunpack.c.l.b16 %v1589
        %v1677 = vunpack.c.h.b16 %v1589
        %v1678 = vunpack.c.l.b16 %v1590
        %v1679 = vunpack.c.h.b16 %v1590
        %v1680 = vunpack.c.l.b16 %v1591
        %v1681 = vunpack.c.h.b16 %v1591
        %v1682 = vunpack.c.l.b16 %v1592
        %v1683 = vunpack.c.h.b16 %v1592
        %v1684 = vunpack.c.l.b16 %v1593
        %v1685 = vunpack.c.h.b16 %v1593
        %v1686 = vunpack.c.l.b16 %v1594
        %v1687 = vunpack.c.h.b16 %v1594
        %v1688 = vunpack.c.l.b16 %v1595
        %v1689 = vunpack.c.h.b16 %v1595
        %v1690 = vunpack.c.l.b16 %v1596
        %v1691 = vunpack.c.h.b16 %v1596
        %v1692 = vunpack.c.l.b16 %v1597
        %v1693 = vunpack.c.h.b16 %v1597
        %v1694 = vpack.c.b16 %v1632, %v1630
        %v1695 = vpack.c.b16 %v1633, %v1631
        %v1696 = vpack.c.b16 %v1636, %v1634
        %v1697 = vpack.c.b16 %v1637, %v1635
        %v1698 = vpack.c.b16 %v1640, %v1638
        %v1699 = vpack.c.b16 %v1641, %v1639
        %v1700 = vpack.c.b16 %v1644, %v1642
        %v1701 = vpack.c.b16 %v1645, %v1643
        %v1702 = vpack.c.b16 %v1648, %v1646
        %v1703 = vpack.c.b16 %v1649, %v1647
        %v1704 = vpack.c.b16 %v1652, %v1650
        %v1705 = vpack.c.b16 %v1653, %v1651
        %v1706 = vpack.c.b16 %v1656, %v1654
        %v1707 = vpack.c.b16 %v1657, %v1655
        %v1708 = vpack.c.b16 %v1660, %v1658
        %v1709 = vpack.c.b16 %v1661, %v1659
        %v1710 = vpack.c.b16 %v1664, %v1662
        %v1711 = vpack.c.b16 %v1665, %v1663
        %v1712 = vpack.c.b16 %v1668, %v1666
        %v1713 = vpack.c.b16 %v1669, %v1667
        %v1714 = vpack.c.b16 %v1672, %v1670
        %v1715 = vpack.c.b16 %v1673, %v1671
        %v1716 = vpack.c.b16 %v1676, %v1674
        %v1717 = vpack.c.b16 %v1677, %v1675
        %v1718 = vpack.c.b16 %v1680, %v1678
        %v1719 = vpack.c.b16 %v1681, %v1679
        %v1720 = vpack.c.b16 %v1684, %v1682
        %v1721 = vpack.c.b16 %v1685, %v1683
        %v1722 = vpack.c.b16 %v1688, %v1686
        %v1723 = vpack.c.b16 %v1689, %v1687
        %v1724 = vpack.c.b16 %v1692, %v1690
        %v1725 = vpack.c.b16 %v1693, %v1691
        %1758 = vmatprep.subr.bf16.mxu0 %v1709
        %1759 = vmatpush1.bf16.msra.mxu0 %v1708
        %1760 = vmatprep.subr.bf16.mxu0 %v1707
        %1761 = vmatpush1.bf16.msra.mxu0 %v1706
        %1762 = vmatprep.subr.bf16.mxu0 %v1705
        %1763 = vmatpush1.bf16.msra.mxu0 %v1704
        %1764 = vmatprep.subr.bf16.mxu0 %v1703
        %1765 = vmatpush1.bf16.msra.mxu0 %v1702
        %1766 = vmatprep.subr.bf16.mxu0 %v1701
        %1767 = vmatpush1.bf16.msra.mxu0 %v1700
        %1768 = vmatprep.subr.bf16.mxu0 %v1699
        %1769 = vmatpush1.bf16.msra.mxu0 %v1698
        %1770 = vmatprep.subr.bf16.mxu0 %v1697
        %1771 = vmatpush1.bf16.msra.mxu0 %v1696
        %1772 = vmatprep.subr.bf16.mxu0 %v1695
        %1773 = vmatpush1.bf16.msra.mxu0 %v1694
        %1774 = vmatprep.subr.bf16.mxu0 %v1725
        %1775 = vmatpush2.bf16.msra.mxu0 %v1724
        %1776 = vmatprep.subr.bf16.mxu0 %v1723
        %1777 = vmatpush2.bf16.msra.mxu0 %v1722
        %1778 = vmatprep.subr.bf16.mxu0 %v1721
        %1779 = vmatpush2.bf16.msra.mxu0 %v1720
        %1780 = vmatprep.subr.bf16.mxu0 %v1719
        %1781 = vmatpush2.bf16.msra.mxu0 %v1718
        %1782 = vmatprep.subr.bf16.mxu0 %v1717
        %1783 = vmatpush2.bf16.msra.mxu0 %v1716
        %1784 = vmatprep.subr.bf16.mxu0 %v1715
        %1785 = vmatpush2.bf16.msra.mxu0 %v1714
        %1786 = vmatprep.subr.bf16.mxu0 %v1713
        %1787 = vmatpush2.bf16.msra.mxu0 %v1712
        %1788 = vmatprep.subr.bf16.mxu0 %v1711
        %1789 = vmatpush2.bf16.msra.mxu0 %v1710
        %1790 = vmatprep.mubr.bf16.mxu0 %v1565
        %1791 = vmatmul.mubr.bf16.gmra.mxu0 %v1564
        %v1792 = vpop.f32.mrf.mxu0
        %v1793 = vadd.f32 0.0, %v1792
        %v1794 = vpop.f32.mrf.mxu0
        %v1795 = vadd.f32 0.0, %v1794
        %v1796 = vpop.f32.mrf.mxu0
        %v1797 = vadd.f32 0.0, %v1796
        %v1798 = vpop.f32.mrf.mxu0
        %v1799 = vadd.f32 0.0, %v1798
        %1800 = vdwg.mxu0
        %v1801 = vadd.f32 %v1560, %v1793
        %v1802 = vadd.f32 %v1561, %v1795
        %v1803 = vadd.f32 %v1562, %v1797
        %v1804 = vadd.f32 %v1563, %v1799
        %1805 = vst [vmem:[#allocation4] sm:$0xff] %v1801
        %1806 = vst [vmem:[#allocation4 + $0x8] sm:$0xff] %v1802
        %1807 = vst [vmem:[#allocation4 + $0x10] sm:$0xff] %v1803
        %1808 = vst [vmem:[#allocation4 + $0x18] sm:$0xff] %v1804
        %p1809 = scmp.eq.s32.totalorder %s27, 1
        // Predicated region
        $region133: #{decoder_layer_forward.5} parent=115 // pred_check
          %p1810 = pneg %p1809
        $region134: #{decoder_layer_forward.5} parent=115 // pred_check_branch
          %1812 = sbr.rel (%p1810) target = $region136
        $region135: #{decoder_layer_forward.5} parent=115 // pred_region
          %v1813 = vld [vmem:[#allocation2] sm:$0xff]
          %v1814 = vld [vmem:[#allocation2 + $0x8] sm:$0xff]
          %v1815 = vld [vmem:[#allocation2 + $0x10] sm:$0xff]
          %v1816 = vld [vmem:[#allocation2 + $0x18] sm:$0xff]
          %v1817 = vld [vmem:[#allocation4] sm:$0xff]
          %v1818 = vld [vmem:[#allocation4 + $0x8] sm:$0xff]
          %v1819 = vld [vmem:[#allocation4 + $0x10] sm:$0xff]
          %v1820 = vld [vmem:[#allocation4 + $0x18] sm:$0xff]
          %v1821 = vadd.f32 %v1813, %v1817
          %v1822 = vadd.f32 %v1814, %v1818
          %v1823 = vadd.f32 %v1815, %v1819
          %v1824 = vadd.f32 %v1816, %v1820
          %v1825 = vpack.c.bf16 %v1823, %v1821
          %v1826 = vpack.c.bf16 %v1824, %v1822
          %v1829 = vunpack.c.l.b16 %v1825
          %v1830 = vunpack.c.l.b16 %v1826
          %v1831 = vunpack.c.h.b16 %v1825
          %v1832 = vunpack.c.h.b16 %v1826
          %v1833 = vpack.c.b16 %v1830, %v1829
          %v1834 = vpack.c.b16 %v1832, %v1831
          %1837 = vst [vmem:[#allocation10] sm:$0xff] %v1833
          %1838 = vst [vmem:[#allocation10 + $0x8] sm:$0xff] %v1834
        $region136: #{decoder_layer_forward.5} parent=115 // pred_fallthru
          _
        // Predicated region
        $region137: #{decoder_layer_forward.5} parent=115 // pred_check
          %p1839 = pneg %p224
        $region138: #{decoder_layer_forward.5} parent=115 // pred_check_branch
          %1841 = sbr.rel (%p1839) target = $region140
        $region139: #{decoder_layer_forward.5} parent=115 // pred_region
          %s1842 = smul.u32 2, %s26
          %s1844 = ssub.s32 256, 256
          %1845 = vsyncadd [#allocation9], %s1844
          %s1846 = smul.addr %s1842, 2
          %s1847 = smul.addr %s1846, 64
          %s1848 = scalar_lea.hbm %s7, %s1847
          %s1849 = sshll.u32 [#allocation10], 4
          %s1850 = int_to_ptr.vmem [resolvable:$true] %s1849
          %1855 = dma.vmem_to_hbm [thread:$0]  %s1850, 256, %s1848, [#allocation9], 128, 128, 8
        $region140: #{decoder_layer_forward.5} parent=115 // pred_fallthru
          _
        // Predicated region
        $region141: #{decoder_layer_forward.5} parent=115 // pred_check
          %p1856 = pneg %p224
        $region142: #{decoder_layer_forward.5} parent=115 // pred_check_branch
          %1858 = sbr.rel (%p1856) target = $region144
        $region143: #{decoder_layer_forward.5} parent=115 // pred_region
          %1859 = dma.done [#allocation9], 256
        $region144: #{decoder_layer_forward.5} parent=115 // pred_fallthru
          _
      $region116: #{decoder_layer_forward.5} parent=5 // pred_fallthru
        _
      %p1860 = scmp.le.s32.totalorder 2, %s17
      // Predicated region
      $region145: #{decoder_layer_forward.5} parent=5 // pred_check
        %p1861 = pneg %p1860
      $region146: #{decoder_layer_forward.5} parent=5 // pred_check_branch
        %1863 = sbr.rel (%p1861) target = $region148
      $region147: #{decoder_layer_forward.5} parent=5 // pred_region
        %s1864 = ssub.s32 %s17, 2
      $region148: #{decoder_layer_forward.5} parent=5 // pred_fallthru
        _
    $region6: #{decoder_layer_forward.5} parent=1 // loop_footer
      %s21 = sadd.s32 1, %s17
    $region7: #{decoder_layer_forward.5} parent=1 // loop_footer_branch
      %16 = sbr.rel target = $region3
    $region8: #{decoder_layer_forward.5} parent=1 // loop_exit
      _
    %1865 = vsyncpa [#allocation8], 1
    %s1866 = scalar_lea.sflag [#allocation8], 1
    %1867 = vsyncpa %s1866, 1
    %1868 = vsyncpa [#allocation9], 1
    %s1869 = scalar_lea.sflag [#allocation9], 1
    %1870 = vsyncpa %s1869, 1

</llo_original>
